<compile_context>
chip_gen: v7x
topology: tpu7x:2x2x1
jax: 0.10.0
libtpu: 0.0.40
codegen_flags: <defaults>
</compile_context>

<pallas_src>
import functools

import numpy as np
import jax
import jax.numpy as jnp
from jax import lax
from jax.experimental import pallas as pl
from jax.experimental.pallas import tpu as pltpu


# --------------------------------------------------------------------------
# Flat-tap 3-D convolution geometry
# --------------------------------------------------------------------------
def _round_up(x, m):
    return (x + m - 1) // m * m


def _conv_geom(D, H, W, k=3):
    """Static geometry for the flat-tap 'same' 3-D convolution (k=3)."""
    s2 = W + 2
    s1 = (H + 2) * s2
    P = (D + 2) * s1                # rows of the zero-padded flattened volume
    rout = D * s1                   # rows the kernel computes (padded-grid prefix)
    base = s1 + s2 + 1              # flat offset of the centre tap (1,1,1)
    offsets = tuple(kd * s1 + kh * s2 + kw
                    for kd in range(k) for kh in range(k) for kw in range(k))
    maxoff = offsets[-1]            # = 2*s1 + 2*s2 + 2
    L = rout + _round_up(maxoff, 8) # padded flat length handed to the kernel
    return dict(s1=s1, s2=s2, P=P, rout=rout, base=base,
                offsets=offsets, L=L)


def _flatten_pad(x, g):
    """(N, D, H, W, C) -> (N, L, C): zero-pad spatially, flatten, pad rows."""
    N = x.shape[0]
    C = x.shape[-1]
    xp = jnp.pad(x, ((0, 0), (1, 1), (1, 1), (1, 1), (0, 0)))
    xf = xp.reshape(N, g["P"], C)
    return jnp.pad(xf, ((0, 0), (0, g["L"] - g["P"]), (0, 0)))


def _unflatten(out, D, H, W):
    """q-indexed conv output (N, rout, C) -> (N, D, H, W, C)."""
    N, _, C = out.shape
    return out.reshape(N, D, H + 2, W + 2, C)[:, :, :H, :W, :]


def _interior_mask(D, H, W):
    """(rout, 1) f32 mask of rows that correspond to real (non-halo) voxels."""
    m = np.zeros((D, H + 2, W + 2, 1), np.float32)
    m[:, :H, :W, :] = 1.0
    return jnp.asarray(m.reshape(D * (H + 2) * (W + 2), 1))


# --------------------------------------------------------------------------
# Pallas kernels
# --------------------------------------------------------------------------
def _conv3d_kernel(x_ref, w_ref, b_ref, *rest, offsets, rout, relu,
                   flat_out, base):
    """3-D conv: in-VMEM im2col slab + ONE bf16 MXU matmul, f32 accumulation.

    x_ref : (1, L, Cin) bf16        -- one zero-padded, flattened volume
    w_ref : (27*Cin, Cout) bf16     -- tap-major flattened weights
    b_ref : (1, Cout) f32
    [mask_ref : (rout, 1) f32]      -- only when flat_out
    o_ref : (1, rout, Cout) or (1, L, Cout) when flat_out
    slab  : (rout, 27*Cin) bf16 VMEM scratch (im2col staging)
    """
    if flat_out:
        mask_ref, o_ref, slab = rest
    else:
        o_ref, slab = rest
    cin = x_ref.shape[2]
    # stage the 27 shifted row windows side by side on the lane axis
    for t, off in enumerate(offsets):
        slab[:, t * cin:(t + 1) * cin] = x_ref[0, off:off + rout, :]
    acc = jnp.dot(slab[...], w_ref[...],
                  preferred_element_type=jnp.float32) + b_ref[...]
    if relu:
        acc = jnp.maximum(acc, 0.0)
    if flat_out:
        # emit directly in padded-flat layout (zero halo), ready for the next
        # conv: zero the block, then write the masked interior at `base`.
        o_ref[...] = jnp.zeros_like(o_ref)
        o_ref[0, base:base + rout, :] = (acc * mask_ref[...]).astype(o_ref.dtype)
    else:
        o_ref[0] = acc.astype(o_ref.dtype)


def _convlstm_seq_kernel(xg_ref, wh_ref, mask_ref, o_ref,
                         h_scr, c_scr, slab, *, offsets, base, C):
    """One ConvLSTM level, full sequence.  grid = (B, S); h/c live in VMEM.

    xg_ref : (1, 1, rout, 4C) bf16  -- precomputed x->gate contribution (+bias)
    wh_ref : (27*C, 4C) bf16        -- recurrent weights, gate-fused on N
    mask_ref:(rout, 1) f32          -- interior-row mask (keeps halo == 0)
    o_ref  : (1, rout, C) f32       -- final hidden state (q-indexed layout)
    h_scr  : (L, C) bf16 scratch    -- zero-padded flat hidden state
    c_scr  : (rout, C) f32 scratch  -- cell state
    slab   : (rout, 27*C) bf16      -- recurrent im2col staging
    """
    s = pl.program_id(1)
    rout = c_scr.shape[0]

    @pl.when(s == 0)
    def _init():
        h_scr[...] = jnp.zeros_like(h_scr)
        c_scr[...] = jnp.zeros_like(c_scr)

    # recurrent contribution: one fused (rout, 27C) x (27C, 4C) matmul
    for t, off in enumerate(offsets):
        slab[:, t * C:(t + 1) * C] = h_scr[off:off + rout, :]
    acc = xg_ref[0, 0].astype(jnp.float32) + jnp.dot(
        slab[...], wh_ref[...], preferred_element_type=jnp.float32)  # (rout,4C)

    sig = jax.nn.sigmoid(acc)          # lane-dense EUP pass over all gates
    tnh = jnp.tanh(acc)
    i_g = sig[:, 0 * C:1 * C]
    f_g = sig[:, 1 * C:2 * C]
    g_g = tnh[:, 2 * C:3 * C]
    o_g = sig[:, 3 * C:4 * C]

    c_new = f_g * c_scr[...] + i_g * g_g
    h_new = o_g * jnp.tanh(c_new)
    c_scr[...] = c_new

    h_m = h_new * mask_ref[...]                  # keep the zero halo of h exact
    h_scr[base:base + rout, :] = h_m.astype(h_scr.dtype)

    @pl.when(s == pl.num_programs(1) - 1)        # store hidden state once only
    def _fin():
        o_ref[0] = h_m.astype(o_ref.dtype)


# --------------------------------------------------------------------------
# Wrappers
# --------------------------------------------------------------------------
_VMEM_LIMIT = 32 * 1024 * 1024   # safe on v5e/v6e (128 MiB) and v7x (64 MiB)


def conv3d_pallas(x, w, b=None, *, relu=False, spatial=None,
                  flat_in=False, flat_out=False, raw_out=False,
                  out_dtype=jnp.bfloat16):
    """'Same' 3x3x3 convolution, channels-last, fused-tap bf16 MXU matmul.

    x: (N, D, H, W, Cin), or (N, L, Cin) padded-flat when flat_in=True (pass
       spatial=(D, H, W)).  w: (27, Cin, Cout); b: (Cout,) or None.
    Returns:
      flat_out : (N, L, Cout) bf16 padded-flat slab (zero halo) -> next conv.
      raw_out  : (N, rout, Cout) q-indexed slab (halo rows are garbage).
      default  : (N, D, H, W, Cout).
    """
    if flat_in:
        assert spatial is not None
        D, H, W = spatial
        N, _, cin = x.shape
        g = _conv_geom(D, H, W)
        xf = x.astype(jnp.bfloat16)
    else:
        N, D, H, W, cin = x.shape
        g = _conv_geom(D, H, W)
        xf = _flatten_pad(x.astype(jnp.bfloat16), g)
    cout = w.shape[-1]
    if b is None:
        b = jnp.zeros((cout,), jnp.float32)
    w2 = w.astype(jnp.bfloat16).reshape(27 * cin, cout)
    b2 = b.reshape(1, cout).astype(jnp.float32)

    kernel = functools.partial(_conv3d_kernel, offsets=g["offsets"],
                               rout=g["rout"], relu=relu,
                               flat_out=flat_out, base=g["base"])
    in_specs = [
        pl.BlockSpec((1, g["L"], cin), lambda i: (i, 0, 0)),
        pl.BlockSpec((27 * cin, cout), lambda i: (0, 0)),
        pl.BlockSpec((1, cout), lambda i: (0, 0)),
    ]
    args = [xf, w2, b2]
    if flat_out:
        in_specs.append(pl.BlockSpec((g["rout"], 1), lambda i: (0, 0)))
        args.append(_interior_mask(D, H, W))
        out_rows, odt = g["L"], jnp.bfloat16
    else:
        out_rows, odt = g["rout"], out_dtype

    out = pl.pallas_call(
        kernel,
        out_shape=jax.ShapeDtypeStruct((N, out_rows, cout), odt),
        grid=(N,),
        in_specs=in_specs,
        out_specs=pl.BlockSpec((1, out_rows, cout), lambda i: (i, 0, 0)),
        scratch_shapes=[pltpu.VMEM((g["rout"], 27 * cin), jnp.bfloat16)],
        compiler_params=pltpu.CompilerParams(
            dimension_semantics=("parallel",),
            vmem_limit_bytes=_VMEM_LIMIT),
    )(*args)
    if flat_out or raw_out:
        return out
    return _unflatten(out, D, H, W)


def convlstm_forward(rnn_p, feat):
    """feat: (S, B, D, H, W, C) -> last hidden state (B, D, H, W, C) f32."""
    S, B, D, H, W, C = feat.shape
    g = _conv_geom(D, H, W)
    # x -> gate contributions for the whole sequence in one batched conv,
    # gate-fused on the lane axis, bias folded in, NO transpose afterwards.
    xg = conv3d_pallas(feat.reshape(S * B, D, H, W, C), rnn_p["wx"],
                       rnn_p["b"], relu=False, raw_out=True,
                       out_dtype=jnp.bfloat16)
    xg = xg.reshape(S, B, g["rout"], 4 * C)          # leading-dim reshape only
    mask = _interior_mask(D, H, W)

    kernel = functools.partial(_convlstm_seq_kernel, offsets=g["offsets"],
                               base=g["base"], C=C)
    out = pl.pallas_call(
        kernel,
        out_shape=jax.ShapeDtypeStruct((B, g["rout"], C), jnp.float32),
        grid=(B, S),
        in_specs=[
            pl.BlockSpec((1, 1, g["rout"], 4 * C), lambda b, s: (s, b, 0, 0)),
            pl.BlockSpec((27 * C, 4 * C), lambda b, s: (0, 0)),
            pl.BlockSpec((g["rout"], 1), lambda b, s: (0, 0)),
        ],
        out_specs=pl.BlockSpec((1, g["rout"], C), lambda b, s: (b, 0, 0)),
        scratch_shapes=[
            pltpu.VMEM((g["L"], C), jnp.bfloat16),          # padded flat h
            pltpu.VMEM((g["rout"], C), jnp.float32),        # cell state
            pltpu.VMEM((g["rout"], 27 * C), jnp.bfloat16),  # recurrent im2col
        ],
        compiler_params=pltpu.CompilerParams(
            dimension_semantics=("parallel", "arbitrary"),
            vmem_limit_bytes=_VMEM_LIMIT),
    )(xg, rnn_p["wh"].astype(jnp.bfloat16), mask)
    return _unflatten(out, D, H, W)


def maxpool3d(x, p=2):
    # TODO(synk): could be fused into the producing conv's epilogue to save
    # one HBM round-trip of the largest feature map per level.
    N, D, H, W, C = x.shape
    x = x.reshape(N, D // p, p, H // p, p, W // p, p, C)
    return x.max(axis=(2, 4, 6))


# --------------------------------------------------------------------------
# Parameters (deterministic, synthetic)
# --------------------------------------------------------------------------
def _init_conv(key, cin, cout, k=3):
    scale = 1.0 / np.sqrt(k ** 3 * cin)
    w = jax.random.normal(key, (k ** 3, cin, cout), jnp.float32) * scale
    return {"w": w, "b": jnp.zeros((cout,), jnp.float32)}


def _init_rnn(key, c, k=3):
    # one Conv3d(2C -> 4C) over concat([x, h]); stored split (W_x, W_h), gate
    # axis fused on the output/lane dim in (i, f, g, o) order.
    # TODO(synk): if real PyTorch weights are loaded with a different concat /
    # gate order this split must be permuted accordingly.
    scale = 1.0 / np.sqrt(k ** 3 * 2 * c)
    w = jax.random.normal(key, (k ** 3, 2 * c, 4 * c), jnp.float32) * scale
    wx = w[:, :c, :]                                 # (27, C, 4C)
    wh = w[:, c:, :].reshape(k ** 3 * c, 4 * c)      # (27*C, 4C)
    b = jnp.zeros((4 * c,), jnp.float32)
    return {"wx": wx, "wh": wh, "b": b}


def init_params(key, init_channel=2, ap_factor=2, n_down=2):
    params = {"unet": {"in_block": [], "encoder": []}, "rnns": []}
    key, k1, k2 = jax.random.split(key, 3)
    params["unet"]["in_block"] = [
        _init_conv(k1, 1, init_channel),
        _init_conv(k2, init_channel, int(init_channel * ap_factor ** 1)),
    ]
    for i in range(n_down):
        cin = int(init_channel * ap_factor ** (i + 1))
        cout = int(init_channel * ap_factor ** (i + 2))
        key, k1, k2 = jax.random.split(key, 3)
        params["unet"]["encoder"].append([
            _init_conv(k1, cin, cin),
            _init_conv(k2, cin, cout),
        ])
    for i in range(n_down + 1):
        ch = int(init_channel * ap_factor ** (i + 1))
        key, k1 = jax.random.split(key)
        params["rnns"].append(_init_rnn(k1, ch))
    return params


# --------------------------------------------------------------------------
# Forward passes
# --------------------------------------------------------------------------
def basic_layers(x, convs):
    """Two 3x3x3 conv+ReLU; the intermediate activation stays in padded-flat
    layout in HBM (no pad/unflatten glue between the two convs)."""
    N, D, H, W, _ = x.shape
    h1 = conv3d_pallas(x, convs[0]["w"], convs[0]["b"], relu=True,
                       flat_out=True)                       # (N, L, Cmid) bf16
    return conv3d_pallas(h1, convs[1]["w"], convs[1]["b"], relu=True,
                         flat_in=True, spatial=(D, H, W))   # (N, D, H, W, Cout)


def unet_encoder_forward(unet_params, x, pool_size=2):
    feats = []
    x = basic_layers(x, unet_params["in_block"])
    feats.append(x)
    for convs in unet_params["encoder"]:
        x = maxpool3d(x, pool_size)
        x = basic_layers(x, convs)
        feats.append(x)
    return feats


def runet_encoder_forward(params, x, n_down=2, seq_low_level=None):
    # x: (B, T, 1, D, H, W)   (PyTorch NCDHW convention with a time axis)
    B, T = x.shape[0], x.shape[1]
    D, H, W = x.shape[3], x.shape[4], x.shape[5]
    if seq_low_level is None:
        seq_low_level = [T] * (n_down + 1)
    # fold the time axis into batch: the whole encoder runs once (time-major)
    xt = jnp.transpose(x, (1, 0, 3, 4, 5, 2)).reshape(T * B, D, H, W, 1)
    feats = unet_encoder_forward(params["unet"], xt.astype(jnp.bfloat16))
    ys = []
    for i in range(n_down + 1):
        f = feats[i]                                   # (T*B, d, h, w, c)
        s = seq_low_level[i]
        _, d, h, w, c = f.shape
        f = f.reshape(T, B, d, h, w, c)[T - s:]        # last s timesteps
        hfin = convlstm_forward(params["rnns"][i], f)  # (B, d, h, w, c)
        ys.append(jnp.transpose(hfin, (0, 4, 1, 2, 3)).astype(jnp.float32))
    return ys


# --------------------------------------------------------------------------
# Self-checks against pure-JAX references
# --------------------------------------------------------------------------
def _conv_ref(a, w):
    cin, cout = w.shape[1], w.shape[2]
    return lax.conv_general_dilated(
        a, w.astype(jnp.float32).reshape(3, 3, 3, cin, cout),
        window_strides=(1, 1, 1), padding="SAME",
        dimension_numbers=("NDHWC", "DHWIO", "NDHWC"))


def _self_check_conv():
    key = jax.random.PRNGKey(1)
    k1, k2, k3 = jax.random.split(key, 3)
    N, D, H, W, cin, cout = 2, 4, 4, 4, 3, 5
    x = jax.random.normal(k1, (N, D, H, W, cin), jnp.float32).astype(jnp.bfloat16)
    w = (jax.random.normal(k2, (27, cin, cout), jnp.float32) /
         np.sqrt(27.0 * cin)).astype(jnp.bfloat16)
    b = jax.random.normal(k3, (cout,), jnp.float32) * 0.1
    got = conv3d_pallas(x, w, b, relu=False, out_dtype=jnp.float32)
    ref = _conv_ref(x.astype(jnp.float32), w) + b
    np.testing.assert_allclose(np.asarray(got), np.asarray(ref),
                               atol=3e-3, rtol=3e-3)


def _self_check_chain():
    key = jax.random.PRNGKey(2)
    k1, k2, k3 = jax.random.split(key, 3)
    N, D, H, W = 2, 4, 4, 4
    c0, c1, c2 = 3, 4, 5
    x = jax.random.normal(k1, (N, D, H, W, c0), jnp.float32).astype(jnp.bfloat16)
    w1 = (jax.random.normal(k2, (27, c0, c1), jnp.float32) /
          np.sqrt(27.0 * c0)).astype(jnp.bfloat16).astype(jnp.float32)
    w2 = (jax.random.normal(k3, (27, c1, c2), jnp.float32) /
          np.sqrt(27.0 * c1)).astype(jnp.bfloat16).astype(jnp.float32)
    convs = [{"w": w1, "b": jnp.zeros((c1,), jnp.float32)},
             {"w": w2, "b": jnp.zeros((c2,), jnp.float32)}]
    got = basic_layers(x, convs).astype(jnp.float32)
    mid = jnp.maximum(_conv_ref(x.astype(jnp.float32), w1), 0.0)
    mid = mid.astype(jnp.bfloat16).astype(jnp.float32)
    ref = jnp.maximum(_conv_ref(mid, w2), 0.0)
    np.testing.assert_allclose(np.asarray(got), np.asarray(ref),
                               atol=5e-2, rtol=5e-2)


def _self_check_lstm():
    key = jax.random.PRNGKey(3)
    k1, k2, k3 = jax.random.split(key, 3)
    S, B, D, H, W, C = 3, 2, 4, 4, 4, 4
    feat = jax.random.normal(k1, (S, B, D, H, W, C), jnp.float32).astype(jnp.bfloat16)
    scale = 1.0 / np.sqrt(27.0 * 2 * C)
    wx = (jax.random.normal(k2, (27, C, 4 * C), jnp.float32) *
          scale).astype(jnp.bfloat16).astype(jnp.float32)
    whm = (jax.random.normal(k3, (27, C, 4 * C), jnp.float32) *
           scale).astype(jnp.bfloat16).astype(jnp.float32)
    b = jnp.zeros((4 * C,), jnp.float32)
    got = convlstm_forward({"wx": wx, "wh": whm.reshape(27 * C, 4 * C), "b": b},
                           feat)
    # pure-JAX ConvLSTM reference (f32, zero-initial state)
    wfull = jnp.concatenate([wx, whm], axis=1)              # (27, 2C, 4C)
    h = jnp.zeros((B, D, H, W, C), jnp.float32)
    c = jnp.zeros_like(h)
    xf = feat.astype(jnp.float32)
    for s in range(S):
        z = _conv_ref(jnp.concatenate([xf[s], h], axis=-1), wfull) + b
        i_g = jax.nn.sigmoid(z[..., 0 * C:1 * C])
        f_g = jax.nn.sigmoid(z[..., 1 * C:2 * C])
        g_g = jnp.tanh(z[..., 2 * C:3 * C])
        o_g = jax.nn.sigmoid(z[..., 3 * C:4 * C])
        c = f_g * c + i_g * g_g
        h = o_g * jnp.tanh(c)
    np.testing.assert_allclose(np.asarray(got), np.asarray(h),
                               atol=3e-2, rtol=3e-2)


# --------------------------------------------------------------------------
if __name__ == "__main__":
    _self_check_conv()
    _self_check_chain()
    _self_check_lstm()

    B, T = 2, 3
    D = H = W = 8                       # small patch_size=(8,8,8)
    init_channel, n_down = 2, 2

    key = jax.random.PRNGKey(0)
    kp, kx = jax.random.split(key)
    params = init_params(kp, init_channel=init_channel, n_down=n_down)
    x = jax.random.normal(kx, (B, T, 1, D, H, W), jnp.float32)

    fwd = jax.jit(functools.partial(runet_encoder_forward, n_down=n_down))
    ys = jax.block_until_ready(fwd(params, x))

    expected = [(B, 4, 8, 8, 8), (B, 8, 4, 4, 4), (B, 16, 2, 2, 2)]
    for y, e in zip(ys, expected):
        assert y.shape == e, (y.shape, e)
        assert bool(jnp.all(jnp.isfinite(y)))
    print("KERNEL_OK")
</pallas_src>

<mosaic_0001>
module attributes {stable_mosaic.version = 11 : i64} {
  func.func @_conv3d_kernel(%arg0: i32, %arg1: memref<1x232x3xbf16, #tpu.memory_space<vmem>>, %arg2: memref<81x5xbf16, #tpu.memory_space<vmem>>, %arg3: memref<1x5xf32, #tpu.memory_space<vmem>>, %arg4: memref<1x144x5xf32, #tpu.memory_space<vmem>>, %arg5: memref<144x81xbf16, #tpu.memory_space<vmem>>) attributes {dimension_semantics = [#tpu.dimension_semantics<parallel>], iteration_bounds = array<i64: 2>, scalar_prefetch = 0 : i64, scratch_operands = 1 : i64, tpu.core_type = #tpu.core_type<tc>, window_params = [{transform_indices = @transform_0, window_bounds = array<i64: 1, 232, 3>}, {pipeline_mode = #tpu.pipeline_mode<synchronous>, transform_indices = @transform_1, window_bounds = array<i64: 81, 5>}, {pipeline_mode = #tpu.pipeline_mode<synchronous>, transform_indices = @transform_2, window_bounds = array<i64: 1, 5>}, {transform_indices = @transform_3, window_bounds = array<i64: 1, 144, 5>}]} {
    %c0 = arith.constant 0 : index
    %c0_0 = arith.constant 0 : index
    %c0_1 = arith.constant 0 : index
    %0 = vector.load %arg1[%c0, %c0_0, %c0_1] : memref<1x232x3xbf16, #tpu.memory_space<vmem>>, vector<1x144x3xbf16>
    %1 = vector.shape_cast %0 : vector<1x144x3xbf16> to vector<144x3xbf16>
    %c0_2 = arith.constant 0 : index
    %c0_3 = arith.constant 0 : index
    %2 = vector.load %arg5[%c0_2, %c0_3] : memref<144x81xbf16, #tpu.memory_space<vmem>>, vector<144x3xbf16>
    tpu.vector_store %arg5[%c0_2, %c0_3], %1 {strides = array<i32>} : memref<144x81xbf16, #tpu.memory_space<vmem>>, vector<144x3xbf16>,
    %c0_4 = arith.constant 0 : index
    %c1 = arith.constant 1 : index
    %c0_5 = arith.constant 0 : index
    %3 = vector.load %arg1[%c0_4, %c1, %c0_5] : memref<1x232x3xbf16, #tpu.memory_space<vmem>>, vector<1x144x3xbf16>
    %4 = vector.shape_cast %3 : vector<1x144x3xbf16> to vector<144x3xbf16>
    %c0_6 = arith.constant 0 : index
    %c3 = arith.constant 3 : index
    %5 = vector.load %arg5[%c0_6, %c3] : memref<144x81xbf16, #tpu.memory_space<vmem>>, vector<144x3xbf16>
    tpu.vector_store %arg5[%c0_6, %c3], %4 {strides = array<i32>} : memref<144x81xbf16, #tpu.memory_space<vmem>>, vector<144x3xbf16>,
    %c0_7 = arith.constant 0 : index
    %c2 = arith.constant 2 : index
    %c0_8 = arith.constant 0 : index
    %6 = vector.load %arg1[%c0_7, %c2, %c0_8] : memref<1x232x3xbf16, #tpu.memory_space<vmem>>, vector<1x144x3xbf16>
    %7 = vector.shape_cast %6 : vector<1x144x3xbf16> to vector<144x3xbf16>
    %c0_9 = arith.constant 0 : index
    %c6 = arith.constant 6 : index
    %8 = vector.load %arg5[%c0_9, %c6] : memref<144x81xbf16, #tpu.memory_space<vmem>>, vector<144x3xbf16>
    tpu.vector_store %arg5[%c0_9, %c6], %7 {strides = array<i32>} : memref<144x81xbf16, #tpu.memory_space<vmem>>, vector<144x3xbf16>,
    %c0_10 = arith.constant 0 : index
    %c6_11 = arith.constant 6 : index
    %c0_12 = arith.constant 0 : index
    %9 = vector.load %arg1[%c0_10, %c6_11, %c0_12] : memref<1x232x3xbf16, #tpu.memory_space<vmem>>, vector<1x144x3xbf16>
    %10 = vector.shape_cast %9 : vector<1x144x3xbf16> to vector<144x3xbf16>
    %c0_13 = arith.constant 0 : index
    %c9 = arith.constant 9 : index
    %11 = vector.load %arg5[%c0_13, %c9] : memref<144x81xbf16, #tpu.memory_space<vmem>>, vector<144x3xbf16>
    tpu.vector_store %arg5[%c0_13, %c9], %10 {strides = array<i32>} : memref<144x81xbf16, #tpu.memory_space<vmem>>, vector<144x3xbf16>,
    %c0_14 = arith.constant 0 : index
    %c7 = arith.constant 7 : index
    %c0_15 = arith.constant 0 : index
    %12 = vector.load %arg1[%c0_14, %c7, %c0_15] : memref<1x232x3xbf16, #tpu.memory_space<vmem>>, vector<1x144x3xbf16>
    %13 = vector.shape_cast %12 : vector<1x144x3xbf16> to vector<144x3xbf16>
    %c0_16 = arith.constant 0 : index
    %c12 = arith.constant 12 : index
    %14 = vector.load %arg5[%c0_16, %c12] : memref<144x81xbf16, #tpu.memory_space<vmem>>, vector<144x3xbf16>
    tpu.vector_store %arg5[%c0_16, %c12], %13 {strides = array<i32>} : memref<144x81xbf16, #tpu.memory_space<vmem>>, vector<144x3xbf16>,
    %c0_17 = arith.constant 0 : index
    %c8 = arith.constant 8 : index
    %c0_18 = arith.constant 0 : index
    %15 = vector.load %arg1[%c0_17, %c8, %c0_18] : memref<1x232x3xbf16, #tpu.memory_space<vmem>>, vector<1x144x3xbf16>
    %16 = vector.shape_cast %15 : vector<1x144x3xbf16> to vector<144x3xbf16>
    %c0_19 = arith.constant 0 : index
    %c15 = arith.constant 15 : index
    %17 = vector.load %arg5[%c0_19, %c15] : memref<144x81xbf16, #tpu.memory_space<vmem>>, vector<144x3xbf16>
    tpu.vector_store %arg5[%c0_19, %c15], %16 {strides = array<i32>} : memref<144x81xbf16, #tpu.memory_space<vmem>>, vector<144x3xbf16>,
    %c0_20 = arith.constant 0 : index
    %c12_21 = arith.constant 12 : index
    %c0_22 = arith.constant 0 : index
    %18 = vector.load %arg1[%c0_20, %c12_21, %c0_22] : memref<1x232x3xbf16, #tpu.memory_space<vmem>>, vector<1x144x3xbf16>
    %19 = vector.shape_cast %18 : vector<1x144x3xbf16> to vector<144x3xbf16>
    %c0_23 = arith.constant 0 : index
    %c18 = arith.constant 18 : index
    %20 = vector.load %arg5[%c0_23, %c18] : memref<144x81xbf16, #tpu.memory_space<vmem>>, vector<144x3xbf16>
    tpu.vector_store %arg5[%c0_23, %c18], %19 {strides = array<i32>} : memref<144x81xbf16, #tpu.memory_space<vmem>>, vector<144x3xbf16>,
    %c0_24 = arith.constant 0 : index
    %c13 = arith.constant 13 : index
    %c0_25 = arith.constant 0 : index
    %21 = vector.load %arg1[%c0_24, %c13, %c0_25] : memref<1x232x3xbf16, #tpu.memory_space<vmem>>, vector<1x144x3xbf16>
    %22 = vector.shape_cast %21 : vector<1x144x3xbf16> to vector<144x3xbf16>
    %c0_26 = arith.constant 0 : index
    %c21 = arith.constant 21 : index
    %23 = vector.load %arg5[%c0_26, %c21] : memref<144x81xbf16, #tpu.memory_space<vmem>>, vector<144x3xbf16>
    tpu.vector_store %arg5[%c0_26, %c21], %22 {strides = array<i32>} : memref<144x81xbf16, #tpu.memory_space<vmem>>, vector<144x3xbf16>,
    %c0_27 = arith.constant 0 : index
    %c14 = arith.constant 14 : index
    %c0_28 = arith.constant 0 : index
    %24 = vector.load %arg1[%c0_27, %c14, %c0_28] : memref<1x232x3xbf16, #tpu.memory_space<vmem>>, vector<1x144x3xbf16>
    %25 = vector.shape_cast %24 : vector<1x144x3xbf16> to vector<144x3xbf16>
    %c0_29 = arith.constant 0 : index
    %c24 = arith.constant 24 : index
    %26 = vector.load %arg5[%c0_29, %c24] : memref<144x81xbf16, #tpu.memory_space<vmem>>, vector<144x3xbf16>
    tpu.vector_store %arg5[%c0_29, %c24], %25 {strides = array<i32>} : memref<144x81xbf16, #tpu.memory_space<vmem>>, vector<144x3xbf16>,
    %c0_30 = arith.constant 0 : index
    %c36 = arith.constant 36 : index
    %c0_31 = arith.constant 0 : index
    %27 = vector.load %arg1[%c0_30, %c36, %c0_31] : memref<1x232x3xbf16, #tpu.memory_space<vmem>>, vector<1x144x3xbf16>
    %28 = vector.shape_cast %27 : vector<1x144x3xbf16> to vector<144x3xbf16>
    %c0_32 = arith.constant 0 : index
    %c27 = arith.constant 27 : index
    %29 = vector.load %arg5[%c0_32, %c27] : memref<144x81xbf16, #tpu.memory_space<vmem>>, vector<144x3xbf16>
    tpu.vector_store %arg5[%c0_32, %c27], %28 {strides = array<i32>} : memref<144x81xbf16, #tpu.memory_space<vmem>>, vector<144x3xbf16>,
    %c0_33 = arith.constant 0 : index
    %c37 = arith.constant 37 : index
    %c0_34 = arith.constant 0 : index
    %30 = vector.load %arg1[%c0_33, %c37, %c0_34] : memref<1x232x3xbf16, #tpu.memory_space<vmem>>, vector<1x144x3xbf16>
    %31 = vector.shape_cast %30 : vector<1x144x3xbf16> to vector<144x3xbf16>
    %c0_35 = arith.constant 0 : index
    %c30 = arith.constant 30 : index
    %32 = vector.load %arg5[%c0_35, %c30] : memref<144x81xbf16, #tpu.memory_space<vmem>>, vector<144x3xbf16>
    tpu.vector_store %arg5[%c0_35, %c30], %31 {strides = array<i32>} : memref<144x81xbf16, #tpu.memory_space<vmem>>, vector<144x3xbf16>,
    %c0_36 = arith.constant 0 : index
    %c38 = arith.constant 38 : index
    %c0_37 = arith.constant 0 : index
    %33 = vector.load %arg1[%c0_36, %c38, %c0_37] : memref<1x232x3xbf16, #tpu.memory_space<vmem>>, vector<1x144x3xbf16>
    %34 = vector.shape_cast %33 : vector<1x144x3xbf16> to vector<144x3xbf16>
    %c0_38 = arith.constant 0 : index
    %c33 = arith.constant 33 : index
    %35 = vector.load %arg5[%c0_38, %c33] : memref<144x81xbf16, #tpu.memory_space<vmem>>, vector<144x3xbf16>
    tpu.vector_store %arg5[%c0_38, %c33], %34 {strides = array<i32>} : memref<144x81xbf16, #tpu.memory_space<vmem>>, vector<144x3xbf16>,
    %c0_39 = arith.constant 0 : index
    %c42 = arith.constant 42 : index
    %c0_40 = arith.constant 0 : index
    %36 = vector.load %arg1[%c0_39, %c42, %c0_40] : memref<1x232x3xbf16, #tpu.memory_space<vmem>>, vector<1x144x3xbf16>
    %37 = vector.shape_cast %36 : vector<1x144x3xbf16> to vector<144x3xbf16>
    %c0_41 = arith.constant 0 : index
    %c36_42 = arith.constant 36 : index
    %38 = vector.load %arg5[%c0_41, %c36_42] : memref<144x81xbf16, #tpu.memory_space<vmem>>, vector<144x3xbf16>
    tpu.vector_store %arg5[%c0_41, %c36_42], %37 {strides = array<i32>} : memref<144x81xbf16, #tpu.memory_space<vmem>>, vector<144x3xbf16>,
    %c0_43 = arith.constant 0 : index
    %c43 = arith.constant 43 : index
    %c0_44 = arith.constant 0 : index
    %39 = vector.load %arg1[%c0_43, %c43, %c0_44] : memref<1x232x3xbf16, #tpu.memory_space<vmem>>, vector<1x144x3xbf16>
    %40 = vector.shape_cast %39 : vector<1x144x3xbf16> to vector<144x3xbf16>
    %c0_45 = arith.constant 0 : index
    %c39 = arith.constant 39 : index
    %41 = vector.load %arg5[%c0_45, %c39] : memref<144x81xbf16, #tpu.memory_space<vmem>>, vector<144x3xbf16>
    tpu.vector_store %arg5[%c0_45, %c39], %40 {strides = array<i32>} : memref<144x81xbf16, #tpu.memory_space<vmem>>, vector<144x3xbf16>,
    %c0_46 = arith.constant 0 : index
    %c44 = arith.constant 44 : index
    %c0_47 = arith.constant 0 : index
    %42 = vector.load %arg1[%c0_46, %c44, %c0_47] : memref<1x232x3xbf16, #tpu.memory_space<vmem>>, vector<1x144x3xbf16>
    %43 = vector.shape_cast %42 : vector<1x144x3xbf16> to vector<144x3xbf16>
    %c0_48 = arith.constant 0 : index
    %c42_49 = arith.constant 42 : index
    %44 = vector.load %arg5[%c0_48, %c42_49] : memref<144x81xbf16, #tpu.memory_space<vmem>>, vector<144x3xbf16>
    tpu.vector_store %arg5[%c0_48, %c42_49], %43 {strides = array<i32>} : memref<144x81xbf16, #tpu.memory_space<vmem>>, vector<144x3xbf16>,
    %c0_50 = arith.constant 0 : index
    %c48 = arith.constant 48 : index
    %c0_51 = arith.constant 0 : index
    %45 = vector.load %arg1[%c0_50, %c48, %c0_51] : memref<1x232x3xbf16, #tpu.memory_space<vmem>>, vector<1x144x3xbf16>
    %46 = vector.shape_cast %45 : vector<1x144x3xbf16> to vector<144x3xbf16>
    %c0_52 = arith.constant 0 : index
    %c45 = arith.constant 45 : index
    %47 = vector.load %arg5[%c0_52, %c45] : memref<144x81xbf16, #tpu.memory_space<vmem>>, vector<144x3xbf16>
    tpu.vector_store %arg5[%c0_52, %c45], %46 {strides = array<i32>} : memref<144x81xbf16, #tpu.memory_space<vmem>>, vector<144x3xbf16>,
    %c0_53 = arith.constant 0 : index
    %c49 = arith.constant 49 : index
    %c0_54 = arith.constant 0 : index
    %48 = vector.load %arg1[%c0_53, %c49, %c0_54] : memref<1x232x3xbf16, #tpu.memory_space<vmem>>, vector<1x144x3xbf16>
    %49 = vector.shape_cast %48 : vector<1x144x3xbf16> to vector<144x3xbf16>
    %c0_55 = arith.constant 0 : index
    %c48_56 = arith.constant 48 : index
    %50 = vector.load %arg5[%c0_55, %c48_56] : memref<144x81xbf16, #tpu.memory_space<vmem>>, vector<144x3xbf16>
    tpu.vector_store %arg5[%c0_55, %c48_56], %49 {strides = array<i32>} : memref<144x81xbf16, #tpu.memory_space<vmem>>, vector<144x3xbf16>,
    %c0_57 = arith.constant 0 : index
    %c50 = arith.constant 50 : index
    %c0_58 = arith.constant 0 : index
    %51 = vector.load %arg1[%c0_57, %c50, %c0_58] : memref<1x232x3xbf16, #tpu.memory_space<vmem>>, vector<1x144x3xbf16>
    %52 = vector.shape_cast %51 : vector<1x144x3xbf16> to vector<144x3xbf16>
    %c0_59 = arith.constant 0 : index
    %c51 = arith.constant 51 : index
    %53 = vector.load %arg5[%c0_59, %c51] : memref<144x81xbf16, #tpu.memory_space<vmem>>, vector<144x3xbf16>
    tpu.vector_store %arg5[%c0_59, %c51], %52 {strides = array<i32>} : memref<144x81xbf16, #tpu.memory_space<vmem>>, vector<144x3xbf16>,
    %c0_60 = arith.constant 0 : index
    %c72 = arith.constant 72 : index
    %c0_61 = arith.constant 0 : index
    %54 = vector.load %arg1[%c0_60, %c72, %c0_61] : memref<1x232x3xbf16, #tpu.memory_space<vmem>>, vector<1x144x3xbf16>
    %55 = vector.shape_cast %54 : vector<1x144x3xbf16> to vector<144x3xbf16>
    %c0_62 = arith.constant 0 : index
    %c54 = arith.constant 54 : index
    %56 = vector.load %arg5[%c0_62, %c54] : memref<144x81xbf16, #tpu.memory_space<vmem>>, vector<144x3xbf16>
    tpu.vector_store %arg5[%c0_62, %c54], %55 {strides = array<i32>} : memref<144x81xbf16, #tpu.memory_space<vmem>>, vector<144x3xbf16>,
    %c0_63 = arith.constant 0 : index
    %c73 = arith.constant 73 : index
    %c0_64 = arith.constant 0 : index
    %57 = vector.load %arg1[%c0_63, %c73, %c0_64] : memref<1x232x3xbf16, #tpu.memory_space<vmem>>, vector<1x144x3xbf16>
    %58 = vector.shape_cast %57 : vector<1x144x3xbf16> to vector<144x3xbf16>
    %c0_65 = arith.constant 0 : index
    %c57 = arith.constant 57 : index
    %59 = vector.load %arg5[%c0_65, %c57] : memref<144x81xbf16, #tpu.memory_space<vmem>>, vector<144x3xbf16>
    tpu.vector_store %arg5[%c0_65, %c57], %58 {strides = array<i32>} : memref<144x81xbf16, #tpu.memory_space<vmem>>, vector<144x3xbf16>,
    %c0_66 = arith.constant 0 : index
    %c74 = arith.constant 74 : index
    %c0_67 = arith.constant 0 : index
    %60 = vector.load %arg1[%c0_66, %c74, %c0_67] : memref<1x232x3xbf16, #tpu.memory_space<vmem>>, vector<1x144x3xbf16>
    %61 = vector.shape_cast %60 : vector<1x144x3xbf16> to vector<144x3xbf16>
    %c0_68 = arith.constant 0 : index
    %c60 = arith.constant 60 : index
    %62 = vector.load %arg5[%c0_68, %c60] : memref<144x81xbf16, #tpu.memory_space<vmem>>, vector<144x3xbf16>
    tpu.vector_store %arg5[%c0_68, %c60], %61 {strides = array<i32>} : memref<144x81xbf16, #tpu.memory_space<vmem>>, vector<144x3xbf16>,
    %c0_69 = arith.constant 0 : index
    %c78 = arith.constant 78 : index
    %c0_70 = arith.constant 0 : index
    %63 = vector.load %arg1[%c0_69, %c78, %c0_70] : memref<1x232x3xbf16, #tpu.memory_space<vmem>>, vector<1x144x3xbf16>
    %64 = vector.shape_cast %63 : vector<1x144x3xbf16> to vector<144x3xbf16>
    %c0_71 = arith.constant 0 : index
    %c63 = arith.constant 63 : index
    %65 = vector.load %arg5[%c0_71, %c63] : memref<144x81xbf16, #tpu.memory_space<vmem>>, vector<144x3xbf16>
    tpu.vector_store %arg5[%c0_71, %c63], %64 {strides = array<i32>} : memref<144x81xbf16, #tpu.memory_space<vmem>>, vector<144x3xbf16>,
    %c0_72 = arith.constant 0 : index
    %c79 = arith.constant 79 : index
    %c0_73 = arith.constant 0 : index
    %66 = vector.load %arg1[%c0_72, %c79, %c0_73] : memref<1x232x3xbf16, #tpu.memory_space<vmem>>, vector<1x144x3xbf16>
    %67 = vector.shape_cast %66 : vector<1x144x3xbf16> to vector<144x3xbf16>
    %c0_74 = arith.constant 0 : index
    %c66 = arith.constant 66 : index
    %68 = vector.load %arg5[%c0_74, %c66] : memref<144x81xbf16, #tpu.memory_space<vmem>>, vector<144x3xbf16>
    tpu.vector_store %arg5[%c0_74, %c66], %67 {strides = array<i32>} : memref<144x81xbf16, #tpu.memory_space<vmem>>, vector<144x3xbf16>,
    %c0_75 = arith.constant 0 : index
    %c80 = arith.constant 80 : index
    %c0_76 = arith.constant 0 : index
    %69 = vector.load %arg1[%c0_75, %c80, %c0_76] : memref<1x232x3xbf16, #tpu.memory_space<vmem>>, vector<1x144x3xbf16>
    %70 = vector.shape_cast %69 : vector<1x144x3xbf16> to vector<144x3xbf16>
    %c0_77 = arith.constant 0 : index
    %c69 = arith.constant 69 : index
    %71 = vector.load %arg5[%c0_77, %c69] : memref<144x81xbf16, #tpu.memory_space<vmem>>, vector<144x3xbf16>
    tpu.vector_store %arg5[%c0_77, %c69], %70 {strides = array<i32>} : memref<144x81xbf16, #tpu.memory_space<vmem>>, vector<144x3xbf16>,
    %c0_78 = arith.constant 0 : index
    %c84 = arith.constant 84 : index
    %c0_79 = arith.constant 0 : index
    %72 = vector.load %arg1[%c0_78, %c84, %c0_79] : memref<1x232x3xbf16, #tpu.memory_space<vmem>>, vector<1x144x3xbf16>
    %73 = vector.shape_cast %72 : vector<1x144x3xbf16> to vector<144x3xbf16>
    %c0_80 = arith.constant 0 : index
    %c72_81 = arith.constant 72 : index
    %74 = vector.load %arg5[%c0_80, %c72_81] : memref<144x81xbf16, #tpu.memory_space<vmem>>, vector<144x3xbf16>
    tpu.vector_store %arg5[%c0_80, %c72_81], %73 {strides = array<i32>} : memref<144x81xbf16, #tpu.memory_space<vmem>>, vector<144x3xbf16>,
    %c0_82 = arith.constant 0 : index
    %c85 = arith.constant 85 : index
    %c0_83 = arith.constant 0 : index
    %75 = vector.load %arg1[%c0_82, %c85, %c0_83] : memref<1x232x3xbf16, #tpu.memory_space<vmem>>, vector<1x144x3xbf16>
    %76 = vector.shape_cast %75 : vector<1x144x3xbf16> to vector<144x3xbf16>
    %c0_84 = arith.constant 0 : index
    %c75 = arith.constant 75 : index
    %77 = vector.load %arg5[%c0_84, %c75] : memref<144x81xbf16, #tpu.memory_space<vmem>>, vector<144x3xbf16>
    tpu.vector_store %arg5[%c0_84, %c75], %76 {strides = array<i32>} : memref<144x81xbf16, #tpu.memory_space<vmem>>, vector<144x3xbf16>,
    %c0_85 = arith.constant 0 : index
    %c86 = arith.constant 86 : index
    %c0_86 = arith.constant 0 : index
    %78 = vector.load %arg1[%c0_85, %c86, %c0_86] : memref<1x232x3xbf16, #tpu.memory_space<vmem>>, vector<1x144x3xbf16>
    %79 = vector.shape_cast %78 : vector<1x144x3xbf16> to vector<144x3xbf16>
    %c0_87 = arith.constant 0 : index
    %c78_88 = arith.constant 78 : index
    %80 = vector.load %arg5[%c0_87, %c78_88] : memref<144x81xbf16, #tpu.memory_space<vmem>>, vector<144x3xbf16>
    tpu.vector_store %arg5[%c0_87, %c78_88], %79 {strides = array<i32>} : memref<144x81xbf16, #tpu.memory_space<vmem>>, vector<144x3xbf16>,
    %c0_89 = arith.constant 0 : index
    %c0_90 = arith.constant 0 : index
    %81 = vector.load %arg5[%c0_89, %c0_90] : memref<144x81xbf16, #tpu.memory_space<vmem>>, vector<144x81xbf16>
    %c0_91 = arith.constant 0 : index
    %c0_92 = arith.constant 0 : index
    %82 = vector.load %arg2[%c0_91, %c0_92] : memref<81x5xbf16, #tpu.memory_space<vmem>>, vector<81x5xbf16>
    %cst = arith.constant dense<0.000000e+00> : vector<144x5xf32>
    %83 = tpu.matmul %81, %82, %cst {dimension_numbers = #tpu.dot_dimension_numbers<[1], [0], [0], [1], [0, 0, 1, 1], [], []>} : vector<144x81xbf16>, vector<81x5xbf16>, vector<144x5xf32> -> vector<144x5xf32>
    %c0_93 = arith.constant 0 : index
    %c0_94 = arith.constant 0 : index
    %84 = vector.load %arg3[%c0_93, %c0_94] : memref<1x5xf32, #tpu.memory_space<vmem>>, vector<1x5xf32>
    %85 = vector.broadcast %84 : vector<1x5xf32> to vector<144x5xf32>
    %86 = arith.addf %83, %85 : vector<144x5xf32>
    %c0_95 = arith.constant 0 : index
    %c0_96 = arith.constant 0 : index
    %c0_97 = arith.constant 0 : index
    %87 = vector.load %arg4[%c0_95, %c0_96, %c0_97] : memref<1x144x5xf32, #tpu.memory_space<vmem>>, vector<1x144x5xf32>
    %88 = vector.shape_cast %87 : vector<1x144x5xf32> to vector<144x5xf32>
    %89 = vector.shape_cast %86 : vector<144x5xf32> to vector<1x144x5xf32>
    tpu.vector_store %arg4[%c0_95, %c0_96, %c0_97], %89 {strides = array<i32>} : memref<1x144x5xf32, #tpu.memory_space<vmem>>, vector<1x144x5xf32>,
    return
  }
  func.func @transform_0(%arg0: i32) -> (i32, i32, i32) {
    %c0_i32 = arith.constant 0 : i32
    %c0_i32_0 = arith.constant 0 : i32
    %c0_i32_1 = arith.constant 0 : i32
    return %arg0, %c0_i32, %c0_i32_0 : i32, i32, i32
  }
  func.func @transform_1(%arg0: i32) -> (i32, i32) {
    %c0_i32 = arith.constant 0 : i32
    %c0_i32_0 = arith.constant 0 : i32
    %c0_i32_1 = arith.constant 0 : i32
    return %c0_i32, %c0_i32_0 : i32, i32
  }
  func.func @transform_2(%arg0: i32) -> (i32, i32) {
    %c0_i32 = arith.constant 0 : i32
    %c0_i32_0 = arith.constant 0 : i32
    %c0_i32_1 = arith.constant 0 : i32
    return %c0_i32, %c0_i32_0 : i32, i32
  }
  func.func @transform_3(%arg0: i32) -> (i32, i32, i32) {
    %c0_i32 = arith.constant 0 : i32
    %c0_i32_0 = arith.constant 0 : i32
    %c0_i32_1 = arith.constant 0 : i32
    return %arg0, %c0_i32, %c0_i32_0 : i32, i32, i32
  }
}

</mosaic_0001>

<llo_original>
// kernel: tpu_custom_call.1
$region0: #{tpu_custom_call.1}
  #allocation0 [shape = 'u32[]', space=smem, size = 0x4, offset = 0x4, fixed_abs, tag = 'smem constant byte address 0x4 - core index']
  #allocation1 [shape = 'u32[144,128]{1,0:T(1,128)}', space=vmem, size = 0x12000, scoped, tag = 'internal scratch']
  #allocation2 [shape = 'bf16[144,81]{1,0:T(16,128)(2,1)}', space=vmem, size = 0x9000, scoped, tag = 'scratch operand']
  %s0 = inlined_call_operand.vmem [shape: bf16[2,232,3], index: 0, kind: input, shape index: {}]
  %s1 = inlined_call_operand.vmem [shape: bf16[81,5], index: 1, kind: input, shape index: {}]
  %s2 = inlined_call_operand.vmem [shape: f32[1,5], index: 2, kind: input, shape index: {}]
  %s3 = inlined_call_operand.vmem [shape: f32[2,144,5], index: 3, kind: output, shape index: {}]
  %s4 = sld [smem:[#allocation0]]
  $region45: #{tpu_custom_call.1} parent=0
    _
  %s6 = ssub.s32 1, %s4
  %s7 = scalar_select 0, %s6, %s4
  loop: start=0, step=1, limit=4
  $region2: #{tpu_custom_call.1} parent=0 // loop_pre_header
    _
  $region3: #{tpu_custom_call.1} parent=0 // loop_header
    %s9 = sphi 0, %s13
    %p10 = scmp.ge.s32.totalorder %s9, 4
    %s19 = sphi 0, %s21
    %s22 = sphi 0, %s19
    %s23 = sphi 0, %s22
    %s39 = sphi 0, %s23
    %s43 = sphi 0, %s43
    %s45 = sphi 0, %s43
    %s46 = sphi 0, %s45
    %s60 = sphi 0, %s46
    %s64 = sphi 0, %s64
    %s66 = sphi 0, %s64
    %s67 = sphi 0, %s66
    %s81 = sphi 0, %s67
    %s87 = sphi 0, %s89
    %s90 = sphi 0, %s87
    %s91 = sphi 0, %s90
    %s107 = sphi 0, %s91
  $region4: #{tpu_custom_call.1} parent=0 // loop_header_branch
    %12 = sbr.rel (%p10) target = $region8
  $region5: #{tpu_custom_call.1} parent=0 // loop_body
    %s14 = ssub.s32 %s9, 1
    %s15 = ssub.s32 %s9, 2
    %s16 = sadd.s32 %s9, 1
    %s17 = ssub.s32 %s9, %s16
    %p18 = scmp.eq.s32.totalorder %s17, 0
    %s20 = sadd.s32 %s19, 1
    %s21 = scalar_select %p18, %s19, %s20
    %p24 = pneg %p18
    %p25 = scmp.eq.s32.totalorder %s9, 1
    %p26 = por %p24, %p25
    %p27 = scmp.ne.s32.totalorder %s19, %s22
    %p28 = scmp.eq.s32.totalorder %s9, 0
    %p29 = por %p27, %p28
    %p30 = scmp.ne.s32.totalorder %s19, %s22
    %p31 = scmp.eq.s32.totalorder %s14, 1
    %p32 = por %p30, %p31
    %p33 = scmp.ne.s32.totalorder %s22, %s23
    %p34 = scmp.eq.s32.totalorder %s14, 0
    %p35 = por %p33, %p34
    %p36 = scmp.ne.s32.totalorder %s22, %s23
    %p37 = scmp.eq.s32.totalorder %s15, 1
    %p38 = por %p36, %p37
    %p40 = scmp.ne.s32.totalorder %s23, %s39
    %p41 = scmp.eq.s32.totalorder %s15, 0
    %p42 = por %p40, %p41
    %s44 = sadd.s32 %s43, 1
    %p47 = scmp.eq.s32.totalorder %s9, 1
    %p48 = scmp.ne.s32.totalorder %s43, %s45
    %p49 = scmp.eq.s32.totalorder %s9, 0
    %p50 = por %p48, %p49
    %p51 = scmp.ne.s32.totalorder %s43, %s45
    %p52 = scmp.eq.s32.totalorder %s14, 1
    %p53 = por %p51, %p52
    %p54 = scmp.ne.s32.totalorder %s45, %s46
    %p55 = scmp.eq.s32.totalorder %s14, 0
    %p56 = por %p54, %p55
    %p57 = scmp.ne.s32.totalorder %s45, %s46
    %p58 = scmp.eq.s32.totalorder %s15, 1
    %p59 = por %p57, %p58
    %p61 = scmp.ne.s32.totalorder %s46, %s60
    %p62 = scmp.eq.s32.totalorder %s15, 0
    %p63 = por %p61, %p62
    %s65 = sadd.s32 %s64, 1
    %p68 = scmp.eq.s32.totalorder %s9, 1
    %p69 = scmp.ne.s32.totalorder %s64, %s66
    %p70 = scmp.eq.s32.totalorder %s9, 0
    %p71 = por %p69, %p70
    %p72 = scmp.ne.s32.totalorder %s64, %s66
    %p73 = scmp.eq.s32.totalorder %s14, 1
    %p74 = por %p72, %p73
    %p75 = scmp.ne.s32.totalorder %s66, %s67
    %p76 = scmp.eq.s32.totalorder %s14, 0
    %p77 = por %p75, %p76
    %p78 = scmp.ne.s32.totalorder %s66, %s67
    %p79 = scmp.eq.s32.totalorder %s15, 1
    %p80 = por %p78, %p79
    %p82 = scmp.ne.s32.totalorder %s67, %s81
    %p83 = scmp.eq.s32.totalorder %s15, 0
    %p84 = por %p82, %p83
    %s85 = ssub.s32 %s9, %s16
    %p86 = scmp.eq.s32.totalorder %s85, 0
    %s88 = sadd.s32 %s87, 1
    %s89 = scalar_select %p86, %s87, %s88
    %p92 = pneg %p86
    %p93 = scmp.eq.s32.totalorder %s9, 1
    %p94 = por %p92, %p93
    %p95 = scmp.ne.s32.totalorder %s87, %s90
    %p96 = scmp.eq.s32.totalorder %s9, 0
    %p97 = por %p95, %p96
    %p98 = scmp.ne.s32.totalorder %s87, %s90
    %p99 = scmp.eq.s32.totalorder %s14, 1
    %p100 = por %p98, %p99
    %p101 = scmp.ne.s32.totalorder %s90, %s91
    %p102 = scmp.eq.s32.totalorder %s14, 0
    %p103 = por %p101, %p102
    %p104 = scmp.ne.s32.totalorder %s90, %s91
    %p105 = scmp.eq.s32.totalorder %s15, 1
    %p106 = por %p104, %p105
    %p108 = scmp.ne.s32.totalorder %s91, %s107
    %p109 = scmp.eq.s32.totalorder %s15, 0
    %p110 = por %p108, %p109
    %p111 = scmp.le.s32.totalorder 1, %s9
    %p112 = scmp.lt.s32.totalorder %s9, 3
    %p113 = pnand %p111, %p112
    %p114 = pneg %p113
    // Predicated region
    $region9: #{tpu_custom_call.1} parent=5 // pred_check
      _
    $region10: #{tpu_custom_call.1} parent=5 // pred_check_branch
      %116 = sbr.rel (%p113) target = $region12
    $region11: #{tpu_custom_call.1} parent=5 // pred_region
      %s117 = ssub.s32 %s9, 1
      // Predicated region
      $region13: #{tpu_custom_call.1} parent=11 // pred_check
        %p118 = pneg %p56
      $region14: #{tpu_custom_call.1} parent=11 // pred_check_branch
        %120 = sbr.rel (%p118) target = $region16
      $region15: #{tpu_custom_call.1} parent=11 // pred_region
        _
      $region16: #{tpu_custom_call.1} parent=11 // pred_fallthru
        _
      // Predicated region
      $region17: #{tpu_custom_call.1} parent=11 // pred_check
        %p121 = pneg %p77
      $region18: #{tpu_custom_call.1} parent=11 // pred_check_branch
        %123 = sbr.rel (%p121) target = $region20
      $region19: #{tpu_custom_call.1} parent=11 // pred_region
        _
      $region20: #{tpu_custom_call.1} parent=11 // pred_fallthru
        _
    $region12: #{tpu_custom_call.1} parent=5 // pred_fallthru
      _
    %p124 = scmp.lt.s32.totalorder %s9, 2
    // Predicated region
    $region21: #{tpu_custom_call.1} parent=5 // pred_check
      %p125 = pneg %p124
    $region22: #{tpu_custom_call.1} parent=5 // pred_check_branch
      %127 = sbr.rel (%p125) target = $region24
    $region23: #{tpu_custom_call.1} parent=5 // pred_region
      // Predicated region
      $region25: #{tpu_custom_call.1} parent=23 // pred_check
        %p128 = pneg %p29
      $region26: #{tpu_custom_call.1} parent=23 // pred_check_branch
        %130 = sbr.rel (%p128) target = $region28
      $region27: #{tpu_custom_call.1} parent=23 // pred_region
        %p131 = scmp.lt.s32.totalorder %s9, 1
        %s132 = scalar_select %p131, %s9, 1
        %s133 = smul.addr %s132, 29
        %s134 = smul.addr %s133, 4
        %s135 = scalar_lea.vmem %s0, %s134
      $region28: #{tpu_custom_call.1} parent=23 // pred_fallthru
        _
    $region24: #{tpu_custom_call.1} parent=5 // pred_fallthru
      _
    %p136 = scmp.le.s32.totalorder 1, %s9
    %p137 = scmp.lt.s32.totalorder %s9, 3
    %p138 = pnand %p136, %p137
    %p139 = pneg %p138
    // Predicated region
    $region29: #{tpu_custom_call.1} parent=5 // pred_check
      _
    $region30: #{tpu_custom_call.1} parent=5 // pred_check_branch
      %141 = sbr.rel (%p138) target = $region32
    $region31: #{tpu_custom_call.1} parent=5 // pred_region
      %s142 = ssub.s32 %s9, 1
      %p143 = scmp.lt.s32.totalorder %s14, 1
      %s144 = scalar_select %p143, %s14, 1
      %s145 = smul.addr %s144, 29
      %s146 = smul.addr %s145, 4
      %s147 = scalar_lea.vmem %s0, %s146
      %p148 = pneg %p35
      %p149 = pneg %p32
      %p150 = pneg %p56
      %p151 = pneg %p53
      %p152 = pneg %p77
      %p153 = pneg %p74
      %p154 = pneg %p103
      %p155 = pneg %p100
      %p156 = scmp.lt.s32.totalorder %s14, 1
      %s157 = scalar_select %p156, %s14, 1
      %s158 = smul.addr %s157, 18
      %s159 = smul.addr %s158, 8
      %s160 = scalar_lea.vmem %s3, %s159
      %p161 = scmp.lt.s32.totalorder %s14, 1
      %s162 = scalar_select %p161, %s14, 1
      %s163 = smul.addr %s162, 29
      %s164 = smul.addr %s163, 4
      %s165 = scalar_lea.vmem %s0, %s164
      %p166 = scmp.lt.s32.totalorder %s14, 1
      %s167 = scalar_select %p166, %s14, 1
      %s168 = smul.addr %s167, 18
      %s169 = smul.addr %s168, 8
      %s170 = scalar_lea.vmem %s3, %s169
      %v172 = vld [vmem:[%s165] sm:$0xf]
      %v173 = vld [vmem:[%s165 + $0x4] sm:$0xf]
      %v174 = vld [vmem:[%s165 + $0x8] sm:$0xf]
      %v175 = vld [vmem:[%s165 + $0xc] sm:$0xf]
      %v176 = vld [vmem:[%s165 + $0x10] sm:$0xf]
      %v177 = vld [vmem:[%s165 + $0x14] sm:$0xf]
      %v178 = vld [vmem:[%s165 + $0x18] sm:$0xf]
      %v179 = vld [vmem:[%s165 + $0x1c] sm:$0xf]
      %v180 = vld [vmem:[%s165 + $0x20] sm:$0xf]
      %v181 = vld [vmem:[%s165 + $0x24] sm:$0xf]
      %v182 = vld [vmem:[%s165 + $0x28] sm:$0xf]
      %v183 = vld [vmem:[%s165 + $0x2c] sm:$0xf]
      %v184 = vld [vmem:[%s165 + $0x30] sm:$0xf]
      %v185 = vld [vmem:[%s165 + $0x34] sm:$0xf]
      %v186 = vld [vmem:[%s165 + $0x38] sm:$0xf]
      %v187 = vld [vmem:[%s165 + $0x3c] sm:$0xf]
      %v188 = vld [vmem:[%s165 + $0x40] sm:$0xf]
      %v189 = vld [vmem:[%s165 + $0x44] sm:$0xf]
      %v208 = vunpack.c.l.b16 %v172
      %v209 = vunpack.c.l.b16 %v173
      %v210 = vunpack.c.l.b16 %v174
      %v211 = vunpack.c.l.b16 %v175
      %v212 = vunpack.c.l.b16 %v176
      %v213 = vunpack.c.l.b16 %v177
      %v214 = vunpack.c.l.b16 %v178
      %v215 = vunpack.c.l.b16 %v179
      %v216 = vunpack.c.l.b16 %v180
      %v217 = vunpack.c.l.b16 %v181
      %v218 = vunpack.c.l.b16 %v182
      %v219 = vunpack.c.l.b16 %v183
      %v220 = vunpack.c.l.b16 %v184
      %v221 = vunpack.c.l.b16 %v185
      %v222 = vunpack.c.l.b16 %v186
      %v223 = vunpack.c.l.b16 %v187
      %v224 = vunpack.c.l.b16 %v188
      %v225 = vunpack.c.l.b16 %v189
      %v226 = vpack.c.b16 %v209, %v208
      %v227 = vpack.c.b16 %v211, %v210
      %v228 = vpack.c.b16 %v213, %v212
      %v229 = vpack.c.b16 %v215, %v214
      %v230 = vpack.c.b16 %v217, %v216
      %v231 = vpack.c.b16 %v219, %v218
      %v232 = vpack.c.b16 %v221, %v220
      %v233 = vpack.c.b16 %v223, %v222
      %v234 = vpack.c.b16 %v225, %v224
      %vm244 = vcmask 23552
      %245 = vst.msk [vmem:[#allocation2] sm:$0xff] %vm244, %v226
      %246 = vst.msk [vmem:[#allocation2 + $0x8] sm:$0xff] %vm244, %v227
      %247 = vst.msk [vmem:[#allocation2 + $0x10] sm:$0xff] %vm244, %v228
      %248 = vst.msk [vmem:[#allocation2 + $0x18] sm:$0xff] %vm244, %v229
      %249 = vst.msk [vmem:[#allocation2 + $0x20] sm:$0xff] %vm244, %v230
      %250 = vst.msk [vmem:[#allocation2 + $0x28] sm:$0xff] %vm244, %v231
      %251 = vst.msk [vmem:[#allocation2 + $0x30] sm:$0xff] %vm244, %v232
      %252 = vst.msk [vmem:[#allocation2 + $0x38] sm:$0xff] %vm244, %v233
      %253 = vst.msk [vmem:[#allocation2 + $0x40] sm:$0xff] %vm244, %v234
      %v254 = vld [vmem:[%s165] sm:$0xf]
      %v255 = vld [vmem:[%s165 + $0x4] sm:$0xf]
      %v256 = vld [vmem:[%s165 + $0x8] sm:$0xf]
      %v257 = vld [vmem:[%s165 + $0xc] sm:$0xf]
      %v258 = vld [vmem:[%s165 + $0x10] sm:$0xf]
      %v259 = vld [vmem:[%s165 + $0x14] sm:$0xf]
      %v260 = vld [vmem:[%s165 + $0x18] sm:$0xf]
      %v261 = vld [vmem:[%s165 + $0x1c] sm:$0xf]
      %v262 = vld [vmem:[%s165 + $0x20] sm:$0xf]
      %v263 = vld [vmem:[%s165 + $0x24] sm:$0xf]
      %v264 = vld [vmem:[%s165 + $0x28] sm:$0xf]
      %v265 = vld [vmem:[%s165 + $0x2c] sm:$0xf]
      %v266 = vld [vmem:[%s165 + $0x30] sm:$0xf]
      %v267 = vld [vmem:[%s165 + $0x34] sm:$0xf]
      %v268 = vld [vmem:[%s165 + $0x38] sm:$0xf]
      %v269 = vld [vmem:[%s165 + $0x3c] sm:$0xf]
      %v270 = vld [vmem:[%s165 + $0x40] sm:$0xf]
      %v271 = vld [vmem:[%s165 + $0x44] sm:$0xf]
      %v272 = vld [vmem:[%s165 + $0x48] sm:$0x1]
      %v292 = vunpack.c.l.b16 %v254
      %v293 = vunpack.c.l.b16 %v255
      %v294 = vunpack.c.l.b16 %v256
      %v295 = vunpack.c.l.b16 %v257
      %v296 = vunpack.c.l.b16 %v258
      %v297 = vunpack.c.l.b16 %v259
      %v298 = vunpack.c.l.b16 %v260
      %v299 = vunpack.c.l.b16 %v261
      %v300 = vunpack.c.l.b16 %v262
      %v301 = vunpack.c.l.b16 %v263
      %v302 = vunpack.c.l.b16 %v264
      %v303 = vunpack.c.l.b16 %v265
      %v304 = vunpack.c.l.b16 %v266
      %v305 = vunpack.c.l.b16 %v267
      %v306 = vunpack.c.l.b16 %v268
      %v307 = vunpack.c.l.b16 %v269
      %v308 = vunpack.c.l.b16 %v270
      %v309 = vunpack.c.l.b16 %v271
      %v310 = vunpack.c.l.b16 %v272
      %v311 = vpack.c.b16 %v293, %v292
      %v312 = vpack.c.b16 %v295, %v294
      %v313 = vpack.c.b16 %v297, %v296
      %v314 = vpack.c.b16 %v299, %v298
      %v315 = vpack.c.b16 %v301, %v300
      %v316 = vpack.c.b16 %v303, %v302
      %v317 = vpack.c.b16 %v305, %v304
      %v318 = vpack.c.b16 %v307, %v306
      %v319 = vpack.c.b16 %v309, %v308
      %v320 = vpack.c.b16 %v310, %v310
      %vm321 = vsmask.f32 7424
      %v323 = vshrl.u32 %v311, 16
      %v325 = vshll.u32 %v311, 16
      %v327 = vrot.slane %v325, 1
      %v328 = vor.u32 %v323, %v327
      %v330 = vshll.u32 %v312, 16
      %v332 = vrot.slane %v330, 1
      %v333 = vsel %vm321, %v328, %v332
      %v334 = vshrl.u32 %v312, 16
      %v336 = vor.u32 %v334, %v332
      %v338 = vshll.u32 %v313, 16
      %v340 = vrot.slane %v338, 1
      %v341 = vsel %vm321, %v336, %v340
      %v342 = vshrl.u32 %v313, 16
      %v344 = vor.u32 %v342, %v340
      %v346 = vshll.u32 %v314, 16
      %v348 = vrot.slane %v346, 1
      %v349 = vsel %vm321, %v344, %v348
      %v350 = vshrl.u32 %v314, 16
      %v352 = vor.u32 %v350, %v348
      %v354 = vshll.u32 %v315, 16
      %v356 = vrot.slane %v354, 1
      %v357 = vsel %vm321, %v352, %v356
      %v358 = vshrl.u32 %v315, 16
      %v360 = vor.u32 %v358, %v356
      %v362 = vshll.u32 %v316, 16
      %v364 = vrot.slane %v362, 1
      %v365 = vsel %vm321, %v360, %v364
      %v366 = vshrl.u32 %v316, 16
      %v368 = vor.u32 %v366, %v364
      %v370 = vshll.u32 %v317, 16
      %v372 = vrot.slane %v370, 1
      %v373 = vsel %vm321, %v368, %v372
      %v374 = vshrl.u32 %v317, 16
      %v376 = vor.u32 %v374, %v372
      %v378 = vshll.u32 %v318, 16
      %v380 = vrot.slane %v378, 1
      %v381 = vsel %vm321, %v376, %v380
      %v382 = vshrl.u32 %v318, 16
      %v384 = vor.u32 %v382, %v380
      %v386 = vshll.u32 %v319, 16
      %v388 = vrot.slane %v386, 1
      %v389 = vsel %vm321, %v384, %v388
      %v390 = vshrl.u32 %v319, 16
      %v392 = vor.u32 %v390, %v388
      %v394 = vshll.u32 %v320, 16
      %v396 = vrot.slane %v394, 1
      %v397 = vsel %vm321, %v392, %v396
      %398 = vrot.lane.b32.xlu0 %v333, 3
      %v399 = vpop.permute.xlu0 %398
      %400 = vrot.lane.b32.xlu0 %v341, 3
      %v401 = vpop.permute.xlu0 %400
      %402 = vrot.lane.b32.xlu0 %v349, 3
      %v403 = vpop.permute.xlu0 %402
      %404 = vrot.lane.b32.xlu0 %v357, 3
      %v405 = vpop.permute.xlu0 %404
      %406 = vrot.lane.b32.xlu0 %v365, 3
      %v407 = vpop.permute.xlu0 %406
      %408 = vrot.lane.b32.xlu0 %v373, 3
      %v409 = vpop.permute.xlu0 %408
      %410 = vrot.lane.b32.xlu0 %v381, 3
      %v411 = vpop.permute.xlu0 %410
      %412 = vrot.lane.b32.xlu0 %v389, 3
      %v413 = vpop.permute.xlu0 %412
      %414 = vrot.lane.b32.xlu0 %v397, 3
      %v415 = vpop.permute.xlu0 %414
      %vm425 = vcmask 48152
      %426 = vst.msk [vmem:[#allocation2] sm:$0xff] %vm425, %v399
      %427 = vst.msk [vmem:[#allocation2 + $0x8] sm:$0xff] %vm425, %v401
      %428 = vst.msk [vmem:[#allocation2 + $0x10] sm:$0xff] %vm425, %v403
      %429 = vst.msk [vmem:[#allocation2 + $0x18] sm:$0xff] %vm425, %v405
      %430 = vst.msk [vmem:[#allocation2 + $0x20] sm:$0xff] %vm425, %v407
      %431 = vst.msk [vmem:[#allocation2 + $0x28] sm:$0xff] %vm425, %v409
      %432 = vst.msk [vmem:[#allocation2 + $0x30] sm:$0xff] %vm425, %v411
      %433 = vst.msk [vmem:[#allocation2 + $0x38] sm:$0xff] %vm425, %v413
      %434 = vst.msk [vmem:[#allocation2 + $0x40] sm:$0xff] %vm425, %v415
      %v435 = vld [vmem:[%s165] sm:$0xe]
      %v436 = vld [vmem:[%s165 + $0x4] sm:$0xf]
      %v437 = vld [vmem:[%s165 + $0x8] sm:$0xf]
      %v438 = vld [vmem:[%s165 + $0xc] sm:$0xf]
      %v439 = vld [vmem:[%s165 + $0x10] sm:$0xf]
      %v440 = vld [vmem:[%s165 + $0x14] sm:$0xf]
      %v441 = vld [vmem:[%s165 + $0x18] sm:$0xf]
      %v442 = vld [vmem:[%s165 + $0x1c] sm:$0xf]
      %v443 = vld [vmem:[%s165 + $0x20] sm:$0xf]
      %v444 = vld [vmem:[%s165 + $0x24] sm:$0xf]
      %v445 = vld [vmem:[%s165 + $0x28] sm:$0xf]
      %v446 = vld [vmem:[%s165 + $0x2c] sm:$0xf]
      %v447 = vld [vmem:[%s165 + $0x30] sm:$0xf]
      %v448 = vld [vmem:[%s165 + $0x34] sm:$0xf]
      %v449 = vld [vmem:[%s165 + $0x38] sm:$0xf]
      %v450 = vld [vmem:[%s165 + $0x3c] sm:$0xf]
      %v451 = vld [vmem:[%s165 + $0x40] sm:$0xf]
      %v452 = vld [vmem:[%s165 + $0x44] sm:$0xf]
      %v453 = vld [vmem:[%s165 + $0x48] sm:$0x1]
      %v473 = vunpack.c.l.b16 %v435
      %v474 = vunpack.c.l.b16 %v436
      %v475 = vunpack.c.l.b16 %v437
      %v476 = vunpack.c.l.b16 %v438
      %v477 = vunpack.c.l.b16 %v439
      %v478 = vunpack.c.l.b16 %v440
      %v479 = vunpack.c.l.b16 %v441
      %v480 = vunpack.c.l.b16 %v442
      %v481 = vunpack.c.l.b16 %v443
      %v482 = vunpack.c.l.b16 %v444
      %v483 = vunpack.c.l.b16 %v445
      %v484 = vunpack.c.l.b16 %v446
      %v485 = vunpack.c.l.b16 %v447
      %v486 = vunpack.c.l.b16 %v448
      %v487 = vunpack.c.l.b16 %v449
      %v488 = vunpack.c.l.b16 %v450
      %v489 = vunpack.c.l.b16 %v451
      %v490 = vunpack.c.l.b16 %v452
      %v491 = vunpack.c.l.b16 %v453
      %v492 = vpack.c.b16 %v474, %v473
      %v493 = vpack.c.b16 %v476, %v475
      %v494 = vpack.c.b16 %v478, %v477
      %v495 = vpack.c.b16 %v480, %v479
      %v496 = vpack.c.b16 %v482, %v481
      %v497 = vpack.c.b16 %v484, %v483
      %v498 = vpack.c.b16 %v486, %v485
      %v499 = vpack.c.b16 %v488, %v487
      %v500 = vpack.c.b16 %v490, %v489
      %v501 = vpack.c.b16 %v491, %v491
      %vm502 = vcmask 1046528
      %v503 = vrot.slane %v492, 1
      %v504 = vrot.slane %v493, 1
      %v505 = vsel %vm502, %v503, %v504
      %v506 = vrot.slane %v494, 1
      %v507 = vsel %vm502, %v504, %v506
      %v508 = vrot.slane %v495, 1
      %v509 = vsel %vm502, %v506, %v508
      %v510 = vrot.slane %v496, 1
      %v511 = vsel %vm502, %v508, %v510
      %v512 = vrot.slane %v497, 1
      %v513 = vsel %vm502, %v510, %v512
      %v514 = vrot.slane %v498, 1
      %v515 = vsel %vm502, %v512, %v514
      %v516 = vrot.slane %v499, 1
      %v517 = vsel %vm502, %v514, %v516
      %v518 = vrot.slane %v500, 1
      %v519 = vsel %vm502, %v516, %v518
      %v520 = vrot.slane %v501, 1
      %v521 = vsel %vm502, %v518, %v520
      %522 = vrot.lane.b32.xlu0 %v505, 6
      %v523 = vpop.permute.xlu0 %522
      %524 = vrot.lane.b32.xlu0 %v507, 6
      %v525 = vpop.permute.xlu0 %524
      %526 = vrot.lane.b32.xlu0 %v509, 6
      %v527 = vpop.permute.xlu0 %526
      %528 = vrot.lane.b32.xlu0 %v511, 6
      %v529 = vpop.permute.xlu0 %528
      %530 = vrot.lane.b32.xlu0 %v513, 6
      %v531 = vpop.permute.xlu0 %530
      %532 = vrot.lane.b32.xlu0 %v515, 6
      %v533 = vpop.permute.xlu0 %532
      %534 = vrot.lane.b32.xlu0 %v517, 6
      %v535 = vpop.permute.xlu0 %534
      %536 = vrot.lane.b32.xlu0 %v519, 6
      %v537 = vpop.permute.xlu0 %536
      %538 = vrot.lane.b32.xlu0 %v521, 6
      %v539 = vpop.permute.xlu0 %538
      %vm549 = vcmask 72752
      %550 = vst.msk [vmem:[#allocation2] sm:$0xff] %vm549, %v523
      %551 = vst.msk [vmem:[#allocation2 + $0x8] sm:$0xff] %vm549, %v525
      %552 = vst.msk [vmem:[#allocation2 + $0x10] sm:$0xff] %vm549, %v527
      %553 = vst.msk [vmem:[#allocation2 + $0x18] sm:$0xff] %vm549, %v529
      %554 = vst.msk [vmem:[#allocation2 + $0x20] sm:$0xff] %vm549, %v531
      %555 = vst.msk [vmem:[#allocation2 + $0x28] sm:$0xff] %vm549, %v533
      %556 = vst.msk [vmem:[#allocation2 + $0x30] sm:$0xff] %vm549, %v535
      %557 = vst.msk [vmem:[#allocation2 + $0x38] sm:$0xff] %vm549, %v537
      %558 = vst.msk [vmem:[#allocation2 + $0x40] sm:$0xff] %vm549, %v539
      %v559 = vld [vmem:[%s165] sm:$0x8]
      %v560 = vld [vmem:[%s165 + $0x4] sm:$0xf]
      %v561 = vld [vmem:[%s165 + $0x8] sm:$0xf]
      %v562 = vld [vmem:[%s165 + $0xc] sm:$0xf]
      %v563 = vld [vmem:[%s165 + $0x10] sm:$0xf]
      %v564 = vld [vmem:[%s165 + $0x14] sm:$0xf]
      %v565 = vld [vmem:[%s165 + $0x18] sm:$0xf]
      %v566 = vld [vmem:[%s165 + $0x1c] sm:$0xf]
      %v567 = vld [vmem:[%s165 + $0x20] sm:$0xf]
      %v568 = vld [vmem:[%s165 + $0x24] sm:$0xf]
      %v569 = vld [vmem:[%s165 + $0x28] sm:$0xf]
      %v570 = vld [vmem:[%s165 + $0x2c] sm:$0xf]
      %v571 = vld [vmem:[%s165 + $0x30] sm:$0xf]
      %v572 = vld [vmem:[%s165 + $0x34] sm:$0xf]
      %v573 = vld [vmem:[%s165 + $0x38] sm:$0xf]
      %v574 = vld [vmem:[%s165 + $0x3c] sm:$0xf]
      %v575 = vld [vmem:[%s165 + $0x40] sm:$0xf]
      %v576 = vld [vmem:[%s165 + $0x44] sm:$0xf]
      %v577 = vld [vmem:[%s165 + $0x48] sm:$0x7]
      %v597 = vunpack.c.l.b16 %v559
      %v598 = vunpack.c.l.b16 %v560
      %v599 = vunpack.c.l.b16 %v561
      %v600 = vunpack.c.l.b16 %v562
      %v601 = vunpack.c.l.b16 %v563
      %v602 = vunpack.c.l.b16 %v564
      %v603 = vunpack.c.l.b16 %v565
      %v604 = vunpack.c.l.b16 %v566
      %v605 = vunpack.c.l.b16 %v567
      %v606 = vunpack.c.l.b16 %v568
      %v607 = vunpack.c.l.b16 %v569
      %v608 = vunpack.c.l.b16 %v570
      %v609 = vunpack.c.l.b16 %v571
      %v610 = vunpack.c.l.b16 %v572
      %v611 = vunpack.c.l.b16 %v573
      %v612 = vunpack.c.l.b16 %v574
      %v613 = vunpack.c.l.b16 %v575
      %v614 = vunpack.c.l.b16 %v576
      %v615 = vunpack.c.l.b16 %v577
      %v616 = vpack.c.b16 %v598, %v597
      %v617 = vpack.c.b16 %v600, %v599
      %v618 = vpack.c.b16 %v602, %v601
      %v619 = vpack.c.b16 %v604, %v603
      %v620 = vpack.c.b16 %v606, %v605
      %v621 = vpack.c.b16 %v608, %v607
      %v622 = vpack.c.b16 %v610, %v609
      %v623 = vpack.c.b16 %v612, %v611
      %v624 = vpack.c.b16 %v614, %v613
      %v625 = vpack.c.b16 %v615, %v615
      %vm626 = vcmask 1044480
      %v627 = vrot.slane %v616, 3
      %v628 = vrot.slane %v617, 3
      %v629 = vsel %vm626, %v627, %v628
      %v630 = vrot.slane %v618, 3
      %v631 = vsel %vm626, %v628, %v630
      %v632 = vrot.slane %v619, 3
      %v633 = vsel %vm626, %v630, %v632
      %v634 = vrot.slane %v620, 3
      %v635 = vsel %vm626, %v632, %v634
      %v636 = vrot.slane %v621, 3
      %v637 = vsel %vm626, %v634, %v636
      %v638 = vrot.slane %v622, 3
      %v639 = vsel %vm626, %v636, %v638
      %v640 = vrot.slane %v623, 3
      %v641 = vsel %vm626, %v638, %v640
      %v642 = vrot.slane %v624, 3
      %v643 = vsel %vm626, %v640, %v642
      %v644 = vrot.slane %v625, 3
      %v645 = vsel %vm626, %v642, %v644
      %646 = vrot.lane.b32.xlu0 %v629, 9
      %v647 = vpop.permute.xlu0 %646
      %648 = vrot.lane.b32.xlu0 %v631, 9
      %v649 = vpop.permute.xlu0 %648
      %650 = vrot.lane.b32.xlu0 %v633, 9
      %v651 = vpop.permute.xlu0 %650
      %652 = vrot.lane.b32.xlu0 %v635, 9
      %v653 = vpop.permute.xlu0 %652
      %654 = vrot.lane.b32.xlu0 %v637, 9
      %v655 = vpop.permute.xlu0 %654
      %656 = vrot.lane.b32.xlu0 %v639, 9
      %v657 = vpop.permute.xlu0 %656
      %658 = vrot.lane.b32.xlu0 %v641, 9
      %v659 = vpop.permute.xlu0 %658
      %660 = vrot.lane.b32.xlu0 %v643, 9
      %v661 = vpop.permute.xlu0 %660
      %662 = vrot.lane.b32.xlu0 %v645, 9
      %v663 = vpop.permute.xlu0 %662
      %vm673 = vcmask 97352
      %674 = vst.msk [vmem:[#allocation2] sm:$0xff] %vm673, %v647
      %675 = vst.msk [vmem:[#allocation2 + $0x8] sm:$0xff] %vm673, %v649
      %676 = vst.msk [vmem:[#allocation2 + $0x10] sm:$0xff] %vm673, %v651
      %677 = vst.msk [vmem:[#allocation2 + $0x18] sm:$0xff] %vm673, %v653
      %678 = vst.msk [vmem:[#allocation2 + $0x20] sm:$0xff] %vm673, %v655
      %679 = vst.msk [vmem:[#allocation2 + $0x28] sm:$0xff] %vm673, %v657
      %680 = vst.msk [vmem:[#allocation2 + $0x30] sm:$0xff] %vm673, %v659
      %681 = vst.msk [vmem:[#allocation2 + $0x38] sm:$0xff] %vm673, %v661
      %682 = vst.msk [vmem:[#allocation2 + $0x40] sm:$0xff] %vm673, %v663
      %v683 = vld [vmem:[%s165] sm:$0x8]
      %v684 = vld [vmem:[%s165 + $0x4] sm:$0xf]
      %v685 = vld [vmem:[%s165 + $0x8] sm:$0xf]
      %v686 = vld [vmem:[%s165 + $0xc] sm:$0xf]
      %v687 = vld [vmem:[%s165 + $0x10] sm:$0xf]
      %v688 = vld [vmem:[%s165 + $0x14] sm:$0xf]
      %v689 = vld [vmem:[%s165 + $0x18] sm:$0xf]
      %v690 = vld [vmem:[%s165 + $0x1c] sm:$0xf]
      %v691 = vld [vmem:[%s165 + $0x20] sm:$0xf]
      %v692 = vld [vmem:[%s165 + $0x24] sm:$0xf]
      %v693 = vld [vmem:[%s165 + $0x28] sm:$0xf]
      %v694 = vld [vmem:[%s165 + $0x2c] sm:$0xf]
      %v695 = vld [vmem:[%s165 + $0x30] sm:$0xf]
      %v696 = vld [vmem:[%s165 + $0x34] sm:$0xf]
      %v697 = vld [vmem:[%s165 + $0x38] sm:$0xf]
      %v698 = vld [vmem:[%s165 + $0x3c] sm:$0xf]
      %v699 = vld [vmem:[%s165 + $0x40] sm:$0xf]
      %v700 = vld [vmem:[%s165 + $0x44] sm:$0xf]
      %v701 = vld [vmem:[%s165 + $0x48] sm:$0xf]
      %v721 = vunpack.c.l.b16 %v683
      %v722 = vunpack.c.l.b16 %v684
      %v723 = vunpack.c.l.b16 %v685
      %v724 = vunpack.c.l.b16 %v686
      %v725 = vunpack.c.l.b16 %v687
      %v726 = vunpack.c.l.b16 %v688
      %v727 = vunpack.c.l.b16 %v689
      %v728 = vunpack.c.l.b16 %v690
      %v729 = vunpack.c.l.b16 %v691
      %v730 = vunpack.c.l.b16 %v692
      %v731 = vunpack.c.l.b16 %v693
      %v732 = vunpack.c.l.b16 %v694
      %v733 = vunpack.c.l.b16 %v695
      %v734 = vunpack.c.l.b16 %v696
      %v735 = vunpack.c.l.b16 %v697
      %v736 = vunpack.c.l.b16 %v698
      %v737 = vunpack.c.l.b16 %v699
      %v738 = vunpack.c.l.b16 %v700
      %v739 = vunpack.c.l.b16 %v701
      %v740 = vpack.c.b16 %v722, %v721
      %v741 = vpack.c.b16 %v724, %v723
      %v742 = vpack.c.b16 %v726, %v725
      %v743 = vpack.c.b16 %v728, %v727
      %v744 = vpack.c.b16 %v730, %v729
      %v745 = vpack.c.b16 %v732, %v731
      %v746 = vpack.c.b16 %v734, %v733
      %v747 = vpack.c.b16 %v736, %v735
      %v748 = vpack.c.b16 %v738, %v737
      %v749 = vpack.c.b16 %v739, %v739
      %vm750 = vsmask.f32 4352
      %v752 = vshrl.u32 %v740, 16
      %v754 = vrot.slane %v752, 3
      %v755 = vshll.u32 %v740, 16
      %v757 = vrot.slane %v755, 4
      %v758 = vor.u32 %v754, %v757
      %v760 = vshrl.u32 %v741, 16
      %v762 = vrot.slane %v760, 3
      %v763 = vshll.u32 %v741, 16
      %v765 = vrot.slane %v763, 4
      %v766 = vor.u32 %v762, %v765
      %v767 = vsel %vm750, %v758, %v766
      %v769 = vshrl.u32 %v742, 16
      %v771 = vrot.slane %v769, 3
      %v772 = vshll.u32 %v742, 16
      %v774 = vrot.slane %v772, 4
      %v775 = vor.u32 %v771, %v774
      %v776 = vsel %vm750, %v766, %v775
      %v778 = vshrl.u32 %v743, 16
      %v780 = vrot.slane %v778, 3
      %v781 = vshll.u32 %v743, 16
      %v783 = vrot.slane %v781, 4
      %v784 = vor.u32 %v780, %v783
      %v785 = vsel %vm750, %v775, %v784
      %v787 = vshrl.u32 %v744, 16
      %v789 = vrot.slane %v787, 3
      %v790 = vshll.u32 %v744, 16
      %v792 = vrot.slane %v790, 4
      %v793 = vor.u32 %v789, %v792
      %v794 = vsel %vm750, %v784, %v793
      %v796 = vshrl.u32 %v745, 16
      %v798 = vrot.slane %v796, 3
      %v799 = vshll.u32 %v745, 16
      %v801 = vrot.slane %v799, 4
      %v802 = vor.u32 %v798, %v801
      %v803 = vsel %vm750, %v793, %v802
      %v805 = vshrl.u32 %v746, 16
      %v807 = vrot.slane %v805, 3
      %v808 = vshll.u32 %v746, 16
      %v810 = vrot.slane %v808, 4
      %v811 = vor.u32 %v807, %v810
      %v812 = vsel %vm750, %v802, %v811
      %v814 = vshrl.u32 %v747, 16
      %v816 = vrot.slane %v814, 3
      %v817 = vshll.u32 %v747, 16
      %v819 = vrot.slane %v817, 4
      %v820 = vor.u32 %v816, %v819
      %v821 = vsel %vm750, %v811, %v820
      %v823 = vshrl.u32 %v748, 16
      %v825 = vrot.slane %v823, 3
      %v826 = vshll.u32 %v748, 16
      %v828 = vrot.slane %v826, 4
      %v829 = vor.u32 %v825, %v828
      %v830 = vsel %vm750, %v820, %v829
      %v832 = vshrl.u32 %v749, 16
      %v834 = vrot.slane %v832, 3
      %v835 = vshll.u32 %v749, 16
      %v837 = vrot.slane %v835, 4
      %v838 = vor.u32 %v834, %v837
      %v839 = vsel %vm750, %v829, %v838
      %840 = vrot.lane.b32.xlu0 %v767, 12
      %v841 = vpop.permute.xlu0 %840
      %842 = vrot.lane.b32.xlu0 %v776, 12
      %v843 = vpop.permute.xlu0 %842
      %844 = vrot.lane.b32.xlu0 %v785, 12
      %v845 = vpop.permute.xlu0 %844
      %846 = vrot.lane.b32.xlu0 %v794, 12
      %v847 = vpop.permute.xlu0 %846
      %848 = vrot.lane.b32.xlu0 %v803, 12
      %v849 = vpop.permute.xlu0 %848
      %850 = vrot.lane.b32.xlu0 %v812, 12
      %v851 = vpop.permute.xlu0 %850
      %852 = vrot.lane.b32.xlu0 %v821, 12
      %v853 = vpop.permute.xlu0 %852
      %854 = vrot.lane.b32.xlu0 %v830, 12
      %v855 = vpop.permute.xlu0 %854
      %856 = vrot.lane.b32.xlu0 %v839, 12
      %v857 = vpop.permute.xlu0 %856
      %vm867 = vcmask 121952
      %868 = vst.msk [vmem:[#allocation2] sm:$0xff] %vm867, %v841
      %869 = vst.msk [vmem:[#allocation2 + $0x8] sm:$0xff] %vm867, %v843
      %870 = vst.msk [vmem:[#allocation2 + $0x10] sm:$0xff] %vm867, %v845
      %871 = vst.msk [vmem:[#allocation2 + $0x18] sm:$0xff] %vm867, %v847
      %872 = vst.msk [vmem:[#allocation2 + $0x20] sm:$0xff] %vm867, %v849
      %873 = vst.msk [vmem:[#allocation2 + $0x28] sm:$0xff] %vm867, %v851
      %874 = vst.msk [vmem:[#allocation2 + $0x30] sm:$0xff] %vm867, %v853
      %875 = vst.msk [vmem:[#allocation2 + $0x38] sm:$0xff] %vm867, %v855
      %876 = vst.msk [vmem:[#allocation2 + $0x40] sm:$0xff] %vm867, %v857
      %v877 = vld [vmem:[%s165 + $0x4] sm:$0xf]
      %v878 = vld [vmem:[%s165 + $0x8] sm:$0xf]
      %v879 = vld [vmem:[%s165 + $0xc] sm:$0xf]
      %v880 = vld [vmem:[%s165 + $0x10] sm:$0xf]
      %v881 = vld [vmem:[%s165 + $0x14] sm:$0xf]
      %v882 = vld [vmem:[%s165 + $0x18] sm:$0xf]
      %v883 = vld [vmem:[%s165 + $0x1c] sm:$0xf]
      %v884 = vld [vmem:[%s165 + $0x20] sm:$0xf]
      %v885 = vld [vmem:[%s165 + $0x24] sm:$0xf]
      %v886 = vld [vmem:[%s165 + $0x28] sm:$0xf]
      %v887 = vld [vmem:[%s165 + $0x2c] sm:$0xf]
      %v888 = vld [vmem:[%s165 + $0x30] sm:$0xf]
      %v889 = vld [vmem:[%s165 + $0x34] sm:$0xf]
      %v890 = vld [vmem:[%s165 + $0x38] sm:$0xf]
      %v891 = vld [vmem:[%s165 + $0x3c] sm:$0xf]
      %v892 = vld [vmem:[%s165 + $0x40] sm:$0xf]
      %v893 = vld [vmem:[%s165 + $0x44] sm:$0xf]
      %v894 = vld [vmem:[%s165 + $0x48] sm:$0xf]
      %v913 = vunpack.c.l.b16 %v877
      %v914 = vunpack.c.l.b16 %v878
      %v915 = vunpack.c.l.b16 %v879
      %v916 = vunpack.c.l.b16 %v880
      %v917 = vunpack.c.l.b16 %v881
      %v918 = vunpack.c.l.b16 %v882
      %v919 = vunpack.c.l.b16 %v883
      %v920 = vunpack.c.l.b16 %v884
      %v921 = vunpack.c.l.b16 %v885
      %v922 = vunpack.c.l.b16 %v886
      %v923 = vunpack.c.l.b16 %v887
      %v924 = vunpack.c.l.b16 %v888
      %v925 = vunpack.c.l.b16 %v889
      %v926 = vunpack.c.l.b16 %v890
      %v927 = vunpack.c.l.b16 %v891
      %v928 = vunpack.c.l.b16 %v892
      %v929 = vunpack.c.l.b16 %v893
      %v930 = vunpack.c.l.b16 %v894
      %v931 = vpack.c.b16 %v914, %v913
      %v932 = vpack.c.b16 %v916, %v915
      %v933 = vpack.c.b16 %v918, %v917
      %v934 = vpack.c.b16 %v920, %v919
      %v935 = vpack.c.b16 %v922, %v921
      %v936 = vpack.c.b16 %v924, %v923
      %v937 = vpack.c.b16 %v926, %v925
      %v938 = vpack.c.b16 %v928, %v927
      %v939 = vpack.c.b16 %v930, %v929
      %940 = vrot.lane.b32.xlu0 %v931, 15
      %v941 = vpop.permute.xlu0 %940
      %942 = vrot.lane.b32.xlu0 %v932, 15
      %v943 = vpop.permute.xlu0 %942
      %944 = vrot.lane.b32.xlu0 %v933, 15
      %v945 = vpop.permute.xlu0 %944
      %946 = vrot.lane.b32.xlu0 %v934, 15
      %v947 = vpop.permute.xlu0 %946
      %948 = vrot.lane.b32.xlu0 %v935, 15
      %v949 = vpop.permute.xlu0 %948
      %950 = vrot.lane.b32.xlu0 %v936, 15
      %v951 = vpop.permute.xlu0 %950
      %952 = vrot.lane.b32.xlu0 %v937, 15
      %v953 = vpop.permute.xlu0 %952
      %954 = vrot.lane.b32.xlu0 %v938, 15
      %v955 = vpop.permute.xlu0 %954
      %956 = vrot.lane.b32.xlu0 %v939, 15
      %v957 = vpop.permute.xlu0 %956
      %vm967 = vcmask 146552
      %968 = vst.msk [vmem:[#allocation2] sm:$0xff] %vm967, %v941
      %969 = vst.msk [vmem:[#allocation2 + $0x8] sm:$0xff] %vm967, %v943
      %970 = vst.msk [vmem:[#allocation2 + $0x10] sm:$0xff] %vm967, %v945
      %971 = vst.msk [vmem:[#allocation2 + $0x18] sm:$0xff] %vm967, %v947
      %972 = vst.msk [vmem:[#allocation2 + $0x20] sm:$0xff] %vm967, %v949
      %973 = vst.msk [vmem:[#allocation2 + $0x28] sm:$0xff] %vm967, %v951
      %974 = vst.msk [vmem:[#allocation2 + $0x30] sm:$0xff] %vm967, %v953
      %975 = vst.msk [vmem:[#allocation2 + $0x38] sm:$0xff] %vm967, %v955
      %976 = vst.msk [vmem:[#allocation2 + $0x40] sm:$0xff] %vm967, %v957
      %v977 = vld [vmem:[%s165 + $0x4] sm:$0xc]
      %v978 = vld [vmem:[%s165 + $0x8] sm:$0xf]
      %v979 = vld [vmem:[%s165 + $0xc] sm:$0xf]
      %v980 = vld [vmem:[%s165 + $0x10] sm:$0xf]
      %v981 = vld [vmem:[%s165 + $0x14] sm:$0xf]
      %v982 = vld [vmem:[%s165 + $0x18] sm:$0xf]
      %v983 = vld [vmem:[%s165 + $0x1c] sm:$0xf]
      %v984 = vld [vmem:[%s165 + $0x20] sm:$0xf]
      %v985 = vld [vmem:[%s165 + $0x24] sm:$0xf]
      %v986 = vld [vmem:[%s165 + $0x28] sm:$0xf]
      %v987 = vld [vmem:[%s165 + $0x2c] sm:$0xf]
      %v988 = vld [vmem:[%s165 + $0x30] sm:$0xf]
      %v989 = vld [vmem:[%s165 + $0x34] sm:$0xf]
      %v990 = vld [vmem:[%s165 + $0x38] sm:$0xf]
      %v991 = vld [vmem:[%s165 + $0x3c] sm:$0xf]
      %v992 = vld [vmem:[%s165 + $0x40] sm:$0xf]
      %v993 = vld [vmem:[%s165 + $0x44] sm:$0xf]
      %v994 = vld [vmem:[%s165 + $0x48] sm:$0xf]
      %v995 = vld [vmem:[%s165 + $0x4c] sm:$0x3]
      %v1015 = vunpack.c.l.b16 %v977
      %v1016 = vunpack.c.l.b16 %v978
      %v1017 = vunpack.c.l.b16 %v979
      %v1018 = vunpack.c.l.b16 %v980
      %v1019 = vunpack.c.l.b16 %v981
      %v1020 = vunpack.c.l.b16 %v982
      %v1021 = vunpack.c.l.b16 %v983
      %v1022 = vunpack.c.l.b16 %v984
      %v1023 = vunpack.c.l.b16 %v985
      %v1024 = vunpack.c.l.b16 %v986
      %v1025 = vunpack.c.l.b16 %v987
      %v1026 = vunpack.c.l.b16 %v988
      %v1027 = vunpack.c.l.b16 %v989
      %v1028 = vunpack.c.l.b16 %v990
      %v1029 = vunpack.c.l.b16 %v991
      %v1030 = vunpack.c.l.b16 %v992
      %v1031 = vunpack.c.l.b16 %v993
      %v1032 = vunpack.c.l.b16 %v994
      %v1033 = vunpack.c.l.b16 %v995
      %v1034 = vpack.c.b16 %v1016, %v1015
      %v1035 = vpack.c.b16 %v1018, %v1017
      %v1036 = vpack.c.b16 %v1020, %v1019
      %v1037 = vpack.c.b16 %v1022, %v1021
      %v1038 = vpack.c.b16 %v1024, %v1023
      %v1039 = vpack.c.b16 %v1026, %v1025
      %v1040 = vpack.c.b16 %v1028, %v1027
      %v1041 = vpack.c.b16 %v1030, %v1029
      %v1042 = vpack.c.b16 %v1032, %v1031
      %v1043 = vpack.c.b16 %v1033, %v1033
      %vm1044 = vcmask 1045504
      %v1045 = vrot.slane %v1034, 2
      %v1046 = vrot.slane %v1035, 2
      %v1047 = vsel %vm1044, %v1045, %v1046
      %v1048 = vrot.slane %v1036, 2
      %v1049 = vsel %vm1044, %v1046, %v1048
      %v1050 = vrot.slane %v1037, 2
      %v1051 = vsel %vm1044, %v1048, %v1050
      %v1052 = vrot.slane %v1038, 2
      %v1053 = vsel %vm1044, %v1050, %v1052
      %v1054 = vrot.slane %v1039, 2
      %v1055 = vsel %vm1044, %v1052, %v1054
      %v1056 = vrot.slane %v1040, 2
      %v1057 = vsel %vm1044, %v1054, %v1056
      %v1058 = vrot.slane %v1041, 2
      %v1059 = vsel %vm1044, %v1056, %v1058
      %v1060 = vrot.slane %v1042, 2
      %v1061 = vsel %vm1044, %v1058, %v1060
      %v1062 = vrot.slane %v1043, 2
      %v1063 = vsel %vm1044, %v1060, %v1062
      %1064 = vrot.lane.b32.xlu0 %v1047, 18
      %v1065 = vpop.permute.xlu0 %1064
      %1066 = vrot.lane.b32.xlu0 %v1049, 18
      %v1067 = vpop.permute.xlu0 %1066
      %1068 = vrot.lane.b32.xlu0 %v1051, 18
      %v1069 = vpop.permute.xlu0 %1068
      %1070 = vrot.lane.b32.xlu0 %v1053, 18
      %v1071 = vpop.permute.xlu0 %1070
      %1072 = vrot.lane.b32.xlu0 %v1055, 18
      %v1073 = vpop.permute.xlu0 %1072
      %1074 = vrot.lane.b32.xlu0 %v1057, 18
      %v1075 = vpop.permute.xlu0 %1074
      %1076 = vrot.lane.b32.xlu0 %v1059, 18
      %v1077 = vpop.permute.xlu0 %1076
      %1078 = vrot.lane.b32.xlu0 %v1061, 18
      %v1079 = vpop.permute.xlu0 %1078
      %1080 = vrot.lane.b32.xlu0 %v1063, 18
      %v1081 = vpop.permute.xlu0 %1080
      %vm1091 = vcmask 171152
      %1092 = vst.msk [vmem:[#allocation2] sm:$0xff] %vm1091, %v1065
      %1093 = vst.msk [vmem:[#allocation2 + $0x8] sm:$0xff] %vm1091, %v1067
      %1094 = vst.msk [vmem:[#allocation2 + $0x10] sm:$0xff] %vm1091, %v1069
      %1095 = vst.msk [vmem:[#allocation2 + $0x18] sm:$0xff] %vm1091, %v1071
      %1096 = vst.msk [vmem:[#allocation2 + $0x20] sm:$0xff] %vm1091, %v1073
      %1097 = vst.msk [vmem:[#allocation2 + $0x28] sm:$0xff] %vm1091, %v1075
      %1098 = vst.msk [vmem:[#allocation2 + $0x30] sm:$0xff] %vm1091, %v1077
      %1099 = vst.msk [vmem:[#allocation2 + $0x38] sm:$0xff] %vm1091, %v1079
      %1100 = vst.msk [vmem:[#allocation2 + $0x40] sm:$0xff] %vm1091, %v1081
      %v1101 = vld [vmem:[%s165 + $0x4] sm:$0xc]
      %v1102 = vld [vmem:[%s165 + $0x8] sm:$0xf]
      %v1103 = vld [vmem:[%s165 + $0xc] sm:$0xf]
      %v1104 = vld [vmem:[%s165 + $0x10] sm:$0xf]
      %v1105 = vld [vmem:[%s165 + $0x14] sm:$0xf]
      %v1106 = vld [vmem:[%s165 + $0x18] sm:$0xf]
      %v1107 = vld [vmem:[%s165 + $0x1c] sm:$0xf]
      %v1108 = vld [vmem:[%s165 + $0x20] sm:$0xf]
      %v1109 = vld [vmem:[%s165 + $0x24] sm:$0xf]
      %v1110 = vld [vmem:[%s165 + $0x28] sm:$0xf]
      %v1111 = vld [vmem:[%s165 + $0x2c] sm:$0xf]
      %v1112 = vld [vmem:[%s165 + $0x30] sm:$0xf]
      %v1113 = vld [vmem:[%s165 + $0x34] sm:$0xf]
      %v1114 = vld [vmem:[%s165 + $0x38] sm:$0xf]
      %v1115 = vld [vmem:[%s165 + $0x3c] sm:$0xf]
      %v1116 = vld [vmem:[%s165 + $0x40] sm:$0xf]
      %v1117 = vld [vmem:[%s165 + $0x44] sm:$0xf]
      %v1118 = vld [vmem:[%s165 + $0x48] sm:$0xf]
      %v1119 = vld [vmem:[%s165 + $0x4c] sm:$0x7]
      %v1139 = vunpack.c.l.b16 %v1101
      %v1140 = vunpack.c.l.b16 %v1102
      %v1141 = vunpack.c.l.b16 %v1103
      %v1142 = vunpack.c.l.b16 %v1104
      %v1143 = vunpack.c.l.b16 %v1105
      %v1144 = vunpack.c.l.b16 %v1106
      %v1145 = vunpack.c.l.b16 %v1107
      %v1146 = vunpack.c.l.b16 %v1108
      %v1147 = vunpack.c.l.b16 %v1109
      %v1148 = vunpack.c.l.b16 %v1110
      %v1149 = vunpack.c.l.b16 %v1111
      %v1150 = vunpack.c.l.b16 %v1112
      %v1151 = vunpack.c.l.b16 %v1113
      %v1152 = vunpack.c.l.b16 %v1114
      %v1153 = vunpack.c.l.b16 %v1115
      %v1154 = vunpack.c.l.b16 %v1116
      %v1155 = vunpack.c.l.b16 %v1117
      %v1156 = vunpack.c.l.b16 %v1118
      %v1157 = vunpack.c.l.b16 %v1119
      %v1158 = vpack.c.b16 %v1140, %v1139
      %v1159 = vpack.c.b16 %v1142, %v1141
      %v1160 = vpack.c.b16 %v1144, %v1143
      %v1161 = vpack.c.b16 %v1146, %v1145
      %v1162 = vpack.c.b16 %v1148, %v1147
      %v1163 = vpack.c.b16 %v1150, %v1149
      %v1164 = vpack.c.b16 %v1152, %v1151
      %v1165 = vpack.c.b16 %v1154, %v1153
      %v1166 = vpack.c.b16 %v1156, %v1155
      %v1167 = vpack.c.b16 %v1157, %v1157
      %vm1168 = vsmask.f32 5376
      %v1170 = vshrl.u32 %v1158, 16
      %v1172 = vrot.slane %v1170, 2
      %v1173 = vshll.u32 %v1158, 16
      %v1175 = vrot.slane %v1173, 3
      %v1176 = vor.u32 %v1172, %v1175
      %v1178 = vshrl.u32 %v1159, 16
      %v1180 = vrot.slane %v1178, 2
      %v1181 = vshll.u32 %v1159, 16
      %v1183 = vrot.slane %v1181, 3
      %v1184 = vor.u32 %v1180, %v1183
      %v1185 = vsel %vm1168, %v1176, %v1184
      %v1187 = vshrl.u32 %v1160, 16
      %v1189 = vrot.slane %v1187, 2
      %v1190 = vshll.u32 %v1160, 16
      %v1192 = vrot.slane %v1190, 3
      %v1193 = vor.u32 %v1189, %v1192
      %v1194 = vsel %vm1168, %v1184, %v1193
      %v1196 = vshrl.u32 %v1161, 16
      %v1198 = vrot.slane %v1196, 2
      %v1199 = vshll.u32 %v1161, 16
      %v1201 = vrot.slane %v1199, 3
      %v1202 = vor.u32 %v1198, %v1201
      %v1203 = vsel %vm1168, %v1193, %v1202
      %v1205 = vshrl.u32 %v1162, 16
      %v1207 = vrot.slane %v1205, 2
      %v1208 = vshll.u32 %v1162, 16
      %v1210 = vrot.slane %v1208, 3
      %v1211 = vor.u32 %v1207, %v1210
      %v1212 = vsel %vm1168, %v1202, %v1211
      %v1214 = vshrl.u32 %v1163, 16
      %v1216 = vrot.slane %v1214, 2
      %v1217 = vshll.u32 %v1163, 16
      %v1219 = vrot.slane %v1217, 3
      %v1220 = vor.u32 %v1216, %v1219
      %v1221 = vsel %vm1168, %v1211, %v1220
      %v1223 = vshrl.u32 %v1164, 16
      %v1225 = vrot.slane %v1223, 2
      %v1226 = vshll.u32 %v1164, 16
      %v1228 = vrot.slane %v1226, 3
      %v1229 = vor.u32 %v1225, %v1228
      %v1230 = vsel %vm1168, %v1220, %v1229
      %v1232 = vshrl.u32 %v1165, 16
      %v1234 = vrot.slane %v1232, 2
      %v1235 = vshll.u32 %v1165, 16
      %v1237 = vrot.slane %v1235, 3
      %v1238 = vor.u32 %v1234, %v1237
      %v1239 = vsel %vm1168, %v1229, %v1238
      %v1241 = vshrl.u32 %v1166, 16
      %v1243 = vrot.slane %v1241, 2
      %v1244 = vshll.u32 %v1166, 16
      %v1246 = vrot.slane %v1244, 3
      %v1247 = vor.u32 %v1243, %v1246
      %v1248 = vsel %vm1168, %v1238, %v1247
      %v1250 = vshrl.u32 %v1167, 16
      %v1252 = vrot.slane %v1250, 2
      %v1253 = vshll.u32 %v1167, 16
      %v1255 = vrot.slane %v1253, 3
      %v1256 = vor.u32 %v1252, %v1255
      %v1257 = vsel %vm1168, %v1247, %v1256
      %1258 = vrot.lane.b32.xlu0 %v1185, 21
      %v1259 = vpop.permute.xlu0 %1258
      %1260 = vrot.lane.b32.xlu0 %v1194, 21
      %v1261 = vpop.permute.xlu0 %1260
      %1262 = vrot.lane.b32.xlu0 %v1203, 21
      %v1263 = vpop.permute.xlu0 %1262
      %1264 = vrot.lane.b32.xlu0 %v1212, 21
      %v1265 = vpop.permute.xlu0 %1264
      %1266 = vrot.lane.b32.xlu0 %v1221, 21
      %v1267 = vpop.permute.xlu0 %1266
      %1268 = vrot.lane.b32.xlu0 %v1230, 21
      %v1269 = vpop.permute.xlu0 %1268
      %1270 = vrot.lane.b32.xlu0 %v1239, 21
      %v1271 = vpop.permute.xlu0 %1270
      %1272 = vrot.lane.b32.xlu0 %v1248, 21
      %v1273 = vpop.permute.xlu0 %1272
      %1274 = vrot.lane.b32.xlu0 %v1257, 21
      %v1275 = vpop.permute.xlu0 %1274
      %vm1285 = vcmask 195752
      %1286 = vst.msk [vmem:[#allocation2] sm:$0xff] %vm1285, %v1259
      %1287 = vst.msk [vmem:[#allocation2 + $0x8] sm:$0xff] %vm1285, %v1261
      %1288 = vst.msk [vmem:[#allocation2 + $0x10] sm:$0xff] %vm1285, %v1263
      %1289 = vst.msk [vmem:[#allocation2 + $0x18] sm:$0xff] %vm1285, %v1265
      %1290 = vst.msk [vmem:[#allocation2 + $0x20] sm:$0xff] %vm1285, %v1267
      %1291 = vst.msk [vmem:[#allocation2 + $0x28] sm:$0xff] %vm1285, %v1269
      %1292 = vst.msk [vmem:[#allocation2 + $0x30] sm:$0xff] %vm1285, %v1271
      %1293 = vst.msk [vmem:[#allocation2 + $0x38] sm:$0xff] %vm1285, %v1273
      %1294 = vst.msk [vmem:[#allocation2 + $0x40] sm:$0xff] %vm1285, %v1275
      %v1295 = vld [vmem:[%s165 + $0x4] sm:$0x8]
      %v1296 = vld [vmem:[%s165 + $0x8] sm:$0xf]
      %v1297 = vld [vmem:[%s165 + $0xc] sm:$0xf]
      %v1298 = vld [vmem:[%s165 + $0x10] sm:$0xf]
      %v1299 = vld [vmem:[%s165 + $0x14] sm:$0xf]
      %v1300 = vld [vmem:[%s165 + $0x18] sm:$0xf]
      %v1301 = vld [vmem:[%s165 + $0x1c] sm:$0xf]
      %v1302 = vld [vmem:[%s165 + $0x20] sm:$0xf]
      %v1303 = vld [vmem:[%s165 + $0x24] sm:$0xf]
      %v1304 = vld [vmem:[%s165 + $0x28] sm:$0xf]
      %v1305 = vld [vmem:[%s165 + $0x2c] sm:$0xf]
      %v1306 = vld [vmem:[%s165 + $0x30] sm:$0xf]
      %v1307 = vld [vmem:[%s165 + $0x34] sm:$0xf]
      %v1308 = vld [vmem:[%s165 + $0x38] sm:$0xf]
      %v1309 = vld [vmem:[%s165 + $0x3c] sm:$0xf]
      %v1310 = vld [vmem:[%s165 + $0x40] sm:$0xf]
      %v1311 = vld [vmem:[%s165 + $0x44] sm:$0xf]
      %v1312 = vld [vmem:[%s165 + $0x48] sm:$0xf]
      %v1313 = vld [vmem:[%s165 + $0x4c] sm:$0x7]
      %v1333 = vunpack.c.l.b16 %v1295
      %v1334 = vunpack.c.l.b16 %v1296
      %v1335 = vunpack.c.l.b16 %v1297
      %v1336 = vunpack.c.l.b16 %v1298
      %v1337 = vunpack.c.l.b16 %v1299
      %v1338 = vunpack.c.l.b16 %v1300
      %v1339 = vunpack.c.l.b16 %v1301
      %v1340 = vunpack.c.l.b16 %v1302
      %v1341 = vunpack.c.l.b16 %v1303
      %v1342 = vunpack.c.l.b16 %v1304
      %v1343 = vunpack.c.l.b16 %v1305
      %v1344 = vunpack.c.l.b16 %v1306
      %v1345 = vunpack.c.l.b16 %v1307
      %v1346 = vunpack.c.l.b16 %v1308
      %v1347 = vunpack.c.l.b16 %v1309
      %v1348 = vunpack.c.l.b16 %v1310
      %v1349 = vunpack.c.l.b16 %v1311
      %v1350 = vunpack.c.l.b16 %v1312
      %v1351 = vunpack.c.l.b16 %v1313
      %v1352 = vpack.c.b16 %v1334, %v1333
      %v1353 = vpack.c.b16 %v1336, %v1335
      %v1354 = vpack.c.b16 %v1338, %v1337
      %v1355 = vpack.c.b16 %v1340, %v1339
      %v1356 = vpack.c.b16 %v1342, %v1341
      %v1357 = vpack.c.b16 %v1344, %v1343
      %v1358 = vpack.c.b16 %v1346, %v1345
      %v1359 = vpack.c.b16 %v1348, %v1347
      %v1360 = vpack.c.b16 %v1350, %v1349
      %v1361 = vpack.c.b16 %v1351, %v1351
      %v1362 = vrot.slane %v1352, 3
      %v1363 = vrot.slane %v1353, 3
      %v1364 = vsel %vm626, %v1362, %v1363
      %v1365 = vrot.slane %v1354, 3
      %v1366 = vsel %vm626, %v1363, %v1365
      %v1367 = vrot.slane %v1355, 3
      %v1368 = vsel %vm626, %v1365, %v1367
      %v1369 = vrot.slane %v1356, 3
      %v1370 = vsel %vm626, %v1367, %v1369
      %v1371 = vrot.slane %v1357, 3
      %v1372 = vsel %vm626, %v1369, %v1371
      %v1373 = vrot.slane %v1358, 3
      %v1374 = vsel %vm626, %v1371, %v1373
      %v1375 = vrot.slane %v1359, 3
      %v1376 = vsel %vm626, %v1373, %v1375
      %v1377 = vrot.slane %v1360, 3
      %v1378 = vsel %vm626, %v1375, %v1377
      %v1379 = vrot.slane %v1361, 3
      %v1380 = vsel %vm626, %v1377, %v1379
      %1381 = vrot.lane.b32.xlu0 %v1364, 24
      %v1382 = vpop.permute.xlu0 %1381
      %1383 = vrot.lane.b32.xlu0 %v1366, 24
      %v1384 = vpop.permute.xlu0 %1383
      %1385 = vrot.lane.b32.xlu0 %v1368, 24
      %v1386 = vpop.permute.xlu0 %1385
      %1387 = vrot.lane.b32.xlu0 %v1370, 24
      %v1388 = vpop.permute.xlu0 %1387
      %1389 = vrot.lane.b32.xlu0 %v1372, 24
      %v1390 = vpop.permute.xlu0 %1389
      %1391 = vrot.lane.b32.xlu0 %v1374, 24
      %v1392 = vpop.permute.xlu0 %1391
      %1393 = vrot.lane.b32.xlu0 %v1376, 24
      %v1394 = vpop.permute.xlu0 %1393
      %1395 = vrot.lane.b32.xlu0 %v1378, 24
      %v1396 = vpop.permute.xlu0 %1395
      %1397 = vrot.lane.b32.xlu0 %v1380, 24
      %v1398 = vpop.permute.xlu0 %1397
      %vm1408 = vcmask 220352
      %1409 = vst.msk [vmem:[#allocation2] sm:$0xff] %vm1408, %v1382
      %1410 = vst.msk [vmem:[#allocation2 + $0x8] sm:$0xff] %vm1408, %v1384
      %1411 = vst.msk [vmem:[#allocation2 + $0x10] sm:$0xff] %vm1408, %v1386
      %1412 = vst.msk [vmem:[#allocation2 + $0x18] sm:$0xff] %vm1408, %v1388
      %1413 = vst.msk [vmem:[#allocation2 + $0x20] sm:$0xff] %vm1408, %v1390
      %1414 = vst.msk [vmem:[#allocation2 + $0x28] sm:$0xff] %vm1408, %v1392
      %1415 = vst.msk [vmem:[#allocation2 + $0x30] sm:$0xff] %vm1408, %v1394
      %1416 = vst.msk [vmem:[#allocation2 + $0x38] sm:$0xff] %vm1408, %v1396
      %1417 = vst.msk [vmem:[#allocation2 + $0x40] sm:$0xff] %vm1408, %v1398
      %v1418 = vld [vmem:[%s165 + $0x10] sm:$0xc]
      %v1419 = vld [vmem:[%s165 + $0x14] sm:$0xf]
      %v1420 = vld [vmem:[%s165 + $0x18] sm:$0xf]
      %v1421 = vld [vmem:[%s165 + $0x1c] sm:$0xf]
      %v1422 = vld [vmem:[%s165 + $0x20] sm:$0xf]
      %v1423 = vld [vmem:[%s165 + $0x24] sm:$0xf]
      %v1424 = vld [vmem:[%s165 + $0x28] sm:$0xf]
      %v1425 = vld [vmem:[%s165 + $0x2c] sm:$0xf]
      %v1426 = vld [vmem:[%s165 + $0x30] sm:$0xf]
      %v1427 = vld [vmem:[%s165 + $0x34] sm:$0xf]
      %v1428 = vld [vmem:[%s165 + $0x38] sm:$0xf]
      %v1429 = vld [vmem:[%s165 + $0x3c] sm:$0xf]
      %v1430 = vld [vmem:[%s165 + $0x40] sm:$0xf]
      %v1431 = vld [vmem:[%s165 + $0x44] sm:$0xf]
      %v1432 = vld [vmem:[%s165 + $0x48] sm:$0xf]
      %v1433 = vld [vmem:[%s165 + $0x4c] sm:$0xf]
      %v1434 = vld [vmem:[%s165 + $0x50] sm:$0xf]
      %v1435 = vld [vmem:[%s165 + $0x54] sm:$0xf]
      %v1436 = vld [vmem:[%s165 + $0x58] sm:$0x3]
      %v1456 = vunpack.c.l.b16 %v1418
      %v1457 = vunpack.c.l.b16 %v1419
      %v1458 = vunpack.c.l.b16 %v1420
      %v1459 = vunpack.c.l.b16 %v1421
      %v1460 = vunpack.c.l.b16 %v1422
      %v1461 = vunpack.c.l.b16 %v1423
      %v1462 = vunpack.c.l.b16 %v1424
      %v1463 = vunpack.c.l.b16 %v1425
      %v1464 = vunpack.c.l.b16 %v1426
      %v1465 = vunpack.c.l.b16 %v1427
      %v1466 = vunpack.c.l.b16 %v1428
      %v1467 = vunpack.c.l.b16 %v1429
      %v1468 = vunpack.c.l.b16 %v1430
      %v1469 = vunpack.c.l.b16 %v1431
      %v1470 = vunpack.c.l.b16 %v1432
      %v1471 = vunpack.c.l.b16 %v1433
      %v1472 = vunpack.c.l.b16 %v1434
      %v1473 = vunpack.c.l.b16 %v1435
      %v1474 = vunpack.c.l.b16 %v1436
      %v1475 = vpack.c.b16 %v1457, %v1456
      %v1476 = vpack.c.b16 %v1459, %v1458
      %v1477 = vpack.c.b16 %v1461, %v1460
      %v1478 = vpack.c.b16 %v1463, %v1462
      %v1479 = vpack.c.b16 %v1465, %v1464
      %v1480 = vpack.c.b16 %v1467, %v1466
      %v1481 = vpack.c.b16 %v1469, %v1468
      %v1482 = vpack.c.b16 %v1471, %v1470
      %v1483 = vpack.c.b16 %v1473, %v1472
      %v1484 = vpack.c.b16 %v1474, %v1474
      %v1485 = vrot.slane %v1475, 2
      %v1486 = vrot.slane %v1476, 2
      %v1487 = vsel %vm1044, %v1485, %v1486
      %v1488 = vrot.slane %v1477, 2
      %v1489 = vsel %vm1044, %v1486, %v1488
      %v1490 = vrot.slane %v1478, 2
      %v1491 = vsel %vm1044, %v1488, %v1490
      %v1492 = vrot.slane %v1479, 2
      %v1493 = vsel %vm1044, %v1490, %v1492
      %v1494 = vrot.slane %v1480, 2
      %v1495 = vsel %vm1044, %v1492, %v1494
      %v1496 = vrot.slane %v1481, 2
      %v1497 = vsel %vm1044, %v1494, %v1496
      %v1498 = vrot.slane %v1482, 2
      %v1499 = vsel %vm1044, %v1496, %v1498
      %v1500 = vrot.slane %v1483, 2
      %v1501 = vsel %vm1044, %v1498, %v1500
      %v1502 = vrot.slane %v1484, 2
      %v1503 = vsel %vm1044, %v1500, %v1502
      %1504 = vrot.lane.b32.xlu0 %v1487, 27
      %v1505 = vpop.permute.xlu0 %1504
      %1506 = vrot.lane.b32.xlu0 %v1489, 27
      %v1507 = vpop.permute.xlu0 %1506
      %1508 = vrot.lane.b32.xlu0 %v1491, 27
      %v1509 = vpop.permute.xlu0 %1508
      %1510 = vrot.lane.b32.xlu0 %v1493, 27
      %v1511 = vpop.permute.xlu0 %1510
      %1512 = vrot.lane.b32.xlu0 %v1495, 27
      %v1513 = vpop.permute.xlu0 %1512
      %1514 = vrot.lane.b32.xlu0 %v1497, 27
      %v1515 = vpop.permute.xlu0 %1514
      %1516 = vrot.lane.b32.xlu0 %v1499, 27
      %v1517 = vpop.permute.xlu0 %1516
      %1518 = vrot.lane.b32.xlu0 %v1501, 27
      %v1519 = vpop.permute.xlu0 %1518
      %1520 = vrot.lane.b32.xlu0 %v1503, 27
      %v1521 = vpop.permute.xlu0 %1520
      %vm1531 = vcmask 244952
      %1532 = vst.msk [vmem:[#allocation2] sm:$0xff] %vm1531, %v1505
      %1533 = vst.msk [vmem:[#allocation2 + $0x8] sm:$0xff] %vm1531, %v1507
      %1534 = vst.msk [vmem:[#allocation2 + $0x10] sm:$0xff] %vm1531, %v1509
      %1535 = vst.msk [vmem:[#allocation2 + $0x18] sm:$0xff] %vm1531, %v1511
      %1536 = vst.msk [vmem:[#allocation2 + $0x20] sm:$0xff] %vm1531, %v1513
      %1537 = vst.msk [vmem:[#allocation2 + $0x28] sm:$0xff] %vm1531, %v1515
      %1538 = vst.msk [vmem:[#allocation2 + $0x30] sm:$0xff] %vm1531, %v1517
      %1539 = vst.msk [vmem:[#allocation2 + $0x38] sm:$0xff] %vm1531, %v1519
      %1540 = vst.msk [vmem:[#allocation2 + $0x40] sm:$0xff] %vm1531, %v1521
      %v1541 = vld [vmem:[%s165 + $0x10] sm:$0xc]
      %v1542 = vld [vmem:[%s165 + $0x14] sm:$0xf]
      %v1543 = vld [vmem:[%s165 + $0x18] sm:$0xf]
      %v1544 = vld [vmem:[%s165 + $0x1c] sm:$0xf]
      %v1545 = vld [vmem:[%s165 + $0x20] sm:$0xf]
      %v1546 = vld [vmem:[%s165 + $0x24] sm:$0xf]
      %v1547 = vld [vmem:[%s165 + $0x28] sm:$0xf]
      %v1548 = vld [vmem:[%s165 + $0x2c] sm:$0xf]
      %v1549 = vld [vmem:[%s165 + $0x30] sm:$0xf]
      %v1550 = vld [vmem:[%s165 + $0x34] sm:$0xf]
      %v1551 = vld [vmem:[%s165 + $0x38] sm:$0xf]
      %v1552 = vld [vmem:[%s165 + $0x3c] sm:$0xf]
      %v1553 = vld [vmem:[%s165 + $0x40] sm:$0xf]
      %v1554 = vld [vmem:[%s165 + $0x44] sm:$0xf]
      %v1555 = vld [vmem:[%s165 + $0x48] sm:$0xf]
      %v1556 = vld [vmem:[%s165 + $0x4c] sm:$0xf]
      %v1557 = vld [vmem:[%s165 + $0x50] sm:$0xf]
      %v1558 = vld [vmem:[%s165 + $0x54] sm:$0xf]
      %v1559 = vld [vmem:[%s165 + $0x58] sm:$0x7]
      %v1579 = vunpack.c.l.b16 %v1541
      %v1580 = vunpack.c.l.b16 %v1542
      %v1581 = vunpack.c.l.b16 %v1543
      %v1582 = vunpack.c.l.b16 %v1544
      %v1583 = vunpack.c.l.b16 %v1545
      %v1584 = vunpack.c.l.b16 %v1546
      %v1585 = vunpack.c.l.b16 %v1547
      %v1586 = vunpack.c.l.b16 %v1548
      %v1587 = vunpack.c.l.b16 %v1549
      %v1588 = vunpack.c.l.b16 %v1550
      %v1589 = vunpack.c.l.b16 %v1551
      %v1590 = vunpack.c.l.b16 %v1552
      %v1591 = vunpack.c.l.b16 %v1553
      %v1592 = vunpack.c.l.b16 %v1554
      %v1593 = vunpack.c.l.b16 %v1555
      %v1594 = vunpack.c.l.b16 %v1556
      %v1595 = vunpack.c.l.b16 %v1557
      %v1596 = vunpack.c.l.b16 %v1558
      %v1597 = vunpack.c.l.b16 %v1559
      %v1598 = vpack.c.b16 %v1580, %v1579
      %v1599 = vpack.c.b16 %v1582, %v1581
      %v1600 = vpack.c.b16 %v1584, %v1583
      %v1601 = vpack.c.b16 %v1586, %v1585
      %v1602 = vpack.c.b16 %v1588, %v1587
      %v1603 = vpack.c.b16 %v1590, %v1589
      %v1604 = vpack.c.b16 %v1592, %v1591
      %v1605 = vpack.c.b16 %v1594, %v1593
      %v1606 = vpack.c.b16 %v1596, %v1595
      %v1607 = vpack.c.b16 %v1597, %v1597
      %v1609 = vshrl.u32 %v1598, 16
      %v1611 = vrot.slane %v1609, 2
      %v1612 = vshll.u32 %v1598, 16
      %v1614 = vrot.slane %v1612, 3
      %v1615 = vor.u32 %v1611, %v1614
      %v1617 = vshrl.u32 %v1599, 16
      %v1619 = vrot.slane %v1617, 2
      %v1620 = vshll.u32 %v1599, 16
      %v1622 = vrot.slane %v1620, 3
      %v1623 = vor.u32 %v1619, %v1622
      %v1624 = vsel %vm1168, %v1615, %v1623
      %v1626 = vshrl.u32 %v1600, 16
      %v1628 = vrot.slane %v1626, 2
      %v1629 = vshll.u32 %v1600, 16
      %v1631 = vrot.slane %v1629, 3
      %v1632 = vor.u32 %v1628, %v1631
      %v1633 = vsel %vm1168, %v1623, %v1632
      %v1635 = vshrl.u32 %v1601, 16
      %v1637 = vrot.slane %v1635, 2
      %v1638 = vshll.u32 %v1601, 16
      %v1640 = vrot.slane %v1638, 3
      %v1641 = vor.u32 %v1637, %v1640
      %v1642 = vsel %vm1168, %v1632, %v1641
      %v1644 = vshrl.u32 %v1602, 16
      %v1646 = vrot.slane %v1644, 2
      %v1647 = vshll.u32 %v1602, 16
      %v1649 = vrot.slane %v1647, 3
      %v1650 = vor.u32 %v1646, %v1649
      %v1651 = vsel %vm1168, %v1641, %v1650
      %v1653 = vshrl.u32 %v1603, 16
      %v1655 = vrot.slane %v1653, 2
      %v1656 = vshll.u32 %v1603, 16
      %v1658 = vrot.slane %v1656, 3
      %v1659 = vor.u32 %v1655, %v1658
      %v1660 = vsel %vm1168, %v1650, %v1659
      %v1662 = vshrl.u32 %v1604, 16
      %v1664 = vrot.slane %v1662, 2
      %v1665 = vshll.u32 %v1604, 16
      %v1667 = vrot.slane %v1665, 3
      %v1668 = vor.u32 %v1664, %v1667
      %v1669 = vsel %vm1168, %v1659, %v1668
      %v1671 = vshrl.u32 %v1605, 16
      %v1673 = vrot.slane %v1671, 2
      %v1674 = vshll.u32 %v1605, 16
      %v1676 = vrot.slane %v1674, 3
      %v1677 = vor.u32 %v1673, %v1676
      %v1678 = vsel %vm1168, %v1668, %v1677
      %v1680 = vshrl.u32 %v1606, 16
      %v1682 = vrot.slane %v1680, 2
      %v1683 = vshll.u32 %v1606, 16
      %v1685 = vrot.slane %v1683, 3
      %v1686 = vor.u32 %v1682, %v1685
      %v1687 = vsel %vm1168, %v1677, %v1686
      %v1689 = vshrl.u32 %v1607, 16
      %v1691 = vrot.slane %v1689, 2
      %v1692 = vshll.u32 %v1607, 16
      %v1694 = vrot.slane %v1692, 3
      %v1695 = vor.u32 %v1691, %v1694
      %v1696 = vsel %vm1168, %v1686, %v1695
      %1697 = vrot.lane.b32.xlu0 %v1624, 30
      %v1698 = vpop.permute.xlu0 %1697
      %1699 = vrot.lane.b32.xlu0 %v1633, 30
      %v1700 = vpop.permute.xlu0 %1699
      %1701 = vrot.lane.b32.xlu0 %v1642, 30
      %v1702 = vpop.permute.xlu0 %1701
      %1703 = vrot.lane.b32.xlu0 %v1651, 30
      %v1704 = vpop.permute.xlu0 %1703
      %1705 = vrot.lane.b32.xlu0 %v1660, 30
      %v1706 = vpop.permute.xlu0 %1705
      %1707 = vrot.lane.b32.xlu0 %v1669, 30
      %v1708 = vpop.permute.xlu0 %1707
      %1709 = vrot.lane.b32.xlu0 %v1678, 30
      %v1710 = vpop.permute.xlu0 %1709
      %1711 = vrot.lane.b32.xlu0 %v1687, 30
      %v1712 = vpop.permute.xlu0 %1711
      %1713 = vrot.lane.b32.xlu0 %v1696, 30
      %v1714 = vpop.permute.xlu0 %1713
      %vm1724 = vcmask 269552
      %1725 = vst.msk [vmem:[#allocation2] sm:$0xff] %vm1724, %v1698
      %1726 = vst.msk [vmem:[#allocation2 + $0x8] sm:$0xff] %vm1724, %v1700
      %1727 = vst.msk [vmem:[#allocation2 + $0x10] sm:$0xff] %vm1724, %v1702
      %1728 = vst.msk [vmem:[#allocation2 + $0x18] sm:$0xff] %vm1724, %v1704
      %1729 = vst.msk [vmem:[#allocation2 + $0x20] sm:$0xff] %vm1724, %v1706
      %1730 = vst.msk [vmem:[#allocation2 + $0x28] sm:$0xff] %vm1724, %v1708
      %1731 = vst.msk [vmem:[#allocation2 + $0x30] sm:$0xff] %vm1724, %v1710
      %1732 = vst.msk [vmem:[#allocation2 + $0x38] sm:$0xff] %vm1724, %v1712
      %1733 = vst.msk [vmem:[#allocation2 + $0x40] sm:$0xff] %vm1724, %v1714
      %v1734 = vld [vmem:[%s165 + $0x10] sm:$0x8]
      %v1735 = vld [vmem:[%s165 + $0x14] sm:$0xf]
      %v1736 = vld [vmem:[%s165 + $0x18] sm:$0xf]
      %v1737 = vld [vmem:[%s165 + $0x1c] sm:$0xf]
      %v1738 = vld [vmem:[%s165 + $0x20] sm:$0xf]
      %v1739 = vld [vmem:[%s165 + $0x24] sm:$0xf]
      %v1740 = vld [vmem:[%s165 + $0x28] sm:$0xf]
      %v1741 = vld [vmem:[%s165 + $0x2c] sm:$0xf]
      %v1742 = vld [vmem:[%s165 + $0x30] sm:$0xf]
      %v1743 = vld [vmem:[%s165 + $0x34] sm:$0xf]
      %v1744 = vld [vmem:[%s165 + $0x38] sm:$0xf]
      %v1745 = vld [vmem:[%s165 + $0x3c] sm:$0xf]
      %v1746 = vld [vmem:[%s165 + $0x40] sm:$0xf]
      %v1747 = vld [vmem:[%s165 + $0x44] sm:$0xf]
      %v1748 = vld [vmem:[%s165 + $0x48] sm:$0xf]
      %v1749 = vld [vmem:[%s165 + $0x4c] sm:$0xf]
      %v1750 = vld [vmem:[%s165 + $0x50] sm:$0xf]
      %v1751 = vld [vmem:[%s165 + $0x54] sm:$0xf]
      %v1752 = vld [vmem:[%s165 + $0x58] sm:$0x7]
      %v1772 = vunpack.c.l.b16 %v1734
      %v1773 = vunpack.c.l.b16 %v1735
      %v1774 = vunpack.c.l.b16 %v1736
      %v1775 = vunpack.c.l.b16 %v1737
      %v1776 = vunpack.c.l.b16 %v1738
      %v1777 = vunpack.c.l.b16 %v1739
      %v1778 = vunpack.c.l.b16 %v1740
      %v1779 = vunpack.c.l.b16 %v1741
      %v1780 = vunpack.c.l.b16 %v1742
      %v1781 = vunpack.c.l.b16 %v1743
      %v1782 = vunpack.c.l.b16 %v1744
      %v1783 = vunpack.c.l.b16 %v1745
      %v1784 = vunpack.c.l.b16 %v1746
      %v1785 = vunpack.c.l.b16 %v1747
      %v1786 = vunpack.c.l.b16 %v1748
      %v1787 = vunpack.c.l.b16 %v1749
      %v1788 = vunpack.c.l.b16 %v1750
      %v1789 = vunpack.c.l.b16 %v1751
      %v1790 = vunpack.c.l.b16 %v1752
      %v1791 = vpack.c.b16 %v1773, %v1772
      %v1792 = vpack.c.b16 %v1775, %v1774
      %v1793 = vpack.c.b16 %v1777, %v1776
      %v1794 = vpack.c.b16 %v1779, %v1778
      %v1795 = vpack.c.b16 %v1781, %v1780
      %v1796 = vpack.c.b16 %v1783, %v1782
      %v1797 = vpack.c.b16 %v1785, %v1784
      %v1798 = vpack.c.b16 %v1787, %v1786
      %v1799 = vpack.c.b16 %v1789, %v1788
      %v1800 = vpack.c.b16 %v1790, %v1790
      %v1801 = vrot.slane %v1791, 3
      %v1802 = vrot.slane %v1792, 3
      %v1803 = vsel %vm626, %v1801, %v1802
      %v1804 = vrot.slane %v1793, 3
      %v1805 = vsel %vm626, %v1802, %v1804
      %v1806 = vrot.slane %v1794, 3
      %v1807 = vsel %vm626, %v1804, %v1806
      %v1808 = vrot.slane %v1795, 3
      %v1809 = vsel %vm626, %v1806, %v1808
      %v1810 = vrot.slane %v1796, 3
      %v1811 = vsel %vm626, %v1808, %v1810
      %v1812 = vrot.slane %v1797, 3
      %v1813 = vsel %vm626, %v1810, %v1812
      %v1814 = vrot.slane %v1798, 3
      %v1815 = vsel %vm626, %v1812, %v1814
      %v1816 = vrot.slane %v1799, 3
      %v1817 = vsel %vm626, %v1814, %v1816
      %v1818 = vrot.slane %v1800, 3
      %v1819 = vsel %vm626, %v1816, %v1818
      %1820 = vrot.lane.b32.xlu0 %v1803, 33
      %v1821 = vpop.permute.xlu0 %1820
      %1822 = vrot.lane.b32.xlu0 %v1805, 33
      %v1823 = vpop.permute.xlu0 %1822
      %1824 = vrot.lane.b32.xlu0 %v1807, 33
      %v1825 = vpop.permute.xlu0 %1824
      %1826 = vrot.lane.b32.xlu0 %v1809, 33
      %v1827 = vpop.permute.xlu0 %1826
      %1828 = vrot.lane.b32.xlu0 %v1811, 33
      %v1829 = vpop.permute.xlu0 %1828
      %1830 = vrot.lane.b32.xlu0 %v1813, 33
      %v1831 = vpop.permute.xlu0 %1830
      %1832 = vrot.lane.b32.xlu0 %v1815, 33
      %v1833 = vpop.permute.xlu0 %1832
      %1834 = vrot.lane.b32.xlu0 %v1817, 33
      %v1835 = vpop.permute.xlu0 %1834
      %1836 = vrot.lane.b32.xlu0 %v1819, 33
      %v1837 = vpop.permute.xlu0 %1836
      %vm1847 = vcmask 294152
      %1848 = vst.msk [vmem:[#allocation2] sm:$0xff] %vm1847, %v1821
      %1849 = vst.msk [vmem:[#allocation2 + $0x8] sm:$0xff] %vm1847, %v1823
      %1850 = vst.msk [vmem:[#allocation2 + $0x10] sm:$0xff] %vm1847, %v1825
      %1851 = vst.msk [vmem:[#allocation2 + $0x18] sm:$0xff] %vm1847, %v1827
      %1852 = vst.msk [vmem:[#allocation2 + $0x20] sm:$0xff] %vm1847, %v1829
      %1853 = vst.msk [vmem:[#allocation2 + $0x28] sm:$0xff] %vm1847, %v1831
      %1854 = vst.msk [vmem:[#allocation2 + $0x30] sm:$0xff] %vm1847, %v1833
      %1855 = vst.msk [vmem:[#allocation2 + $0x38] sm:$0xff] %vm1847, %v1835
      %1856 = vst.msk [vmem:[#allocation2 + $0x40] sm:$0xff] %vm1847, %v1837
      %v1857 = vld [vmem:[%s165 + $0x14] sm:$0xe]
      %v1858 = vld [vmem:[%s165 + $0x18] sm:$0xf]
      %v1859 = vld [vmem:[%s165 + $0x1c] sm:$0xf]
      %v1860 = vld [vmem:[%s165 + $0x20] sm:$0xf]
      %v1861 = vld [vmem:[%s165 + $0x24] sm:$0xf]
      %v1862 = vld [vmem:[%s165 + $0x28] sm:$0xf]
      %v1863 = vld [vmem:[%s165 + $0x2c] sm:$0xf]
      %v1864 = vld [vmem:[%s165 + $0x30] sm:$0xf]
      %v1865 = vld [vmem:[%s165 + $0x34] sm:$0xf]
      %v1866 = vld [vmem:[%s165 + $0x38] sm:$0xf]
      %v1867 = vld [vmem:[%s165 + $0x3c] sm:$0xf]
      %v1868 = vld [vmem:[%s165 + $0x40] sm:$0xf]
      %v1869 = vld [vmem:[%s165 + $0x44] sm:$0xf]
      %v1870 = vld [vmem:[%s165 + $0x48] sm:$0xf]
      %v1871 = vld [vmem:[%s165 + $0x4c] sm:$0xf]
      %v1872 = vld [vmem:[%s165 + $0x50] sm:$0xf]
      %v1873 = vld [vmem:[%s165 + $0x54] sm:$0xf]
      %v1874 = vld [vmem:[%s165 + $0x58] sm:$0xf]
      %v1875 = vld [vmem:[%s165 + $0x5c] sm:$0x1]
      %v1895 = vunpack.c.l.b16 %v1857
      %v1896 = vunpack.c.l.b16 %v1858
      %v1897 = vunpack.c.l.b16 %v1859
      %v1898 = vunpack.c.l.b16 %v1860
      %v1899 = vunpack.c.l.b16 %v1861
      %v1900 = vunpack.c.l.b16 %v1862
      %v1901 = vunpack.c.l.b16 %v1863
      %v1902 = vunpack.c.l.b16 %v1864
      %v1903 = vunpack.c.l.b16 %v1865
      %v1904 = vunpack.c.l.b16 %v1866
      %v1905 = vunpack.c.l.b16 %v1867
      %v1906 = vunpack.c.l.b16 %v1868
      %v1907 = vunpack.c.l.b16 %v1869
      %v1908 = vunpack.c.l.b16 %v1870
      %v1909 = vunpack.c.l.b16 %v1871
      %v1910 = vunpack.c.l.b16 %v1872
      %v1911 = vunpack.c.l.b16 %v1873
      %v1912 = vunpack.c.l.b16 %v1874
      %v1913 = vunpack.c.l.b16 %v1875
      %v1914 = vpack.c.b16 %v1896, %v1895
      %v1915 = vpack.c.b16 %v1898, %v1897
      %v1916 = vpack.c.b16 %v1900, %v1899
      %v1917 = vpack.c.b16 %v1902, %v1901
      %v1918 = vpack.c.b16 %v1904, %v1903
      %v1919 = vpack.c.b16 %v1906, %v1905
      %v1920 = vpack.c.b16 %v1908, %v1907
      %v1921 = vpack.c.b16 %v1910, %v1909
      %v1922 = vpack.c.b16 %v1912, %v1911
      %v1923 = vpack.c.b16 %v1913, %v1913
      %v1924 = vrot.slane %v1914, 1
      %v1925 = vrot.slane %v1915, 1
      %v1926 = vsel %vm502, %v1924, %v1925
      %v1927 = vrot.slane %v1916, 1
      %v1928 = vsel %vm502, %v1925, %v1927
      %v1929 = vrot.slane %v1917, 1
      %v1930 = vsel %vm502, %v1927, %v1929
      %v1931 = vrot.slane %v1918, 1
      %v1932 = vsel %vm502, %v1929, %v1931
      %v1933 = vrot.slane %v1919, 1
      %v1934 = vsel %vm502, %v1931, %v1933
      %v1935 = vrot.slane %v1920, 1
      %v1936 = vsel %vm502, %v1933, %v1935
      %v1937 = vrot.slane %v1921, 1
      %v1938 = vsel %vm502, %v1935, %v1937
      %v1939 = vrot.slane %v1922, 1
      %v1940 = vsel %vm502, %v1937, %v1939
      %v1941 = vrot.slane %v1923, 1
      %v1942 = vsel %vm502, %v1939, %v1941
      %1943 = vrot.lane.b32.xlu0 %v1926, 36
      %v1944 = vpop.permute.xlu0 %1943
      %1945 = vrot.lane.b32.xlu0 %v1928, 36
      %v1946 = vpop.permute.xlu0 %1945
      %1947 = vrot.lane.b32.xlu0 %v1930, 36
      %v1948 = vpop.permute.xlu0 %1947
      %1949 = vrot.lane.b32.xlu0 %v1932, 36
      %v1950 = vpop.permute.xlu0 %1949
      %1951 = vrot.lane.b32.xlu0 %v1934, 36
      %v1952 = vpop.permute.xlu0 %1951
      %1953 = vrot.lane.b32.xlu0 %v1936, 36
      %v1954 = vpop.permute.xlu0 %1953
      %1955 = vrot.lane.b32.xlu0 %v1938, 36
      %v1956 = vpop.permute.xlu0 %1955
      %1957 = vrot.lane.b32.xlu0 %v1940, 36
      %v1958 = vpop.permute.xlu0 %1957
      %1959 = vrot.lane.b32.xlu0 %v1942, 36
      %v1960 = vpop.permute.xlu0 %1959
      %vm1970 = vcmask 318752
      %1971 = vst.msk [vmem:[#allocation2] sm:$0xff] %vm1970, %v1944
      %1972 = vst.msk [vmem:[#allocation2 + $0x8] sm:$0xff] %vm1970, %v1946
      %1973 = vst.msk [vmem:[#allocation2 + $0x10] sm:$0xff] %vm1970, %v1948
      %1974 = vst.msk [vmem:[#allocation2 + $0x18] sm:$0xff] %vm1970, %v1950
      %1975 = vst.msk [vmem:[#allocation2 + $0x20] sm:$0xff] %vm1970, %v1952
      %1976 = vst.msk [vmem:[#allocation2 + $0x28] sm:$0xff] %vm1970, %v1954
      %1977 = vst.msk [vmem:[#allocation2 + $0x30] sm:$0xff] %vm1970, %v1956
      %1978 = vst.msk [vmem:[#allocation2 + $0x38] sm:$0xff] %vm1970, %v1958
      %1979 = vst.msk [vmem:[#allocation2 + $0x40] sm:$0xff] %vm1970, %v1960
      %v1980 = vld [vmem:[%s165 + $0x14] sm:$0xe]
      %v1981 = vld [vmem:[%s165 + $0x18] sm:$0xf]
      %v1982 = vld [vmem:[%s165 + $0x1c] sm:$0xf]
      %v1983 = vld [vmem:[%s165 + $0x20] sm:$0xf]
      %v1984 = vld [vmem:[%s165 + $0x24] sm:$0xf]
      %v1985 = vld [vmem:[%s165 + $0x28] sm:$0xf]
      %v1986 = vld [vmem:[%s165 + $0x2c] sm:$0xf]
      %v1987 = vld [vmem:[%s165 + $0x30] sm:$0xf]
      %v1988 = vld [vmem:[%s165 + $0x34] sm:$0xf]
      %v1989 = vld [vmem:[%s165 + $0x38] sm:$0xf]
      %v1990 = vld [vmem:[%s165 + $0x3c] sm:$0xf]
      %v1991 = vld [vmem:[%s165 + $0x40] sm:$0xf]
      %v1992 = vld [vmem:[%s165 + $0x44] sm:$0xf]
      %v1993 = vld [vmem:[%s165 + $0x48] sm:$0xf]
      %v1994 = vld [vmem:[%s165 + $0x4c] sm:$0xf]
      %v1995 = vld [vmem:[%s165 + $0x50] sm:$0xf]
      %v1996 = vld [vmem:[%s165 + $0x54] sm:$0xf]
      %v1997 = vld [vmem:[%s165 + $0x58] sm:$0xf]
      %v1998 = vld [vmem:[%s165 + $0x5c] sm:$0x3]
      %v2018 = vunpack.c.l.b16 %v1980
      %v2019 = vunpack.c.l.b16 %v1981
      %v2020 = vunpack.c.l.b16 %v1982
      %v2021 = vunpack.c.l.b16 %v1983
      %v2022 = vunpack.c.l.b16 %v1984
      %v2023 = vunpack.c.l.b16 %v1985
      %v2024 = vunpack.c.l.b16 %v1986
      %v2025 = vunpack.c.l.b16 %v1987
      %v2026 = vunpack.c.l.b16 %v1988
      %v2027 = vunpack.c.l.b16 %v1989
      %v2028 = vunpack.c.l.b16 %v1990
      %v2029 = vunpack.c.l.b16 %v1991
      %v2030 = vunpack.c.l.b16 %v1992
      %v2031 = vunpack.c.l.b16 %v1993
      %v2032 = vunpack.c.l.b16 %v1994
      %v2033 = vunpack.c.l.b16 %v1995
      %v2034 = vunpack.c.l.b16 %v1996
      %v2035 = vunpack.c.l.b16 %v1997
      %v2036 = vunpack.c.l.b16 %v1998
      %v2037 = vpack.c.b16 %v2019, %v2018
      %v2038 = vpack.c.b16 %v2021, %v2020
      %v2039 = vpack.c.b16 %v2023, %v2022
      %v2040 = vpack.c.b16 %v2025, %v2024
      %v2041 = vpack.c.b16 %v2027, %v2026
      %v2042 = vpack.c.b16 %v2029, %v2028
      %v2043 = vpack.c.b16 %v2031, %v2030
      %v2044 = vpack.c.b16 %v2033, %v2032
      %v2045 = vpack.c.b16 %v2035, %v2034
      %v2046 = vpack.c.b16 %v2036, %v2036
      %vm2047 = vsmask.f32 6400
      %v2049 = vshrl.u32 %v2037, 16
      %v2051 = vrot.slane %v2049, 1
      %v2052 = vshll.u32 %v2037, 16
      %v2054 = vrot.slane %v2052, 2
      %v2055 = vor.u32 %v2051, %v2054
      %v2057 = vshrl.u32 %v2038, 16
      %v2059 = vrot.slane %v2057, 1
      %v2060 = vshll.u32 %v2038, 16
      %v2062 = vrot.slane %v2060, 2
      %v2063 = vor.u32 %v2059, %v2062
      %v2064 = vsel %vm2047, %v2055, %v2063
      %v2066 = vshrl.u32 %v2039, 16
      %v2068 = vrot.slane %v2066, 1
      %v2069 = vshll.u32 %v2039, 16
      %v2071 = vrot.slane %v2069, 2
      %v2072 = vor.u32 %v2068, %v2071
      %v2073 = vsel %vm2047, %v2063, %v2072
      %v2075 = vshrl.u32 %v2040, 16
      %v2077 = vrot.slane %v2075, 1
      %v2078 = vshll.u32 %v2040, 16
      %v2080 = vrot.slane %v2078, 2
      %v2081 = vor.u32 %v2077, %v2080
      %v2082 = vsel %vm2047, %v2072, %v2081
      %v2084 = vshrl.u32 %v2041, 16
      %v2086 = vrot.slane %v2084, 1
      %v2087 = vshll.u32 %v2041, 16
      %v2089 = vrot.slane %v2087, 2
      %v2090 = vor.u32 %v2086, %v2089
      %v2091 = vsel %vm2047, %v2081, %v2090
      %v2093 = vshrl.u32 %v2042, 16
      %v2095 = vrot.slane %v2093, 1
      %v2096 = vshll.u32 %v2042, 16
      %v2098 = vrot.slane %v2096, 2
      %v2099 = vor.u32 %v2095, %v2098
      %v2100 = vsel %vm2047, %v2090, %v2099
      %v2102 = vshrl.u32 %v2043, 16
      %v2104 = vrot.slane %v2102, 1
      %v2105 = vshll.u32 %v2043, 16
      %v2107 = vrot.slane %v2105, 2
      %v2108 = vor.u32 %v2104, %v2107
      %v2109 = vsel %vm2047, %v2099, %v2108
      %v2111 = vshrl.u32 %v2044, 16
      %v2113 = vrot.slane %v2111, 1
      %v2114 = vshll.u32 %v2044, 16
      %v2116 = vrot.slane %v2114, 2
      %v2117 = vor.u32 %v2113, %v2116
      %v2118 = vsel %vm2047, %v2108, %v2117
      %v2120 = vshrl.u32 %v2045, 16
      %v2122 = vrot.slane %v2120, 1
      %v2123 = vshll.u32 %v2045, 16
      %v2125 = vrot.slane %v2123, 2
      %v2126 = vor.u32 %v2122, %v2125
      %v2127 = vsel %vm2047, %v2117, %v2126
      %v2129 = vshrl.u32 %v2046, 16
      %v2131 = vrot.slane %v2129, 1
      %v2132 = vshll.u32 %v2046, 16
      %v2134 = vrot.slane %v2132, 2
      %v2135 = vor.u32 %v2131, %v2134
      %v2136 = vsel %vm2047, %v2126, %v2135
      %2137 = vrot.lane.b32.xlu0 %v2064, 39
      %v2138 = vpop.permute.xlu0 %2137
      %2139 = vrot.lane.b32.xlu0 %v2073, 39
      %v2140 = vpop.permute.xlu0 %2139
      %2141 = vrot.lane.b32.xlu0 %v2082, 39
      %v2142 = vpop.permute.xlu0 %2141
      %2143 = vrot.lane.b32.xlu0 %v2091, 39
      %v2144 = vpop.permute.xlu0 %2143
      %2145 = vrot.lane.b32.xlu0 %v2100, 39
      %v2146 = vpop.permute.xlu0 %2145
      %2147 = vrot.lane.b32.xlu0 %v2109, 39
      %v2148 = vpop.permute.xlu0 %2147
      %2149 = vrot.lane.b32.xlu0 %v2118, 39
      %v2150 = vpop.permute.xlu0 %2149
      %2151 = vrot.lane.b32.xlu0 %v2127, 39
      %v2152 = vpop.permute.xlu0 %2151
      %2153 = vrot.lane.b32.xlu0 %v2136, 39
      %v2154 = vpop.permute.xlu0 %2153
      %vm2164 = vcmask 343352
      %2165 = vst.msk [vmem:[#allocation2] sm:$0xff] %vm2164, %v2138
      %2166 = vst.msk [vmem:[#allocation2 + $0x8] sm:$0xff] %vm2164, %v2140
      %2167 = vst.msk [vmem:[#allocation2 + $0x10] sm:$0xff] %vm2164, %v2142
      %2168 = vst.msk [vmem:[#allocation2 + $0x18] sm:$0xff] %vm2164, %v2144
      %2169 = vst.msk [vmem:[#allocation2 + $0x20] sm:$0xff] %vm2164, %v2146
      %2170 = vst.msk [vmem:[#allocation2 + $0x28] sm:$0xff] %vm2164, %v2148
      %2171 = vst.msk [vmem:[#allocation2 + $0x30] sm:$0xff] %vm2164, %v2150
      %2172 = vst.msk [vmem:[#allocation2 + $0x38] sm:$0xff] %vm2164, %v2152
      %2173 = vst.msk [vmem:[#allocation2 + $0x40] sm:$0xff] %vm2164, %v2154
      %v2174 = vld [vmem:[%s165 + $0x14] sm:$0xc]
      %v2175 = vld [vmem:[%s165 + $0x18] sm:$0xf]
      %v2176 = vld [vmem:[%s165 + $0x1c] sm:$0xf]
      %v2177 = vld [vmem:[%s165 + $0x20] sm:$0xf]
      %v2178 = vld [vmem:[%s165 + $0x24] sm:$0xf]
      %v2179 = vld [vmem:[%s165 + $0x28] sm:$0xf]
      %v2180 = vld [vmem:[%s165 + $0x2c] sm:$0xf]
      %v2181 = vld [vmem:[%s165 + $0x30] sm:$0xf]
      %v2182 = vld [vmem:[%s165 + $0x34] sm:$0xf]
      %v2183 = vld [vmem:[%s165 + $0x38] sm:$0xf]
      %v2184 = vld [vmem:[%s165 + $0x3c] sm:$0xf]
      %v2185 = vld [vmem:[%s165 + $0x40] sm:$0xf]
      %v2186 = vld [vmem:[%s165 + $0x44] sm:$0xf]
      %v2187 = vld [vmem:[%s165 + $0x48] sm:$0xf]
      %v2188 = vld [vmem:[%s165 + $0x4c] sm:$0xf]
      %v2189 = vld [vmem:[%s165 + $0x50] sm:$0xf]
      %v2190 = vld [vmem:[%s165 + $0x54] sm:$0xf]
      %v2191 = vld [vmem:[%s165 + $0x58] sm:$0xf]
      %v2192 = vld [vmem:[%s165 + $0x5c] sm:$0x3]
      %v2212 = vunpack.c.l.b16 %v2174
      %v2213 = vunpack.c.l.b16 %v2175
      %v2214 = vunpack.c.l.b16 %v2176
      %v2215 = vunpack.c.l.b16 %v2177
      %v2216 = vunpack.c.l.b16 %v2178
      %v2217 = vunpack.c.l.b16 %v2179
      %v2218 = vunpack.c.l.b16 %v2180
      %v2219 = vunpack.c.l.b16 %v2181
      %v2220 = vunpack.c.l.b16 %v2182
      %v2221 = vunpack.c.l.b16 %v2183
      %v2222 = vunpack.c.l.b16 %v2184
      %v2223 = vunpack.c.l.b16 %v2185
      %v2224 = vunpack.c.l.b16 %v2186
      %v2225 = vunpack.c.l.b16 %v2187
      %v2226 = vunpack.c.l.b16 %v2188
      %v2227 = vunpack.c.l.b16 %v2189
      %v2228 = vunpack.c.l.b16 %v2190
      %v2229 = vunpack.c.l.b16 %v2191
      %v2230 = vunpack.c.l.b16 %v2192
      %v2231 = vpack.c.b16 %v2213, %v2212
      %v2232 = vpack.c.b16 %v2215, %v2214
      %v2233 = vpack.c.b16 %v2217, %v2216
      %v2234 = vpack.c.b16 %v2219, %v2218
      %v2235 = vpack.c.b16 %v2221, %v2220
      %v2236 = vpack.c.b16 %v2223, %v2222
      %v2237 = vpack.c.b16 %v2225, %v2224
      %v2238 = vpack.c.b16 %v2227, %v2226
      %v2239 = vpack.c.b16 %v2229, %v2228
      %v2240 = vpack.c.b16 %v2230, %v2230
      %v2241 = vrot.slane %v2231, 2
      %v2242 = vrot.slane %v2232, 2
      %v2243 = vsel %vm1044, %v2241, %v2242
      %v2244 = vrot.slane %v2233, 2
      %v2245 = vsel %vm1044, %v2242, %v2244
      %v2246 = vrot.slane %v2234, 2
      %v2247 = vsel %vm1044, %v2244, %v2246
      %v2248 = vrot.slane %v2235, 2
      %v2249 = vsel %vm1044, %v2246, %v2248
      %v2250 = vrot.slane %v2236, 2
      %v2251 = vsel %vm1044, %v2248, %v2250
      %v2252 = vrot.slane %v2237, 2
      %v2253 = vsel %vm1044, %v2250, %v2252
      %v2254 = vrot.slane %v2238, 2
      %v2255 = vsel %vm1044, %v2252, %v2254
      %v2256 = vrot.slane %v2239, 2
      %v2257 = vsel %vm1044, %v2254, %v2256
      %v2258 = vrot.slane %v2240, 2
      %v2259 = vsel %vm1044, %v2256, %v2258
      %2260 = vrot.lane.b32.xlu0 %v2243, 42
      %v2261 = vpop.permute.xlu0 %2260
      %2262 = vrot.lane.b32.xlu0 %v2245, 42
      %v2263 = vpop.permute.xlu0 %2262
      %2264 = vrot.lane.b32.xlu0 %v2247, 42
      %v2265 = vpop.permute.xlu0 %2264
      %2266 = vrot.lane.b32.xlu0 %v2249, 42
      %v2267 = vpop.permute.xlu0 %2266
      %2268 = vrot.lane.b32.xlu0 %v2251, 42
      %v2269 = vpop.permute.xlu0 %2268
      %2270 = vrot.lane.b32.xlu0 %v2253, 42
      %v2271 = vpop.permute.xlu0 %2270
      %2272 = vrot.lane.b32.xlu0 %v2255, 42
      %v2273 = vpop.permute.xlu0 %2272
      %2274 = vrot.lane.b32.xlu0 %v2257, 42
      %v2275 = vpop.permute.xlu0 %2274
      %2276 = vrot.lane.b32.xlu0 %v2259, 42
      %v2277 = vpop.permute.xlu0 %2276
      %vm2287 = vcmask 367952
      %2288 = vst.msk [vmem:[#allocation2] sm:$0xff] %vm2287, %v2261
      %2289 = vst.msk [vmem:[#allocation2 + $0x8] sm:$0xff] %vm2287, %v2263
      %2290 = vst.msk [vmem:[#allocation2 + $0x10] sm:$0xff] %vm2287, %v2265
      %2291 = vst.msk [vmem:[#allocation2 + $0x18] sm:$0xff] %vm2287, %v2267
      %2292 = vst.msk [vmem:[#allocation2 + $0x20] sm:$0xff] %vm2287, %v2269
      %2293 = vst.msk [vmem:[#allocation2 + $0x28] sm:$0xff] %vm2287, %v2271
      %2294 = vst.msk [vmem:[#allocation2 + $0x30] sm:$0xff] %vm2287, %v2273
      %2295 = vst.msk [vmem:[#allocation2 + $0x38] sm:$0xff] %vm2287, %v2275
      %2296 = vst.msk [vmem:[#allocation2 + $0x40] sm:$0xff] %vm2287, %v2277
      %v2297 = vld [vmem:[%s165 + $0x18] sm:$0xf]
      %v2298 = vld [vmem:[%s165 + $0x1c] sm:$0xf]
      %v2299 = vld [vmem:[%s165 + $0x20] sm:$0xf]
      %v2300 = vld [vmem:[%s165 + $0x24] sm:$0xf]
      %v2301 = vld [vmem:[%s165 + $0x28] sm:$0xf]
      %v2302 = vld [vmem:[%s165 + $0x2c] sm:$0xf]
      %v2303 = vld [vmem:[%s165 + $0x30] sm:$0xf]
      %v2304 = vld [vmem:[%s165 + $0x34] sm:$0xf]
      %v2305 = vld [vmem:[%s165 + $0x38] sm:$0xf]
      %v2306 = vld [vmem:[%s165 + $0x3c] sm:$0xf]
      %v2307 = vld [vmem:[%s165 + $0x40] sm:$0xf]
      %v2308 = vld [vmem:[%s165 + $0x44] sm:$0xf]
      %v2309 = vld [vmem:[%s165 + $0x48] sm:$0xf]
      %v2310 = vld [vmem:[%s165 + $0x4c] sm:$0xf]
      %v2311 = vld [vmem:[%s165 + $0x50] sm:$0xf]
      %v2312 = vld [vmem:[%s165 + $0x54] sm:$0xf]
      %v2313 = vld [vmem:[%s165 + $0x58] sm:$0xf]
      %v2314 = vld [vmem:[%s165 + $0x5c] sm:$0xf]
      %v2333 = vunpack.c.l.b16 %v2297
      %v2334 = vunpack.c.l.b16 %v2298
      %v2335 = vunpack.c.l.b16 %v2299
      %v2336 = vunpack.c.l.b16 %v2300
      %v2337 = vunpack.c.l.b16 %v2301
      %v2338 = vunpack.c.l.b16 %v2302
      %v2339 = vunpack.c.l.b16 %v2303
      %v2340 = vunpack.c.l.b16 %v2304
      %v2341 = vunpack.c.l.b16 %v2305
      %v2342 = vunpack.c.l.b16 %v2306
      %v2343 = vunpack.c.l.b16 %v2307
      %v2344 = vunpack.c.l.b16 %v2308
      %v2345 = vunpack.c.l.b16 %v2309
      %v2346 = vunpack.c.l.b16 %v2310
      %v2347 = vunpack.c.l.b16 %v2311
      %v2348 = vunpack.c.l.b16 %v2312
      %v2349 = vunpack.c.l.b16 %v2313
      %v2350 = vunpack.c.l.b16 %v2314
      %v2351 = vpack.c.b16 %v2334, %v2333
      %v2352 = vpack.c.b16 %v2336, %v2335
      %v2353 = vpack.c.b16 %v2338, %v2337
      %v2354 = vpack.c.b16 %v2340, %v2339
      %v2355 = vpack.c.b16 %v2342, %v2341
      %v2356 = vpack.c.b16 %v2344, %v2343
      %v2357 = vpack.c.b16 %v2346, %v2345
      %v2358 = vpack.c.b16 %v2348, %v2347
      %v2359 = vpack.c.b16 %v2350, %v2349
      %2360 = vrot.lane.b32.xlu0 %v2351, 45
      %v2361 = vpop.permute.xlu0 %2360
      %2362 = vrot.lane.b32.xlu0 %v2352, 45
      %v2363 = vpop.permute.xlu0 %2362
      %2364 = vrot.lane.b32.xlu0 %v2353, 45
      %v2365 = vpop.permute.xlu0 %2364
      %2366 = vrot.lane.b32.xlu0 %v2354, 45
      %v2367 = vpop.permute.xlu0 %2366
      %2368 = vrot.lane.b32.xlu0 %v2355, 45
      %v2369 = vpop.permute.xlu0 %2368
      %2370 = vrot.lane.b32.xlu0 %v2356, 45
      %v2371 = vpop.permute.xlu0 %2370
      %2372 = vrot.lane.b32.xlu0 %v2357, 45
      %v2373 = vpop.permute.xlu0 %2372
      %2374 = vrot.lane.b32.xlu0 %v2358, 45
      %v2375 = vpop.permute.xlu0 %2374
      %2376 = vrot.lane.b32.xlu0 %v2359, 45
      %v2377 = vpop.permute.xlu0 %2376
      %vm2387 = vcmask 392552
      %2388 = vst.msk [vmem:[#allocation2] sm:$0xff] %vm2387, %v2361
      %2389 = vst.msk [vmem:[#allocation2 + $0x8] sm:$0xff] %vm2387, %v2363
      %2390 = vst.msk [vmem:[#allocation2 + $0x10] sm:$0xff] %vm2387, %v2365
      %2391 = vst.msk [vmem:[#allocation2 + $0x18] sm:$0xff] %vm2387, %v2367
      %2392 = vst.msk [vmem:[#allocation2 + $0x20] sm:$0xff] %vm2387, %v2369
      %2393 = vst.msk [vmem:[#allocation2 + $0x28] sm:$0xff] %vm2387, %v2371
      %2394 = vst.msk [vmem:[#allocation2 + $0x30] sm:$0xff] %vm2387, %v2373
      %2395 = vst.msk [vmem:[#allocation2 + $0x38] sm:$0xff] %vm2387, %v2375
      %2396 = vst.msk [vmem:[#allocation2 + $0x40] sm:$0xff] %vm2387, %v2377
      %v2397 = vld [vmem:[%s165 + $0x18] sm:$0xf]
      %v2398 = vld [vmem:[%s165 + $0x1c] sm:$0xf]
      %v2399 = vld [vmem:[%s165 + $0x20] sm:$0xf]
      %v2400 = vld [vmem:[%s165 + $0x24] sm:$0xf]
      %v2401 = vld [vmem:[%s165 + $0x28] sm:$0xf]
      %v2402 = vld [vmem:[%s165 + $0x2c] sm:$0xf]
      %v2403 = vld [vmem:[%s165 + $0x30] sm:$0xf]
      %v2404 = vld [vmem:[%s165 + $0x34] sm:$0xf]
      %v2405 = vld [vmem:[%s165 + $0x38] sm:$0xf]
      %v2406 = vld [vmem:[%s165 + $0x3c] sm:$0xf]
      %v2407 = vld [vmem:[%s165 + $0x40] sm:$0xf]
      %v2408 = vld [vmem:[%s165 + $0x44] sm:$0xf]
      %v2409 = vld [vmem:[%s165 + $0x48] sm:$0xf]
      %v2410 = vld [vmem:[%s165 + $0x4c] sm:$0xf]
      %v2411 = vld [vmem:[%s165 + $0x50] sm:$0xf]
      %v2412 = vld [vmem:[%s165 + $0x54] sm:$0xf]
      %v2413 = vld [vmem:[%s165 + $0x58] sm:$0xf]
      %v2414 = vld [vmem:[%s165 + $0x5c] sm:$0xf]
      %v2415 = vld [vmem:[%s165 + $0x60] sm:$0x1]
      %v2435 = vunpack.c.l.b16 %v2397
      %v2436 = vunpack.c.l.b16 %v2398
      %v2437 = vunpack.c.l.b16 %v2399
      %v2438 = vunpack.c.l.b16 %v2400
      %v2439 = vunpack.c.l.b16 %v2401
      %v2440 = vunpack.c.l.b16 %v2402
      %v2441 = vunpack.c.l.b16 %v2403
      %v2442 = vunpack.c.l.b16 %v2404
      %v2443 = vunpack.c.l.b16 %v2405
      %v2444 = vunpack.c.l.b16 %v2406
      %v2445 = vunpack.c.l.b16 %v2407
      %v2446 = vunpack.c.l.b16 %v2408
      %v2447 = vunpack.c.l.b16 %v2409
      %v2448 = vunpack.c.l.b16 %v2410
      %v2449 = vunpack.c.l.b16 %v2411
      %v2450 = vunpack.c.l.b16 %v2412
      %v2451 = vunpack.c.l.b16 %v2413
      %v2452 = vunpack.c.l.b16 %v2414
      %v2453 = vunpack.c.l.b16 %v2415
      %v2454 = vpack.c.b16 %v2436, %v2435
      %v2455 = vpack.c.b16 %v2438, %v2437
      %v2456 = vpack.c.b16 %v2440, %v2439
      %v2457 = vpack.c.b16 %v2442, %v2441
      %v2458 = vpack.c.b16 %v2444, %v2443
      %v2459 = vpack.c.b16 %v2446, %v2445
      %v2460 = vpack.c.b16 %v2448, %v2447
      %v2461 = vpack.c.b16 %v2450, %v2449
      %v2462 = vpack.c.b16 %v2452, %v2451
      %v2463 = vpack.c.b16 %v2453, %v2453
      %v2465 = vshrl.u32 %v2454, 16
      %v2467 = vshll.u32 %v2454, 16
      %v2469 = vrot.slane %v2467, 1
      %v2470 = vor.u32 %v2465, %v2469
      %v2472 = vshll.u32 %v2455, 16
      %v2474 = vrot.slane %v2472, 1
      %v2475 = vsel %vm321, %v2470, %v2474
      %v2476 = vshrl.u32 %v2455, 16
      %v2478 = vor.u32 %v2476, %v2474
      %v2480 = vshll.u32 %v2456, 16
      %v2482 = vrot.slane %v2480, 1
      %v2483 = vsel %vm321, %v2478, %v2482
      %v2484 = vshrl.u32 %v2456, 16
      %v2486 = vor.u32 %v2484, %v2482
      %v2488 = vshll.u32 %v2457, 16
      %v2490 = vrot.slane %v2488, 1
      %v2491 = vsel %vm321, %v2486, %v2490
      %v2492 = vshrl.u32 %v2457, 16
      %v2494 = vor.u32 %v2492, %v2490
      %v2496 = vshll.u32 %v2458, 16
      %v2498 = vrot.slane %v2496, 1
      %v2499 = vsel %vm321, %v2494, %v2498
      %v2500 = vshrl.u32 %v2458, 16
      %v2502 = vor.u32 %v2500, %v2498
      %v2504 = vshll.u32 %v2459, 16
      %v2506 = vrot.slane %v2504, 1
      %v2507 = vsel %vm321, %v2502, %v2506
      %v2508 = vshrl.u32 %v2459, 16
      %v2510 = vor.u32 %v2508, %v2506
      %v2512 = vshll.u32 %v2460, 16
      %v2514 = vrot.slane %v2512, 1
      %v2515 = vsel %vm321, %v2510, %v2514
      %v2516 = vshrl.u32 %v2460, 16
      %v2518 = vor.u32 %v2516, %v2514
      %v2520 = vshll.u32 %v2461, 16
      %v2522 = vrot.slane %v2520, 1
      %v2523 = vsel %vm321, %v2518, %v2522
      %v2524 = vshrl.u32 %v2461, 16
      %v2526 = vor.u32 %v2524, %v2522
      %v2528 = vshll.u32 %v2462, 16
      %v2530 = vrot.slane %v2528, 1
      %v2531 = vsel %vm321, %v2526, %v2530
      %v2532 = vshrl.u32 %v2462, 16
      %v2534 = vor.u32 %v2532, %v2530
      %v2536 = vshll.u32 %v2463, 16
      %v2538 = vrot.slane %v2536, 1
      %v2539 = vsel %vm321, %v2534, %v2538
      %2540 = vrot.lane.b32.xlu0 %v2475, 48
      %v2541 = vpop.permute.xlu0 %2540
      %2542 = vrot.lane.b32.xlu0 %v2483, 48
      %v2543 = vpop.permute.xlu0 %2542
      %2544 = vrot.lane.b32.xlu0 %v2491, 48
      %v2545 = vpop.permute.xlu0 %2544
      %2546 = vrot.lane.b32.xlu0 %v2499, 48
      %v2547 = vpop.permute.xlu0 %2546
      %2548 = vrot.lane.b32.xlu0 %v2507, 48
      %v2549 = vpop.permute.xlu0 %2548
      %2550 = vrot.lane.b32.xlu0 %v2515, 48
      %v2551 = vpop.permute.xlu0 %2550
      %2552 = vrot.lane.b32.xlu0 %v2523, 48
      %v2553 = vpop.permute.xlu0 %2552
      %2554 = vrot.lane.b32.xlu0 %v2531, 48
      %v2555 = vpop.permute.xlu0 %2554
      %2556 = vrot.lane.b32.xlu0 %v2539, 48
      %v2557 = vpop.permute.xlu0 %2556
      %vm2567 = vcmask 417152
      %2568 = vst.msk [vmem:[#allocation2] sm:$0xff] %vm2567, %v2541
      %2569 = vst.msk [vmem:[#allocation2 + $0x8] sm:$0xff] %vm2567, %v2543
      %2570 = vst.msk [vmem:[#allocation2 + $0x10] sm:$0xff] %vm2567, %v2545
      %2571 = vst.msk [vmem:[#allocation2 + $0x18] sm:$0xff] %vm2567, %v2547
      %2572 = vst.msk [vmem:[#allocation2 + $0x20] sm:$0xff] %vm2567, %v2549
      %2573 = vst.msk [vmem:[#allocation2 + $0x28] sm:$0xff] %vm2567, %v2551
      %2574 = vst.msk [vmem:[#allocation2 + $0x30] sm:$0xff] %vm2567, %v2553
      %2575 = vst.msk [vmem:[#allocation2 + $0x38] sm:$0xff] %vm2567, %v2555
      %2576 = vst.msk [vmem:[#allocation2 + $0x40] sm:$0xff] %vm2567, %v2557
      %v2577 = vld [vmem:[%s165 + $0x18] sm:$0xe]
      %v2578 = vld [vmem:[%s165 + $0x1c] sm:$0xf]
      %v2579 = vld [vmem:[%s165 + $0x20] sm:$0xf]
      %v2580 = vld [vmem:[%s165 + $0x24] sm:$0xf]
      %v2581 = vld [vmem:[%s165 + $0x28] sm:$0xf]
      %v2582 = vld [vmem:[%s165 + $0x2c] sm:$0xf]
      %v2583 = vld [vmem:[%s165 + $0x30] sm:$0xf]
      %v2584 = vld [vmem:[%s165 + $0x34] sm:$0xf]
      %v2585 = vld [vmem:[%s165 + $0x38] sm:$0xf]
      %v2586 = vld [vmem:[%s165 + $0x3c] sm:$0xf]
      %v2587 = vld [vmem:[%s165 + $0x40] sm:$0xf]
      %v2588 = vld [vmem:[%s165 + $0x44] sm:$0xf]
      %v2589 = vld [vmem:[%s165 + $0x48] sm:$0xf]
      %v2590 = vld [vmem:[%s165 + $0x4c] sm:$0xf]
      %v2591 = vld [vmem:[%s165 + $0x50] sm:$0xf]
      %v2592 = vld [vmem:[%s165 + $0x54] sm:$0xf]
      %v2593 = vld [vmem:[%s165 + $0x58] sm:$0xf]
      %v2594 = vld [vmem:[%s165 + $0x5c] sm:$0xf]
      %v2595 = vld [vmem:[%s165 + $0x60] sm:$0x1]
      %v2615 = vunpack.c.l.b16 %v2577
      %v2616 = vunpack.c.l.b16 %v2578
      %v2617 = vunpack.c.l.b16 %v2579
      %v2618 = vunpack.c.l.b16 %v2580
      %v2619 = vunpack.c.l.b16 %v2581
      %v2620 = vunpack.c.l.b16 %v2582
      %v2621 = vunpack.c.l.b16 %v2583
      %v2622 = vunpack.c.l.b16 %v2584
      %v2623 = vunpack.c.l.b16 %v2585
      %v2624 = vunpack.c.l.b16 %v2586
      %v2625 = vunpack.c.l.b16 %v2587
      %v2626 = vunpack.c.l.b16 %v2588
      %v2627 = vunpack.c.l.b16 %v2589
      %v2628 = vunpack.c.l.b16 %v2590
      %v2629 = vunpack.c.l.b16 %v2591
      %v2630 = vunpack.c.l.b16 %v2592
      %v2631 = vunpack.c.l.b16 %v2593
      %v2632 = vunpack.c.l.b16 %v2594
      %v2633 = vunpack.c.l.b16 %v2595
      %v2634 = vpack.c.b16 %v2616, %v2615
      %v2635 = vpack.c.b16 %v2618, %v2617
      %v2636 = vpack.c.b16 %v2620, %v2619
      %v2637 = vpack.c.b16 %v2622, %v2621
      %v2638 = vpack.c.b16 %v2624, %v2623
      %v2639 = vpack.c.b16 %v2626, %v2625
      %v2640 = vpack.c.b16 %v2628, %v2627
      %v2641 = vpack.c.b16 %v2630, %v2629
      %v2642 = vpack.c.b16 %v2632, %v2631
      %v2643 = vpack.c.b16 %v2633, %v2633
      %v2644 = vrot.slane %v2634, 1
      %v2645 = vrot.slane %v2635, 1
      %v2646 = vsel %vm502, %v2644, %v2645
      %v2647 = vrot.slane %v2636, 1
      %v2648 = vsel %vm502, %v2645, %v2647
      %v2649 = vrot.slane %v2637, 1
      %v2650 = vsel %vm502, %v2647, %v2649
      %v2651 = vrot.slane %v2638, 1
      %v2652 = vsel %vm502, %v2649, %v2651
      %v2653 = vrot.slane %v2639, 1
      %v2654 = vsel %vm502, %v2651, %v2653
      %v2655 = vrot.slane %v2640, 1
      %v2656 = vsel %vm502, %v2653, %v2655
      %v2657 = vrot.slane %v2641, 1
      %v2658 = vsel %vm502, %v2655, %v2657
      %v2659 = vrot.slane %v2642, 1
      %v2660 = vsel %vm502, %v2657, %v2659
      %v2661 = vrot.slane %v2643, 1
      %v2662 = vsel %vm502, %v2659, %v2661
      %2663 = vrot.lane.b32.xlu0 %v2646, 51
      %v2664 = vpop.permute.xlu0 %2663
      %2665 = vrot.lane.b32.xlu0 %v2648, 51
      %v2666 = vpop.permute.xlu0 %2665
      %2667 = vrot.lane.b32.xlu0 %v2650, 51
      %v2668 = vpop.permute.xlu0 %2667
      %2669 = vrot.lane.b32.xlu0 %v2652, 51
      %v2670 = vpop.permute.xlu0 %2669
      %2671 = vrot.lane.b32.xlu0 %v2654, 51
      %v2672 = vpop.permute.xlu0 %2671
      %2673 = vrot.lane.b32.xlu0 %v2656, 51
      %v2674 = vpop.permute.xlu0 %2673
      %2675 = vrot.lane.b32.xlu0 %v2658, 51
      %v2676 = vpop.permute.xlu0 %2675
      %2677 = vrot.lane.b32.xlu0 %v2660, 51
      %v2678 = vpop.permute.xlu0 %2677
      %2679 = vrot.lane.b32.xlu0 %v2662, 51
      %v2680 = vpop.permute.xlu0 %2679
      %vm2690 = vcmask 441752
      %2691 = vst.msk [vmem:[#allocation2] sm:$0xff] %vm2690, %v2664
      %2692 = vst.msk [vmem:[#allocation2 + $0x8] sm:$0xff] %vm2690, %v2666
      %2693 = vst.msk [vmem:[#allocation2 + $0x10] sm:$0xff] %vm2690, %v2668
      %2694 = vst.msk [vmem:[#allocation2 + $0x18] sm:$0xff] %vm2690, %v2670
      %2695 = vst.msk [vmem:[#allocation2 + $0x20] sm:$0xff] %vm2690, %v2672
      %2696 = vst.msk [vmem:[#allocation2 + $0x28] sm:$0xff] %vm2690, %v2674
      %2697 = vst.msk [vmem:[#allocation2 + $0x30] sm:$0xff] %vm2690, %v2676
      %2698 = vst.msk [vmem:[#allocation2 + $0x38] sm:$0xff] %vm2690, %v2678
      %2699 = vst.msk [vmem:[#allocation2 + $0x40] sm:$0xff] %vm2690, %v2680
      %v2700 = vld [vmem:[%s165 + $0x24] sm:$0xf]
      %v2701 = vld [vmem:[%s165 + $0x28] sm:$0xf]
      %v2702 = vld [vmem:[%s165 + $0x2c] sm:$0xf]
      %v2703 = vld [vmem:[%s165 + $0x30] sm:$0xf]
      %v2704 = vld [vmem:[%s165 + $0x34] sm:$0xf]
      %v2705 = vld [vmem:[%s165 + $0x38] sm:$0xf]
      %v2706 = vld [vmem:[%s165 + $0x3c] sm:$0xf]
      %v2707 = vld [vmem:[%s165 + $0x40] sm:$0xf]
      %v2708 = vld [vmem:[%s165 + $0x44] sm:$0xf]
      %v2709 = vld [vmem:[%s165 + $0x48] sm:$0xf]
      %v2710 = vld [vmem:[%s165 + $0x4c] sm:$0xf]
      %v2711 = vld [vmem:[%s165 + $0x50] sm:$0xf]
      %v2712 = vld [vmem:[%s165 + $0x54] sm:$0xf]
      %v2713 = vld [vmem:[%s165 + $0x58] sm:$0xf]
      %v2714 = vld [vmem:[%s165 + $0x5c] sm:$0xf]
      %v2715 = vld [vmem:[%s165 + $0x60] sm:$0xf]
      %v2716 = vld [vmem:[%s165 + $0x64] sm:$0xf]
      %v2717 = vld [vmem:[%s165 + $0x68] sm:$0xf]
      %v2736 = vunpack.c.l.b16 %v2700
      %v2737 = vunpack.c.l.b16 %v2701
      %v2738 = vunpack.c.l.b16 %v2702
      %v2739 = vunpack.c.l.b16 %v2703
      %v2740 = vunpack.c.l.b16 %v2704
      %v2741 = vunpack.c.l.b16 %v2705
      %v2742 = vunpack.c.l.b16 %v2706
      %v2743 = vunpack.c.l.b16 %v2707
      %v2744 = vunpack.c.l.b16 %v2708
      %v2745 = vunpack.c.l.b16 %v2709
      %v2746 = vunpack.c.l.b16 %v2710
      %v2747 = vunpack.c.l.b16 %v2711
      %v2748 = vunpack.c.l.b16 %v2712
      %v2749 = vunpack.c.l.b16 %v2713
      %v2750 = vunpack.c.l.b16 %v2714
      %v2751 = vunpack.c.l.b16 %v2715
      %v2752 = vunpack.c.l.b16 %v2716
      %v2753 = vunpack.c.l.b16 %v2717
      %v2754 = vpack.c.b16 %v2737, %v2736
      %v2755 = vpack.c.b16 %v2739, %v2738
      %v2756 = vpack.c.b16 %v2741, %v2740
      %v2757 = vpack.c.b16 %v2743, %v2742
      %v2758 = vpack.c.b16 %v2745, %v2744
      %v2759 = vpack.c.b16 %v2747, %v2746
      %v2760 = vpack.c.b16 %v2749, %v2748
      %v2761 = vpack.c.b16 %v2751, %v2750
      %v2762 = vpack.c.b16 %v2753, %v2752
      %2763 = vrot.lane.b32.xlu0 %v2754, 54
      %v2764 = vpop.permute.xlu0 %2763
      %2765 = vrot.lane.b32.xlu0 %v2755, 54
      %v2766 = vpop.permute.xlu0 %2765
      %2767 = vrot.lane.b32.xlu0 %v2756, 54
      %v2768 = vpop.permute.xlu0 %2767
      %2769 = vrot.lane.b32.xlu0 %v2757, 54
      %v2770 = vpop.permute.xlu0 %2769
      %2771 = vrot.lane.b32.xlu0 %v2758, 54
      %v2772 = vpop.permute.xlu0 %2771
      %2773 = vrot.lane.b32.xlu0 %v2759, 54
      %v2774 = vpop.permute.xlu0 %2773
      %2775 = vrot.lane.b32.xlu0 %v2760, 54
      %v2776 = vpop.permute.xlu0 %2775
      %2777 = vrot.lane.b32.xlu0 %v2761, 54
      %v2778 = vpop.permute.xlu0 %2777
      %2779 = vrot.lane.b32.xlu0 %v2762, 54
      %v2780 = vpop.permute.xlu0 %2779
      %vm2790 = vcmask 466352
      %2791 = vst.msk [vmem:[#allocation2] sm:$0xff] %vm2790, %v2764
      %2792 = vst.msk [vmem:[#allocation2 + $0x8] sm:$0xff] %vm2790, %v2766
      %2793 = vst.msk [vmem:[#allocation2 + $0x10] sm:$0xff] %vm2790, %v2768
      %2794 = vst.msk [vmem:[#allocation2 + $0x18] sm:$0xff] %vm2790, %v2770
      %2795 = vst.msk [vmem:[#allocation2 + $0x20] sm:$0xff] %vm2790, %v2772
      %2796 = vst.msk [vmem:[#allocation2 + $0x28] sm:$0xff] %vm2790, %v2774
      %2797 = vst.msk [vmem:[#allocation2 + $0x30] sm:$0xff] %vm2790, %v2776
      %2798 = vst.msk [vmem:[#allocation2 + $0x38] sm:$0xff] %vm2790, %v2778
      %2799 = vst.msk [vmem:[#allocation2 + $0x40] sm:$0xff] %vm2790, %v2780
      %v2800 = vld [vmem:[%s165 + $0x24] sm:$0xf]
      %v2801 = vld [vmem:[%s165 + $0x28] sm:$0xf]
      %v2802 = vld [vmem:[%s165 + $0x2c] sm:$0xf]
      %v2803 = vld [vmem:[%s165 + $0x30] sm:$0xf]
      %v2804 = vld [vmem:[%s165 + $0x34] sm:$0xf]
      %v2805 = vld [vmem:[%s165 + $0x38] sm:$0xf]
      %v2806 = vld [vmem:[%s165 + $0x3c] sm:$0xf]
      %v2807 = vld [vmem:[%s165 + $0x40] sm:$0xf]
      %v2808 = vld [vmem:[%s165 + $0x44] sm:$0xf]
      %v2809 = vld [vmem:[%s165 + $0x48] sm:$0xf]
      %v2810 = vld [vmem:[%s165 + $0x4c] sm:$0xf]
      %v2811 = vld [vmem:[%s165 + $0x50] sm:$0xf]
      %v2812 = vld [vmem:[%s165 + $0x54] sm:$0xf]
      %v2813 = vld [vmem:[%s165 + $0x58] sm:$0xf]
      %v2814 = vld [vmem:[%s165 + $0x5c] sm:$0xf]
      %v2815 = vld [vmem:[%s165 + $0x60] sm:$0xf]
      %v2816 = vld [vmem:[%s165 + $0x64] sm:$0xf]
      %v2817 = vld [vmem:[%s165 + $0x68] sm:$0xf]
      %v2818 = vld [vmem:[%s165 + $0x6c] sm:$0x1]
      %v2838 = vunpack.c.l.b16 %v2800
      %v2839 = vunpack.c.l.b16 %v2801
      %v2840 = vunpack.c.l.b16 %v2802
      %v2841 = vunpack.c.l.b16 %v2803
      %v2842 = vunpack.c.l.b16 %v2804
      %v2843 = vunpack.c.l.b16 %v2805
      %v2844 = vunpack.c.l.b16 %v2806
      %v2845 = vunpack.c.l.b16 %v2807
      %v2846 = vunpack.c.l.b16 %v2808
      %v2847 = vunpack.c.l.b16 %v2809
      %v2848 = vunpack.c.l.b16 %v2810
      %v2849 = vunpack.c.l.b16 %v2811
      %v2850 = vunpack.c.l.b16 %v2812
      %v2851 = vunpack.c.l.b16 %v2813
      %v2852 = vunpack.c.l.b16 %v2814
      %v2853 = vunpack.c.l.b16 %v2815
      %v2854 = vunpack.c.l.b16 %v2816
      %v2855 = vunpack.c.l.b16 %v2817
      %v2856 = vunpack.c.l.b16 %v2818
      %v2857 = vpack.c.b16 %v2839, %v2838
      %v2858 = vpack.c.b16 %v2841, %v2840
      %v2859 = vpack.c.b16 %v2843, %v2842
      %v2860 = vpack.c.b16 %v2845, %v2844
      %v2861 = vpack.c.b16 %v2847, %v2846
      %v2862 = vpack.c.b16 %v2849, %v2848
      %v2863 = vpack.c.b16 %v2851, %v2850
      %v2864 = vpack.c.b16 %v2853, %v2852
      %v2865 = vpack.c.b16 %v2855, %v2854
      %v2866 = vpack.c.b16 %v2856, %v2856
      %v2868 = vshrl.u32 %v2857, 16
      %v2870 = vshll.u32 %v2857, 16
      %v2872 = vrot.slane %v2870, 1
      %v2873 = vor.u32 %v2868, %v2872
      %v2875 = vshll.u32 %v2858, 16
      %v2877 = vrot.slane %v2875, 1
      %v2878 = vsel %vm321, %v2873, %v2877
      %v2879 = vshrl.u32 %v2858, 16
      %v2881 = vor.u32 %v2879, %v2877
      %v2883 = vshll.u32 %v2859, 16
      %v2885 = vrot.slane %v2883, 1
      %v2886 = vsel %vm321, %v2881, %v2885
      %v2887 = vshrl.u32 %v2859, 16
      %v2889 = vor.u32 %v2887, %v2885
      %v2891 = vshll.u32 %v2860, 16
      %v2893 = vrot.slane %v2891, 1
      %v2894 = vsel %vm321, %v2889, %v2893
      %v2895 = vshrl.u32 %v2860, 16
      %v2897 = vor.u32 %v2895, %v2893
      %v2899 = vshll.u32 %v2861, 16
      %v2901 = vrot.slane %v2899, 1
      %v2902 = vsel %vm321, %v2897, %v2901
      %v2903 = vshrl.u32 %v2861, 16
      %v2905 = vor.u32 %v2903, %v2901
      %v2907 = vshll.u32 %v2862, 16
      %v2909 = vrot.slane %v2907, 1
      %v2910 = vsel %vm321, %v2905, %v2909
      %v2911 = vshrl.u32 %v2862, 16
      %v2913 = vor.u32 %v2911, %v2909
      %v2915 = vshll.u32 %v2863, 16
      %v2917 = vrot.slane %v2915, 1
      %v2918 = vsel %vm321, %v2913, %v2917
      %v2919 = vshrl.u32 %v2863, 16
      %v2921 = vor.u32 %v2919, %v2917
      %v2923 = vshll.u32 %v2864, 16
      %v2925 = vrot.slane %v2923, 1
      %v2926 = vsel %vm321, %v2921, %v2925
      %v2927 = vshrl.u32 %v2864, 16
      %v2929 = vor.u32 %v2927, %v2925
      %v2931 = vshll.u32 %v2865, 16
      %v2933 = vrot.slane %v2931, 1
      %v2934 = vsel %vm321, %v2929, %v2933
      %v2935 = vshrl.u32 %v2865, 16
      %v2937 = vor.u32 %v2935, %v2933
      %v2939 = vshll.u32 %v2866, 16
      %v2941 = vrot.slane %v2939, 1
      %v2942 = vsel %vm321, %v2937, %v2941
      %2943 = vrot.lane.b32.xlu0 %v2878, 57
      %v2944 = vpop.permute.xlu0 %2943
      %2945 = vrot.lane.b32.xlu0 %v2886, 57
      %v2946 = vpop.permute.xlu0 %2945
      %2947 = vrot.lane.b32.xlu0 %v2894, 57
      %v2948 = vpop.permute.xlu0 %2947
      %2949 = vrot.lane.b32.xlu0 %v2902, 57
      %v2950 = vpop.permute.xlu0 %2949
      %2951 = vrot.lane.b32.xlu0 %v2910, 57
      %v2952 = vpop.permute.xlu0 %2951
      %2953 = vrot.lane.b32.xlu0 %v2918, 57
      %v2954 = vpop.permute.xlu0 %2953
      %2955 = vrot.lane.b32.xlu0 %v2926, 57
      %v2956 = vpop.permute.xlu0 %2955
      %2957 = vrot.lane.b32.xlu0 %v2934, 57
      %v2958 = vpop.permute.xlu0 %2957
      %2959 = vrot.lane.b32.xlu0 %v2942, 57
      %v2960 = vpop.permute.xlu0 %2959
      %vm2970 = vcmask 490952
      %2971 = vst.msk [vmem:[#allocation2] sm:$0xff] %vm2970, %v2944
      %2972 = vst.msk [vmem:[#allocation2 + $0x8] sm:$0xff] %vm2970, %v2946
      %2973 = vst.msk [vmem:[#allocation2 + $0x10] sm:$0xff] %vm2970, %v2948
      %2974 = vst.msk [vmem:[#allocation2 + $0x18] sm:$0xff] %vm2970, %v2950
      %2975 = vst.msk [vmem:[#allocation2 + $0x20] sm:$0xff] %vm2970, %v2952
      %2976 = vst.msk [vmem:[#allocation2 + $0x28] sm:$0xff] %vm2970, %v2954
      %2977 = vst.msk [vmem:[#allocation2 + $0x30] sm:$0xff] %vm2970, %v2956
      %2978 = vst.msk [vmem:[#allocation2 + $0x38] sm:$0xff] %vm2970, %v2958
      %2979 = vst.msk [vmem:[#allocation2 + $0x40] sm:$0xff] %vm2970, %v2960
      %v2980 = vld [vmem:[%s165 + $0x24] sm:$0xe]
      %v2981 = vld [vmem:[%s165 + $0x28] sm:$0xf]
      %v2982 = vld [vmem:[%s165 + $0x2c] sm:$0xf]
      %v2983 = vld [vmem:[%s165 + $0x30] sm:$0xf]
      %v2984 = vld [vmem:[%s165 + $0x34] sm:$0xf]
      %v2985 = vld [vmem:[%s165 + $0x38] sm:$0xf]
      %v2986 = vld [vmem:[%s165 + $0x3c] sm:$0xf]
      %v2987 = vld [vmem:[%s165 + $0x40] sm:$0xf]
      %v2988 = vld [vmem:[%s165 + $0x44] sm:$0xf]
      %v2989 = vld [vmem:[%s165 + $0x48] sm:$0xf]
      %v2990 = vld [vmem:[%s165 + $0x4c] sm:$0xf]
      %v2991 = vld [vmem:[%s165 + $0x50] sm:$0xf]
      %v2992 = vld [vmem:[%s165 + $0x54] sm:$0xf]
      %v2993 = vld [vmem:[%s165 + $0x58] sm:$0xf]
      %v2994 = vld [vmem:[%s165 + $0x5c] sm:$0xf]
      %v2995 = vld [vmem:[%s165 + $0x60] sm:$0xf]
      %v2996 = vld [vmem:[%s165 + $0x64] sm:$0xf]
      %v2997 = vld [vmem:[%s165 + $0x68] sm:$0xf]
      %v2998 = vld [vmem:[%s165 + $0x6c] sm:$0x1]
      %v3018 = vunpack.c.l.b16 %v2980
      %v3019 = vunpack.c.l.b16 %v2981
      %v3020 = vunpack.c.l.b16 %v2982
      %v3021 = vunpack.c.l.b16 %v2983
      %v3022 = vunpack.c.l.b16 %v2984
      %v3023 = vunpack.c.l.b16 %v2985
      %v3024 = vunpack.c.l.b16 %v2986
      %v3025 = vunpack.c.l.b16 %v2987
      %v3026 = vunpack.c.l.b16 %v2988
      %v3027 = vunpack.c.l.b16 %v2989
      %v3028 = vunpack.c.l.b16 %v2990
      %v3029 = vunpack.c.l.b16 %v2991
      %v3030 = vunpack.c.l.b16 %v2992
      %v3031 = vunpack.c.l.b16 %v2993
      %v3032 = vunpack.c.l.b16 %v2994
      %v3033 = vunpack.c.l.b16 %v2995
      %v3034 = vunpack.c.l.b16 %v2996
      %v3035 = vunpack.c.l.b16 %v2997
      %v3036 = vunpack.c.l.b16 %v2998
      %v3037 = vpack.c.b16 %v3019, %v3018
      %v3038 = vpack.c.b16 %v3021, %v3020
      %v3039 = vpack.c.b16 %v3023, %v3022
      %v3040 = vpack.c.b16 %v3025, %v3024
      %v3041 = vpack.c.b16 %v3027, %v3026
      %v3042 = vpack.c.b16 %v3029, %v3028
      %v3043 = vpack.c.b16 %v3031, %v3030
      %v3044 = vpack.c.b16 %v3033, %v3032
      %v3045 = vpack.c.b16 %v3035, %v3034
      %v3046 = vpack.c.b16 %v3036, %v3036
      %v3047 = vrot.slane %v3037, 1
      %v3048 = vrot.slane %v3038, 1
      %v3049 = vsel %vm502, %v3047, %v3048
      %v3050 = vrot.slane %v3039, 1
      %v3051 = vsel %vm502, %v3048, %v3050
      %v3052 = vrot.slane %v3040, 1
      %v3053 = vsel %vm502, %v3050, %v3052
      %v3054 = vrot.slane %v3041, 1
      %v3055 = vsel %vm502, %v3052, %v3054
      %v3056 = vrot.slane %v3042, 1
      %v3057 = vsel %vm502, %v3054, %v3056
      %v3058 = vrot.slane %v3043, 1
      %v3059 = vsel %vm502, %v3056, %v3058
      %v3060 = vrot.slane %v3044, 1
      %v3061 = vsel %vm502, %v3058, %v3060
      %v3062 = vrot.slane %v3045, 1
      %v3063 = vsel %vm502, %v3060, %v3062
      %v3064 = vrot.slane %v3046, 1
      %v3065 = vsel %vm502, %v3062, %v3064
      %3066 = vrot.lane.b32.xlu0 %v3049, 60
      %v3067 = vpop.permute.xlu0 %3066
      %3068 = vrot.lane.b32.xlu0 %v3051, 60
      %v3069 = vpop.permute.xlu0 %3068
      %3070 = vrot.lane.b32.xlu0 %v3053, 60
      %v3071 = vpop.permute.xlu0 %3070
      %3072 = vrot.lane.b32.xlu0 %v3055, 60
      %v3073 = vpop.permute.xlu0 %3072
      %3074 = vrot.lane.b32.xlu0 %v3057, 60
      %v3075 = vpop.permute.xlu0 %3074
      %3076 = vrot.lane.b32.xlu0 %v3059, 60
      %v3077 = vpop.permute.xlu0 %3076
      %3078 = vrot.lane.b32.xlu0 %v3061, 60
      %v3079 = vpop.permute.xlu0 %3078
      %3080 = vrot.lane.b32.xlu0 %v3063, 60
      %v3081 = vpop.permute.xlu0 %3080
      %3082 = vrot.lane.b32.xlu0 %v3065, 60
      %v3083 = vpop.permute.xlu0 %3082
      %vm3093 = vcmask 515552
      %3094 = vst.msk [vmem:[#allocation2] sm:$0xff] %vm3093, %v3067
      %3095 = vst.msk [vmem:[#allocation2 + $0x8] sm:$0xff] %vm3093, %v3069
      %3096 = vst.msk [vmem:[#allocation2 + $0x10] sm:$0xff] %vm3093, %v3071
      %3097 = vst.msk [vmem:[#allocation2 + $0x18] sm:$0xff] %vm3093, %v3073
      %3098 = vst.msk [vmem:[#allocation2 + $0x20] sm:$0xff] %vm3093, %v3075
      %3099 = vst.msk [vmem:[#allocation2 + $0x28] sm:$0xff] %vm3093, %v3077
      %3100 = vst.msk [vmem:[#allocation2 + $0x30] sm:$0xff] %vm3093, %v3079
      %3101 = vst.msk [vmem:[#allocation2 + $0x38] sm:$0xff] %vm3093, %v3081
      %3102 = vst.msk [vmem:[#allocation2 + $0x40] sm:$0xff] %vm3093, %v3083
      %v3103 = vld [vmem:[%s165 + $0x24] sm:$0x8]
      %v3104 = vld [vmem:[%s165 + $0x28] sm:$0xf]
      %v3105 = vld [vmem:[%s165 + $0x2c] sm:$0xf]
      %v3106 = vld [vmem:[%s165 + $0x30] sm:$0xf]
      %v3107 = vld [vmem:[%s165 + $0x34] sm:$0xf]
      %v3108 = vld [vmem:[%s165 + $0x38] sm:$0xf]
      %v3109 = vld [vmem:[%s165 + $0x3c] sm:$0xf]
      %v3110 = vld [vmem:[%s165 + $0x40] sm:$0xf]
      %v3111 = vld [vmem:[%s165 + $0x44] sm:$0xf]
      %v3112 = vld [vmem:[%s165 + $0x48] sm:$0xf]
      %v3113 = vld [vmem:[%s165 + $0x4c] sm:$0xf]
      %v3114 = vld [vmem:[%s165 + $0x50] sm:$0xf]
      %v3115 = vld [vmem:[%s165 + $0x54] sm:$0xf]
      %v3116 = vld [vmem:[%s165 + $0x58] sm:$0xf]
      %v3117 = vld [vmem:[%s165 + $0x5c] sm:$0xf]
      %v3118 = vld [vmem:[%s165 + $0x60] sm:$0xf]
      %v3119 = vld [vmem:[%s165 + $0x64] sm:$0xf]
      %v3120 = vld [vmem:[%s165 + $0x68] sm:$0xf]
      %v3121 = vld [vmem:[%s165 + $0x6c] sm:$0x7]
      %v3141 = vunpack.c.l.b16 %v3103
      %v3142 = vunpack.c.l.b16 %v3104
      %v3143 = vunpack.c.l.b16 %v3105
      %v3144 = vunpack.c.l.b16 %v3106
      %v3145 = vunpack.c.l.b16 %v3107
      %v3146 = vunpack.c.l.b16 %v3108
      %v3147 = vunpack.c.l.b16 %v3109
      %v3148 = vunpack.c.l.b16 %v3110
      %v3149 = vunpack.c.l.b16 %v3111
      %v3150 = vunpack.c.l.b16 %v3112
      %v3151 = vunpack.c.l.b16 %v3113
      %v3152 = vunpack.c.l.b16 %v3114
      %v3153 = vunpack.c.l.b16 %v3115
      %v3154 = vunpack.c.l.b16 %v3116
      %v3155 = vunpack.c.l.b16 %v3117
      %v3156 = vunpack.c.l.b16 %v3118
      %v3157 = vunpack.c.l.b16 %v3119
      %v3158 = vunpack.c.l.b16 %v3120
      %v3159 = vunpack.c.l.b16 %v3121
      %v3160 = vpack.c.b16 %v3142, %v3141
      %v3161 = vpack.c.b16 %v3144, %v3143
      %v3162 = vpack.c.b16 %v3146, %v3145
      %v3163 = vpack.c.b16 %v3148, %v3147
      %v3164 = vpack.c.b16 %v3150, %v3149
      %v3165 = vpack.c.b16 %v3152, %v3151
      %v3166 = vpack.c.b16 %v3154, %v3153
      %v3167 = vpack.c.b16 %v3156, %v3155
      %v3168 = vpack.c.b16 %v3158, %v3157
      %v3169 = vpack.c.b16 %v3159, %v3159
      %v3170 = vrot.slane %v3160, 3
      %v3171 = vrot.slane %v3161, 3
      %v3172 = vsel %vm626, %v3170, %v3171
      %v3173 = vrot.slane %v3162, 3
      %v3174 = vsel %vm626, %v3171, %v3173
      %v3175 = vrot.slane %v3163, 3
      %v3176 = vsel %vm626, %v3173, %v3175
      %v3177 = vrot.slane %v3164, 3
      %v3178 = vsel %vm626, %v3175, %v3177
      %v3179 = vrot.slane %v3165, 3
      %v3180 = vsel %vm626, %v3177, %v3179
      %v3181 = vrot.slane %v3166, 3
      %v3182 = vsel %vm626, %v3179, %v3181
      %v3183 = vrot.slane %v3167, 3
      %v3184 = vsel %vm626, %v3181, %v3183
      %v3185 = vrot.slane %v3168, 3
      %v3186 = vsel %vm626, %v3183, %v3185
      %v3187 = vrot.slane %v3169, 3
      %v3188 = vsel %vm626, %v3185, %v3187
      %3189 = vrot.lane.b32.xlu0 %v3172, 63
      %v3190 = vpop.permute.xlu0 %3189
      %3191 = vrot.lane.b32.xlu0 %v3174, 63
      %v3192 = vpop.permute.xlu0 %3191
      %3193 = vrot.lane.b32.xlu0 %v3176, 63
      %v3194 = vpop.permute.xlu0 %3193
      %3195 = vrot.lane.b32.xlu0 %v3178, 63
      %v3196 = vpop.permute.xlu0 %3195
      %3197 = vrot.lane.b32.xlu0 %v3180, 63
      %v3198 = vpop.permute.xlu0 %3197
      %3199 = vrot.lane.b32.xlu0 %v3182, 63
      %v3200 = vpop.permute.xlu0 %3199
      %3201 = vrot.lane.b32.xlu0 %v3184, 63
      %v3202 = vpop.permute.xlu0 %3201
      %3203 = vrot.lane.b32.xlu0 %v3186, 63
      %v3204 = vpop.permute.xlu0 %3203
      %3205 = vrot.lane.b32.xlu0 %v3188, 63
      %v3206 = vpop.permute.xlu0 %3205
      %vm3216 = vcmask 540152
      %3217 = vst.msk [vmem:[#allocation2] sm:$0xff] %vm3216, %v3190
      %3218 = vst.msk [vmem:[#allocation2 + $0x8] sm:$0xff] %vm3216, %v3192
      %3219 = vst.msk [vmem:[#allocation2 + $0x10] sm:$0xff] %vm3216, %v3194
      %3220 = vst.msk [vmem:[#allocation2 + $0x18] sm:$0xff] %vm3216, %v3196
      %3221 = vst.msk [vmem:[#allocation2 + $0x20] sm:$0xff] %vm3216, %v3198
      %3222 = vst.msk [vmem:[#allocation2 + $0x28] sm:$0xff] %vm3216, %v3200
      %3223 = vst.msk [vmem:[#allocation2 + $0x30] sm:$0xff] %vm3216, %v3202
      %3224 = vst.msk [vmem:[#allocation2 + $0x38] sm:$0xff] %vm3216, %v3204
      %3225 = vst.msk [vmem:[#allocation2 + $0x40] sm:$0xff] %vm3216, %v3206
      %v3226 = vld [vmem:[%s165 + $0x24] sm:$0x8]
      %v3227 = vld [vmem:[%s165 + $0x28] sm:$0xf]
      %v3228 = vld [vmem:[%s165 + $0x2c] sm:$0xf]
      %v3229 = vld [vmem:[%s165 + $0x30] sm:$0xf]
      %v3230 = vld [vmem:[%s165 + $0x34] sm:$0xf]
      %v3231 = vld [vmem:[%s165 + $0x38] sm:$0xf]
      %v3232 = vld [vmem:[%s165 + $0x3c] sm:$0xf]
      %v3233 = vld [vmem:[%s165 + $0x40] sm:$0xf]
      %v3234 = vld [vmem:[%s165 + $0x44] sm:$0xf]
      %v3235 = vld [vmem:[%s165 + $0x48] sm:$0xf]
      %v3236 = vld [vmem:[%s165 + $0x4c] sm:$0xf]
      %v3237 = vld [vmem:[%s165 + $0x50] sm:$0xf]
      %v3238 = vld [vmem:[%s165 + $0x54] sm:$0xf]
      %v3239 = vld [vmem:[%s165 + $0x58] sm:$0xf]
      %v3240 = vld [vmem:[%s165 + $0x5c] sm:$0xf]
      %v3241 = vld [vmem:[%s165 + $0x60] sm:$0xf]
      %v3242 = vld [vmem:[%s165 + $0x64] sm:$0xf]
      %v3243 = vld [vmem:[%s165 + $0x68] sm:$0xf]
      %v3244 = vld [vmem:[%s165 + $0x6c] sm:$0xf]
      %v3264 = vunpack.c.l.b16 %v3226
      %v3265 = vunpack.c.l.b16 %v3227
      %v3266 = vunpack.c.l.b16 %v3228
      %v3267 = vunpack.c.l.b16 %v3229
      %v3268 = vunpack.c.l.b16 %v3230
      %v3269 = vunpack.c.l.b16 %v3231
      %v3270 = vunpack.c.l.b16 %v3232
      %v3271 = vunpack.c.l.b16 %v3233
      %v3272 = vunpack.c.l.b16 %v3234
      %v3273 = vunpack.c.l.b16 %v3235
      %v3274 = vunpack.c.l.b16 %v3236
      %v3275 = vunpack.c.l.b16 %v3237
      %v3276 = vunpack.c.l.b16 %v3238
      %v3277 = vunpack.c.l.b16 %v3239
      %v3278 = vunpack.c.l.b16 %v3240
      %v3279 = vunpack.c.l.b16 %v3241
      %v3280 = vunpack.c.l.b16 %v3242
      %v3281 = vunpack.c.l.b16 %v3243
      %v3282 = vunpack.c.l.b16 %v3244
      %v3283 = vpack.c.b16 %v3265, %v3264
      %v3284 = vpack.c.b16 %v3267, %v3266
      %v3285 = vpack.c.b16 %v3269, %v3268
      %v3286 = vpack.c.b16 %v3271, %v3270
      %v3287 = vpack.c.b16 %v3273, %v3272
      %v3288 = vpack.c.b16 %v3275, %v3274
      %v3289 = vpack.c.b16 %v3277, %v3276
      %v3290 = vpack.c.b16 %v3279, %v3278
      %v3291 = vpack.c.b16 %v3281, %v3280
      %v3292 = vpack.c.b16 %v3282, %v3282
      %v3294 = vshrl.u32 %v3283, 16
      %v3296 = vrot.slane %v3294, 3
      %v3297 = vshll.u32 %v3283, 16
      %v3299 = vrot.slane %v3297, 4
      %v3300 = vor.u32 %v3296, %v3299
      %v3302 = vshrl.u32 %v3284, 16
      %v3304 = vrot.slane %v3302, 3
      %v3305 = vshll.u32 %v3284, 16
      %v3307 = vrot.slane %v3305, 4
      %v3308 = vor.u32 %v3304, %v3307
      %v3309 = vsel %vm750, %v3300, %v3308
      %v3311 = vshrl.u32 %v3285, 16
      %v3313 = vrot.slane %v3311, 3
      %v3314 = vshll.u32 %v3285, 16
      %v3316 = vrot.slane %v3314, 4
      %v3317 = vor.u32 %v3313, %v3316
      %v3318 = vsel %vm750, %v3308, %v3317
      %v3320 = vshrl.u32 %v3286, 16
      %v3322 = vrot.slane %v3320, 3
      %v3323 = vshll.u32 %v3286, 16
      %v3325 = vrot.slane %v3323, 4
      %v3326 = vor.u32 %v3322, %v3325
      %v3327 = vsel %vm750, %v3317, %v3326
      %v3329 = vshrl.u32 %v3287, 16
      %v3331 = vrot.slane %v3329, 3
      %v3332 = vshll.u32 %v3287, 16
      %v3334 = vrot.slane %v3332, 4
      %v3335 = vor.u32 %v3331, %v3334
      %v3336 = vsel %vm750, %v3326, %v3335
      %v3338 = vshrl.u32 %v3288, 16
      %v3340 = vrot.slane %v3338, 3
      %v3341 = vshll.u32 %v3288, 16
      %v3343 = vrot.slane %v3341, 4
      %v3344 = vor.u32 %v3340, %v3343
      %v3345 = vsel %vm750, %v3335, %v3344
      %v3347 = vshrl.u32 %v3289, 16
      %v3349 = vrot.slane %v3347, 3
      %v3350 = vshll.u32 %v3289, 16
      %v3352 = vrot.slane %v3350, 4
      %v3353 = vor.u32 %v3349, %v3352
      %v3354 = vsel %vm750, %v3344, %v3353
      %v3356 = vshrl.u32 %v3290, 16
      %v3358 = vrot.slane %v3356, 3
      %v3359 = vshll.u32 %v3290, 16
      %v3361 = vrot.slane %v3359, 4
      %v3362 = vor.u32 %v3358, %v3361
      %v3363 = vsel %vm750, %v3353, %v3362
      %v3365 = vshrl.u32 %v3291, 16
      %v3367 = vrot.slane %v3365, 3
      %v3368 = vshll.u32 %v3291, 16
      %v3370 = vrot.slane %v3368, 4
      %v3371 = vor.u32 %v3367, %v3370
      %v3372 = vsel %vm750, %v3362, %v3371
      %v3374 = vshrl.u32 %v3292, 16
      %v3376 = vrot.slane %v3374, 3
      %v3377 = vshll.u32 %v3292, 16
      %v3379 = vrot.slane %v3377, 4
      %v3380 = vor.u32 %v3376, %v3379
      %v3381 = vsel %vm750, %v3371, %v3380
      %3382 = vrot.lane.b32.xlu0 %v3309, 66
      %v3383 = vpop.permute.xlu0 %3382
      %3384 = vrot.lane.b32.xlu0 %v3318, 66
      %v3385 = vpop.permute.xlu0 %3384
      %3386 = vrot.lane.b32.xlu0 %v3327, 66
      %v3387 = vpop.permute.xlu0 %3386
      %3388 = vrot.lane.b32.xlu0 %v3336, 66
      %v3389 = vpop.permute.xlu0 %3388
      %3390 = vrot.lane.b32.xlu0 %v3345, 66
      %v3391 = vpop.permute.xlu0 %3390
      %3392 = vrot.lane.b32.xlu0 %v3354, 66
      %v3393 = vpop.permute.xlu0 %3392
      %3394 = vrot.lane.b32.xlu0 %v3363, 66
      %v3395 = vpop.permute.xlu0 %3394
      %3396 = vrot.lane.b32.xlu0 %v3372, 66
      %v3397 = vpop.permute.xlu0 %3396
      %3398 = vrot.lane.b32.xlu0 %v3381, 66
      %v3399 = vpop.permute.xlu0 %3398
      %vm3409 = vcmask 564752
      %3410 = vst.msk [vmem:[#allocation2] sm:$0xff] %vm3409, %v3383
      %3411 = vst.msk [vmem:[#allocation2 + $0x8] sm:$0xff] %vm3409, %v3385
      %3412 = vst.msk [vmem:[#allocation2 + $0x10] sm:$0xff] %vm3409, %v3387
      %3413 = vst.msk [vmem:[#allocation2 + $0x18] sm:$0xff] %vm3409, %v3389
      %3414 = vst.msk [vmem:[#allocation2 + $0x20] sm:$0xff] %vm3409, %v3391
      %3415 = vst.msk [vmem:[#allocation2 + $0x28] sm:$0xff] %vm3409, %v3393
      %3416 = vst.msk [vmem:[#allocation2 + $0x30] sm:$0xff] %vm3409, %v3395
      %3417 = vst.msk [vmem:[#allocation2 + $0x38] sm:$0xff] %vm3409, %v3397
      %3418 = vst.msk [vmem:[#allocation2 + $0x40] sm:$0xff] %vm3409, %v3399
      %v3419 = vld [vmem:[%s165 + $0x28] sm:$0xf]
      %v3420 = vld [vmem:[%s165 + $0x2c] sm:$0xf]
      %v3421 = vld [vmem:[%s165 + $0x30] sm:$0xf]
      %v3422 = vld [vmem:[%s165 + $0x34] sm:$0xf]
      %v3423 = vld [vmem:[%s165 + $0x38] sm:$0xf]
      %v3424 = vld [vmem:[%s165 + $0x3c] sm:$0xf]
      %v3425 = vld [vmem:[%s165 + $0x40] sm:$0xf]
      %v3426 = vld [vmem:[%s165 + $0x44] sm:$0xf]
      %v3427 = vld [vmem:[%s165 + $0x48] sm:$0xf]
      %v3428 = vld [vmem:[%s165 + $0x4c] sm:$0xf]
      %v3429 = vld [vmem:[%s165 + $0x50] sm:$0xf]
      %v3430 = vld [vmem:[%s165 + $0x54] sm:$0xf]
      %v3431 = vld [vmem:[%s165 + $0x58] sm:$0xf]
      %v3432 = vld [vmem:[%s165 + $0x5c] sm:$0xf]
      %v3433 = vld [vmem:[%s165 + $0x60] sm:$0xf]
      %v3434 = vld [vmem:[%s165 + $0x64] sm:$0xf]
      %v3435 = vld [vmem:[%s165 + $0x68] sm:$0xf]
      %v3436 = vld [vmem:[%s165 + $0x6c] sm:$0xf]
      %v3455 = vunpack.c.l.b16 %v3419
      %v3456 = vunpack.c.l.b16 %v3420
      %v3457 = vunpack.c.l.b16 %v3421
      %v3458 = vunpack.c.l.b16 %v3422
      %v3459 = vunpack.c.l.b16 %v3423
      %v3460 = vunpack.c.l.b16 %v3424
      %v3461 = vunpack.c.l.b16 %v3425
      %v3462 = vunpack.c.l.b16 %v3426
      %v3463 = vunpack.c.l.b16 %v3427
      %v3464 = vunpack.c.l.b16 %v3428
      %v3465 = vunpack.c.l.b16 %v3429
      %v3466 = vunpack.c.l.b16 %v3430
      %v3467 = vunpack.c.l.b16 %v3431
      %v3468 = vunpack.c.l.b16 %v3432
      %v3469 = vunpack.c.l.b16 %v3433
      %v3470 = vunpack.c.l.b16 %v3434
      %v3471 = vunpack.c.l.b16 %v3435
      %v3472 = vunpack.c.l.b16 %v3436
      %v3473 = vpack.c.b16 %v3456, %v3455
      %v3474 = vpack.c.b16 %v3458, %v3457
      %v3475 = vpack.c.b16 %v3460, %v3459
      %v3476 = vpack.c.b16 %v3462, %v3461
      %v3477 = vpack.c.b16 %v3464, %v3463
      %v3478 = vpack.c.b16 %v3466, %v3465
      %v3479 = vpack.c.b16 %v3468, %v3467
      %v3480 = vpack.c.b16 %v3470, %v3469
      %v3481 = vpack.c.b16 %v3472, %v3471
      %3482 = vrot.lane.b32.xlu0 %v3473, 69
      %v3483 = vpop.permute.xlu0 %3482
      %3484 = vrot.lane.b32.xlu0 %v3474, 69
      %v3485 = vpop.permute.xlu0 %3484
      %3486 = vrot.lane.b32.xlu0 %v3475, 69
      %v3487 = vpop.permute.xlu0 %3486
      %3488 = vrot.lane.b32.xlu0 %v3476, 69
      %v3489 = vpop.permute.xlu0 %3488
      %3490 = vrot.lane.b32.xlu0 %v3477, 69
      %v3491 = vpop.permute.xlu0 %3490
      %3492 = vrot.lane.b32.xlu0 %v3478, 69
      %v3493 = vpop.permute.xlu0 %3492
      %3494 = vrot.lane.b32.xlu0 %v3479, 69
      %v3495 = vpop.permute.xlu0 %3494
      %3496 = vrot.lane.b32.xlu0 %v3480, 69
      %v3497 = vpop.permute.xlu0 %3496
      %3498 = vrot.lane.b32.xlu0 %v3481, 69
      %v3499 = vpop.permute.xlu0 %3498
      %vm3509 = vcmask 589352
      %3510 = vst.msk [vmem:[#allocation2] sm:$0xff] %vm3509, %v3483
      %3511 = vst.msk [vmem:[#allocation2 + $0x8] sm:$0xff] %vm3509, %v3485
      %3512 = vst.msk [vmem:[#allocation2 + $0x10] sm:$0xff] %vm3509, %v3487
      %3513 = vst.msk [vmem:[#allocation2 + $0x18] sm:$0xff] %vm3509, %v3489
      %3514 = vst.msk [vmem:[#allocation2 + $0x20] sm:$0xff] %vm3509, %v3491
      %3515 = vst.msk [vmem:[#allocation2 + $0x28] sm:$0xff] %vm3509, %v3493
      %3516 = vst.msk [vmem:[#allocation2 + $0x30] sm:$0xff] %vm3509, %v3495
      %3517 = vst.msk [vmem:[#allocation2 + $0x38] sm:$0xff] %vm3509, %v3497
      %3518 = vst.msk [vmem:[#allocation2 + $0x40] sm:$0xff] %vm3509, %v3499
      %v3519 = vld [vmem:[%s165 + $0x28] sm:$0xc]
      %v3520 = vld [vmem:[%s165 + $0x2c] sm:$0xf]
      %v3521 = vld [vmem:[%s165 + $0x30] sm:$0xf]
      %v3522 = vld [vmem:[%s165 + $0x34] sm:$0xf]
      %v3523 = vld [vmem:[%s165 + $0x38] sm:$0xf]
      %v3524 = vld [vmem:[%s165 + $0x3c] sm:$0xf]
      %v3525 = vld [vmem:[%s165 + $0x40] sm:$0xf]
      %v3526 = vld [vmem:[%s165 + $0x44] sm:$0xf]
      %v3527 = vld [vmem:[%s165 + $0x48] sm:$0xf]
      %v3528 = vld [vmem:[%s165 + $0x4c] sm:$0xf]
      %v3529 = vld [vmem:[%s165 + $0x50] sm:$0xf]
      %v3530 = vld [vmem:[%s165 + $0x54] sm:$0xf]
      %v3531 = vld [vmem:[%s165 + $0x58] sm:$0xf]
      %v3532 = vld [vmem:[%s165 + $0x5c] sm:$0xf]
      %v3533 = vld [vmem:[%s165 + $0x60] sm:$0xf]
      %v3534 = vld [vmem:[%s165 + $0x64] sm:$0xf]
      %v3535 = vld [vmem:[%s165 + $0x68] sm:$0xf]
      %v3536 = vld [vmem:[%s165 + $0x6c] sm:$0xf]
      %v3537 = vld [vmem:[%s165 + $0x70] sm:$0x3]
      %v3557 = vunpack.c.l.b16 %v3519
      %v3558 = vunpack.c.l.b16 %v3520
      %v3559 = vunpack.c.l.b16 %v3521
      %v3560 = vunpack.c.l.b16 %v3522
      %v3561 = vunpack.c.l.b16 %v3523
      %v3562 = vunpack.c.l.b16 %v3524
      %v3563 = vunpack.c.l.b16 %v3525
      %v3564 = vunpack.c.l.b16 %v3526
      %v3565 = vunpack.c.l.b16 %v3527
      %v3566 = vunpack.c.l.b16 %v3528
      %v3567 = vunpack.c.l.b16 %v3529
      %v3568 = vunpack.c.l.b16 %v3530
      %v3569 = vunpack.c.l.b16 %v3531
      %v3570 = vunpack.c.l.b16 %v3532
      %v3571 = vunpack.c.l.b16 %v3533
      %v3572 = vunpack.c.l.b16 %v3534
      %v3573 = vunpack.c.l.b16 %v3535
      %v3574 = vunpack.c.l.b16 %v3536
      %v3575 = vunpack.c.l.b16 %v3537
      %v3576 = vpack.c.b16 %v3558, %v3557
      %v3577 = vpack.c.b16 %v3560, %v3559
      %v3578 = vpack.c.b16 %v3562, %v3561
      %v3579 = vpack.c.b16 %v3564, %v3563
      %v3580 = vpack.c.b16 %v3566, %v3565
      %v3581 = vpack.c.b16 %v3568, %v3567
      %v3582 = vpack.c.b16 %v3570, %v3569
      %v3583 = vpack.c.b16 %v3572, %v3571
      %v3584 = vpack.c.b16 %v3574, %v3573
      %v3585 = vpack.c.b16 %v3575, %v3575
      %v3586 = vrot.slane %v3576, 2
      %v3587 = vrot.slane %v3577, 2
      %v3588 = vsel %vm1044, %v3586, %v3587
      %v3589 = vrot.slane %v3578, 2
      %v3590 = vsel %vm1044, %v3587, %v3589
      %v3591 = vrot.slane %v3579, 2
      %v3592 = vsel %vm1044, %v3589, %v3591
      %v3593 = vrot.slane %v3580, 2
      %v3594 = vsel %vm1044, %v3591, %v3593
      %v3595 = vrot.slane %v3581, 2
      %v3596 = vsel %vm1044, %v3593, %v3595
      %v3597 = vrot.slane %v3582, 2
      %v3598 = vsel %vm1044, %v3595, %v3597
      %v3599 = vrot.slane %v3583, 2
      %v3600 = vsel %vm1044, %v3597, %v3599
      %v3601 = vrot.slane %v3584, 2
      %v3602 = vsel %vm1044, %v3599, %v3601
      %v3603 = vrot.slane %v3585, 2
      %v3604 = vsel %vm1044, %v3601, %v3603
      %3605 = vrot.lane.b32.xlu0 %v3588, 72
      %v3606 = vpop.permute.xlu0 %3605
      %3607 = vrot.lane.b32.xlu0 %v3590, 72
      %v3608 = vpop.permute.xlu0 %3607
      %3609 = vrot.lane.b32.xlu0 %v3592, 72
      %v3610 = vpop.permute.xlu0 %3609
      %3611 = vrot.lane.b32.xlu0 %v3594, 72
      %v3612 = vpop.permute.xlu0 %3611
      %3613 = vrot.lane.b32.xlu0 %v3596, 72
      %v3614 = vpop.permute.xlu0 %3613
      %3615 = vrot.lane.b32.xlu0 %v3598, 72
      %v3616 = vpop.permute.xlu0 %3615
      %3617 = vrot.lane.b32.xlu0 %v3600, 72
      %v3618 = vpop.permute.xlu0 %3617
      %3619 = vrot.lane.b32.xlu0 %v3602, 72
      %v3620 = vpop.permute.xlu0 %3619
      %3621 = vrot.lane.b32.xlu0 %v3604, 72
      %v3622 = vpop.permute.xlu0 %3621
      %vm3632 = vcmask 613952
      %3633 = vst.msk [vmem:[#allocation2] sm:$0xff] %vm3632, %v3606
      %3634 = vst.msk [vmem:[#allocation2 + $0x8] sm:$0xff] %vm3632, %v3608
      %3635 = vst.msk [vmem:[#allocation2 + $0x10] sm:$0xff] %vm3632, %v3610
      %3636 = vst.msk [vmem:[#allocation2 + $0x18] sm:$0xff] %vm3632, %v3612
      %3637 = vst.msk [vmem:[#allocation2 + $0x20] sm:$0xff] %vm3632, %v3614
      %3638 = vst.msk [vmem:[#allocation2 + $0x28] sm:$0xff] %vm3632, %v3616
      %3639 = vst.msk [vmem:[#allocation2 + $0x30] sm:$0xff] %vm3632, %v3618
      %3640 = vst.msk [vmem:[#allocation2 + $0x38] sm:$0xff] %vm3632, %v3620
      %3641 = vst.msk [vmem:[#allocation2 + $0x40] sm:$0xff] %vm3632, %v3622
      %v3642 = vld [vmem:[%s165 + $0x28] sm:$0xc]
      %v3643 = vld [vmem:[%s165 + $0x2c] sm:$0xf]
      %v3644 = vld [vmem:[%s165 + $0x30] sm:$0xf]
      %v3645 = vld [vmem:[%s165 + $0x34] sm:$0xf]
      %v3646 = vld [vmem:[%s165 + $0x38] sm:$0xf]
      %v3647 = vld [vmem:[%s165 + $0x3c] sm:$0xf]
      %v3648 = vld [vmem:[%s165 + $0x40] sm:$0xf]
      %v3649 = vld [vmem:[%s165 + $0x44] sm:$0xf]
      %v3650 = vld [vmem:[%s165 + $0x48] sm:$0xf]
      %v3651 = vld [vmem:[%s165 + $0x4c] sm:$0xf]
      %v3652 = vld [vmem:[%s165 + $0x50] sm:$0xf]
      %v3653 = vld [vmem:[%s165 + $0x54] sm:$0xf]
      %v3654 = vld [vmem:[%s165 + $0x58] sm:$0xf]
      %v3655 = vld [vmem:[%s165 + $0x5c] sm:$0xf]
      %v3656 = vld [vmem:[%s165 + $0x60] sm:$0xf]
      %v3657 = vld [vmem:[%s165 + $0x64] sm:$0xf]
      %v3658 = vld [vmem:[%s165 + $0x68] sm:$0xf]
      %v3659 = vld [vmem:[%s165 + $0x6c] sm:$0xf]
      %v3660 = vld [vmem:[%s165 + $0x70] sm:$0x7]
      %v3680 = vunpack.c.l.b16 %v3642
      %v3681 = vunpack.c.l.b16 %v3643
      %v3682 = vunpack.c.l.b16 %v3644
      %v3683 = vunpack.c.l.b16 %v3645
      %v3684 = vunpack.c.l.b16 %v3646
      %v3685 = vunpack.c.l.b16 %v3647
      %v3686 = vunpack.c.l.b16 %v3648
      %v3687 = vunpack.c.l.b16 %v3649
      %v3688 = vunpack.c.l.b16 %v3650
      %v3689 = vunpack.c.l.b16 %v3651
      %v3690 = vunpack.c.l.b16 %v3652
      %v3691 = vunpack.c.l.b16 %v3653
      %v3692 = vunpack.c.l.b16 %v3654
      %v3693 = vunpack.c.l.b16 %v3655
      %v3694 = vunpack.c.l.b16 %v3656
      %v3695 = vunpack.c.l.b16 %v3657
      %v3696 = vunpack.c.l.b16 %v3658
      %v3697 = vunpack.c.l.b16 %v3659
      %v3698 = vunpack.c.l.b16 %v3660
      %v3699 = vpack.c.b16 %v3681, %v3680
      %v3700 = vpack.c.b16 %v3683, %v3682
      %v3701 = vpack.c.b16 %v3685, %v3684
      %v3702 = vpack.c.b16 %v3687, %v3686
      %v3703 = vpack.c.b16 %v3689, %v3688
      %v3704 = vpack.c.b16 %v3691, %v3690
      %v3705 = vpack.c.b16 %v3693, %v3692
      %v3706 = vpack.c.b16 %v3695, %v3694
      %v3707 = vpack.c.b16 %v3697, %v3696
      %v3708 = vpack.c.b16 %v3698, %v3698
      %v3710 = vshrl.u32 %v3699, 16
      %v3712 = vrot.slane %v3710, 2
      %v3713 = vshll.u32 %v3699, 16
      %v3715 = vrot.slane %v3713, 3
      %v3716 = vor.u32 %v3712, %v3715
      %v3718 = vshrl.u32 %v3700, 16
      %v3720 = vrot.slane %v3718, 2
      %v3721 = vshll.u32 %v3700, 16
      %v3723 = vrot.slane %v3721, 3
      %v3724 = vor.u32 %v3720, %v3723
      %v3725 = vsel %vm1168, %v3716, %v3724
      %v3727 = vshrl.u32 %v3701, 16
      %v3729 = vrot.slane %v3727, 2
      %v3730 = vshll.u32 %v3701, 16
      %v3732 = vrot.slane %v3730, 3
      %v3733 = vor.u32 %v3729, %v3732
      %v3734 = vsel %vm1168, %v3724, %v3733
      %v3736 = vshrl.u32 %v3702, 16
      %v3738 = vrot.slane %v3736, 2
      %v3739 = vshll.u32 %v3702, 16
      %v3741 = vrot.slane %v3739, 3
      %v3742 = vor.u32 %v3738, %v3741
      %v3743 = vsel %vm1168, %v3733, %v3742
      %v3745 = vshrl.u32 %v3703, 16
      %v3747 = vrot.slane %v3745, 2
      %v3748 = vshll.u32 %v3703, 16
      %v3750 = vrot.slane %v3748, 3
      %v3751 = vor.u32 %v3747, %v3750
      %v3752 = vsel %vm1168, %v3742, %v3751
      %v3754 = vshrl.u32 %v3704, 16
      %v3756 = vrot.slane %v3754, 2
      %v3757 = vshll.u32 %v3704, 16
      %v3759 = vrot.slane %v3757, 3
      %v3760 = vor.u32 %v3756, %v3759
      %v3761 = vsel %vm1168, %v3751, %v3760
      %v3763 = vshrl.u32 %v3705, 16
      %v3765 = vrot.slane %v3763, 2
      %v3766 = vshll.u32 %v3705, 16
      %v3768 = vrot.slane %v3766, 3
      %v3769 = vor.u32 %v3765, %v3768
      %v3770 = vsel %vm1168, %v3760, %v3769
      %v3772 = vshrl.u32 %v3706, 16
      %v3774 = vrot.slane %v3772, 2
      %v3775 = vshll.u32 %v3706, 16
      %v3777 = vrot.slane %v3775, 3
      %v3778 = vor.u32 %v3774, %v3777
      %v3779 = vsel %vm1168, %v3769, %v3778
      %v3781 = vshrl.u32 %v3707, 16
      %v3783 = vrot.slane %v3781, 2
      %v3784 = vshll.u32 %v3707, 16
      %v3786 = vrot.slane %v3784, 3
      %v3787 = vor.u32 %v3783, %v3786
      %v3788 = vsel %vm1168, %v3778, %v3787
      %v3790 = vshrl.u32 %v3708, 16
      %v3792 = vrot.slane %v3790, 2
      %v3793 = vshll.u32 %v3708, 16
      %v3795 = vrot.slane %v3793, 3
      %v3796 = vor.u32 %v3792, %v3795
      %v3797 = vsel %vm1168, %v3787, %v3796
      %3798 = vrot.lane.b32.xlu0 %v3725, 75
      %v3799 = vpop.permute.xlu0 %3798
      %3800 = vrot.lane.b32.xlu0 %v3734, 75
      %v3801 = vpop.permute.xlu0 %3800
      %3802 = vrot.lane.b32.xlu0 %v3743, 75
      %v3803 = vpop.permute.xlu0 %3802
      %3804 = vrot.lane.b32.xlu0 %v3752, 75
      %v3805 = vpop.permute.xlu0 %3804
      %3806 = vrot.lane.b32.xlu0 %v3761, 75
      %v3807 = vpop.permute.xlu0 %3806
      %3808 = vrot.lane.b32.xlu0 %v3770, 75
      %v3809 = vpop.permute.xlu0 %3808
      %3810 = vrot.lane.b32.xlu0 %v3779, 75
      %v3811 = vpop.permute.xlu0 %3810
      %3812 = vrot.lane.b32.xlu0 %v3788, 75
      %v3813 = vpop.permute.xlu0 %3812
      %3814 = vrot.lane.b32.xlu0 %v3797, 75
      %v3815 = vpop.permute.xlu0 %3814
      %vm3825 = vcmask 638552
      %3826 = vst.msk [vmem:[#allocation2] sm:$0xff] %vm3825, %v3799
      %3827 = vst.msk [vmem:[#allocation2 + $0x8] sm:$0xff] %vm3825, %v3801
      %3828 = vst.msk [vmem:[#allocation2 + $0x10] sm:$0xff] %vm3825, %v3803
      %3829 = vst.msk [vmem:[#allocation2 + $0x18] sm:$0xff] %vm3825, %v3805
      %3830 = vst.msk [vmem:[#allocation2 + $0x20] sm:$0xff] %vm3825, %v3807
      %3831 = vst.msk [vmem:[#allocation2 + $0x28] sm:$0xff] %vm3825, %v3809
      %3832 = vst.msk [vmem:[#allocation2 + $0x30] sm:$0xff] %vm3825, %v3811
      %3833 = vst.msk [vmem:[#allocation2 + $0x38] sm:$0xff] %vm3825, %v3813
      %3834 = vst.msk [vmem:[#allocation2 + $0x40] sm:$0xff] %vm3825, %v3815
      %v3835 = vld [vmem:[%s165 + $0x28] sm:$0x8]
      %v3836 = vld [vmem:[%s165 + $0x2c] sm:$0xf]
      %v3837 = vld [vmem:[%s165 + $0x30] sm:$0xf]
      %v3838 = vld [vmem:[%s165 + $0x34] sm:$0xf]
      %v3839 = vld [vmem:[%s165 + $0x38] sm:$0xf]
      %v3840 = vld [vmem:[%s165 + $0x3c] sm:$0xf]
      %v3841 = vld [vmem:[%s165 + $0x40] sm:$0xf]
      %v3842 = vld [vmem:[%s165 + $0x44] sm:$0xf]
      %v3843 = vld [vmem:[%s165 + $0x48] sm:$0xf]
      %v3844 = vld [vmem:[%s165 + $0x4c] sm:$0xf]
      %v3845 = vld [vmem:[%s165 + $0x50] sm:$0xf]
      %v3846 = vld [vmem:[%s165 + $0x54] sm:$0xf]
      %v3847 = vld [vmem:[%s165 + $0x58] sm:$0xf]
      %v3848 = vld [vmem:[%s165 + $0x5c] sm:$0xf]
      %v3849 = vld [vmem:[%s165 + $0x60] sm:$0xf]
      %v3850 = vld [vmem:[%s165 + $0x64] sm:$0xf]
      %v3851 = vld [vmem:[%s165 + $0x68] sm:$0xf]
      %v3852 = vld [vmem:[%s165 + $0x6c] sm:$0xf]
      %v3853 = vld [vmem:[%s165 + $0x70] sm:$0x7]
      %v3873 = vunpack.c.l.b16 %v3835
      %v3874 = vunpack.c.l.b16 %v3836
      %v3875 = vunpack.c.l.b16 %v3837
      %v3876 = vunpack.c.l.b16 %v3838
      %v3877 = vunpack.c.l.b16 %v3839
      %v3878 = vunpack.c.l.b16 %v3840
      %v3879 = vunpack.c.l.b16 %v3841
      %v3880 = vunpack.c.l.b16 %v3842
      %v3881 = vunpack.c.l.b16 %v3843
      %v3882 = vunpack.c.l.b16 %v3844
      %v3883 = vunpack.c.l.b16 %v3845
      %v3884 = vunpack.c.l.b16 %v3846
      %v3885 = vunpack.c.l.b16 %v3847
      %v3886 = vunpack.c.l.b16 %v3848
      %v3887 = vunpack.c.l.b16 %v3849
      %v3888 = vunpack.c.l.b16 %v3850
      %v3889 = vunpack.c.l.b16 %v3851
      %v3890 = vunpack.c.l.b16 %v3852
      %v3891 = vunpack.c.l.b16 %v3853
      %v3892 = vpack.c.b16 %v3874, %v3873
      %v3893 = vpack.c.b16 %v3876, %v3875
      %v3894 = vpack.c.b16 %v3878, %v3877
      %v3895 = vpack.c.b16 %v3880, %v3879
      %v3896 = vpack.c.b16 %v3882, %v3881
      %v3897 = vpack.c.b16 %v3884, %v3883
      %v3898 = vpack.c.b16 %v3886, %v3885
      %v3899 = vpack.c.b16 %v3888, %v3887
      %v3900 = vpack.c.b16 %v3890, %v3889
      %v3901 = vpack.c.b16 %v3891, %v3891
      %v3902 = vrot.slane %v3892, 3
      %v3903 = vrot.slane %v3893, 3
      %v3904 = vsel %vm626, %v3902, %v3903
      %v3905 = vrot.slane %v3894, 3
      %v3906 = vsel %vm626, %v3903, %v3905
      %v3907 = vrot.slane %v3895, 3
      %v3908 = vsel %vm626, %v3905, %v3907
      %v3909 = vrot.slane %v3896, 3
      %v3910 = vsel %vm626, %v3907, %v3909
      %v3911 = vrot.slane %v3897, 3
      %v3912 = vsel %vm626, %v3909, %v3911
      %v3913 = vrot.slane %v3898, 3
      %v3914 = vsel %vm626, %v3911, %v3913
      %v3915 = vrot.slane %v3899, 3
      %v3916 = vsel %vm626, %v3913, %v3915
      %v3917 = vrot.slane %v3900, 3
      %v3918 = vsel %vm626, %v3915, %v3917
      %v3919 = vrot.slane %v3901, 3
      %v3920 = vsel %vm626, %v3917, %v3919
      %3921 = vrot.lane.b32.xlu0 %v3904, 78
      %v3922 = vpop.permute.xlu0 %3921
      %3923 = vrot.lane.b32.xlu0 %v3906, 78
      %v3924 = vpop.permute.xlu0 %3923
      %3925 = vrot.lane.b32.xlu0 %v3908, 78
      %v3926 = vpop.permute.xlu0 %3925
      %3927 = vrot.lane.b32.xlu0 %v3910, 78
      %v3928 = vpop.permute.xlu0 %3927
      %3929 = vrot.lane.b32.xlu0 %v3912, 78
      %v3930 = vpop.permute.xlu0 %3929
      %3931 = vrot.lane.b32.xlu0 %v3914, 78
      %v3932 = vpop.permute.xlu0 %3931
      %3933 = vrot.lane.b32.xlu0 %v3916, 78
      %v3934 = vpop.permute.xlu0 %3933
      %3935 = vrot.lane.b32.xlu0 %v3918, 78
      %v3936 = vpop.permute.xlu0 %3935
      %3937 = vrot.lane.b32.xlu0 %v3920, 78
      %v3938 = vpop.permute.xlu0 %3937
      %vm3948 = vcmask 663152
      %3949 = vst.msk [vmem:[#allocation2] sm:$0xff] %vm3948, %v3922
      %3950 = vst.msk [vmem:[#allocation2 + $0x8] sm:$0xff] %vm3948, %v3924
      %3951 = vst.msk [vmem:[#allocation2 + $0x10] sm:$0xff] %vm3948, %v3926
      %3952 = vst.msk [vmem:[#allocation2 + $0x18] sm:$0xff] %vm3948, %v3928
      %3953 = vst.msk [vmem:[#allocation2 + $0x20] sm:$0xff] %vm3948, %v3930
      %3954 = vst.msk [vmem:[#allocation2 + $0x28] sm:$0xff] %vm3948, %v3932
      %3955 = vst.msk [vmem:[#allocation2 + $0x30] sm:$0xff] %vm3948, %v3934
      %3956 = vst.msk [vmem:[#allocation2 + $0x38] sm:$0xff] %vm3948, %v3936
      %3957 = vst.msk [vmem:[#allocation2 + $0x40] sm:$0xff] %vm3948, %v3938
      %v3958 = vld [vmem:[#allocation2] sm:$0xff]
      %v3959 = vld [vmem:[#allocation2 + $0x8] sm:$0xff]
      %v3960 = vld [vmem:[#allocation2 + $0x10] sm:$0xff]
      %v3961 = vld [vmem:[#allocation2 + $0x18] sm:$0xff]
      %v3962 = vld [vmem:[#allocation2 + $0x20] sm:$0xff]
      %v3963 = vld [vmem:[#allocation2 + $0x28] sm:$0xff]
      %v3964 = vld [vmem:[#allocation2 + $0x30] sm:$0xff]
      %v3965 = vld [vmem:[#allocation2 + $0x38] sm:$0xff]
      %v3966 = vld [vmem:[#allocation2 + $0x40] sm:$0xff]
      %v3967 = vld [vmem:[%s1] sm:$0xf]
      %v3968 = vld [vmem:[%s1 + $0x4] sm:$0xf]
      %v3969 = vld [vmem:[%s1 + $0x8] sm:$0xf]
      %v3970 = vld [vmem:[%s1 + $0xc] sm:$0xf]
      %v3971 = vld [vmem:[%s1 + $0x10] sm:$0xf]
      %v3972 = vld [vmem:[%s1 + $0x14] sm:$0xf]
      %v3973 = vld [vmem:[%s1 + $0x18] sm:$0xf]
      %v3974 = vld [vmem:[%s1 + $0x1c] sm:$0xf]
      %v3975 = vld [vmem:[%s1 + $0x20] sm:$0xf]
      %v3976 = vld [vmem:[%s1 + $0x24] sm:$0xf]
      %v3977 = vld [vmem:[%s1 + $0x28] sm:$0x1]
      %v3978 = vld [vmem:[%s2] sm:$0x1]
      %v3980 = vlaneseq
      %v3981 = vshrl.u32 %v3980, 7
      %v3982 = vsub.s32 0, %v3981
      %v3983 = vrot.slane %v3978, %v3982
      %v3996 = vunpack.c.l.b16 %v3967
      %v3997 = vunpack.c.l.b16 %v3968
      %v3998 = vunpack.c.l.b16 %v3969
      %v3999 = vunpack.c.l.b16 %v3970
      %v4000 = vunpack.c.l.b16 %v3971
      %v4001 = vunpack.c.l.b16 %v3972
      %v4002 = vunpack.c.l.b16 %v3973
      %v4003 = vunpack.c.l.b16 %v3974
      %v4004 = vunpack.c.l.b16 %v3975
      %v4005 = vunpack.c.l.b16 %v3976
      %v4006 = vunpack.c.l.b16 %v3977
      %v4007 = vpack.c.b16 %v3997, %v3996
      %v4008 = vpack.c.b16 %v3999, %v3998
      %v4009 = vpack.c.b16 %v4001, %v4000
      %v4010 = vpack.c.b16 %v4003, %v4002
      %v4011 = vpack.c.b16 %v4005, %v4004
      %v4012 = vpack.c.b16 %v4006, %v4006
      %vm4018 = vcmask 662528
      %v4020 = vsel %vm4018, %v3958, 0
      %v4023 = vsel %vm4018, %v3959, 0
      %v4026 = vsel %vm4018, %v3960, 0
      %v4029 = vsel %vm4018, %v3961, 0
      %v4032 = vsel %vm4018, %v3962, 0
      %v4035 = vsel %vm4018, %v3963, 0
      %v4038 = vsel %vm4018, %v3964, 0
      %v4041 = vsel %vm4018, %v3965, 0
      %v4044 = vsel %vm4018, %v3966, 0
      %vm4046 = vcmask 1040384
      %v4047 = vsel 0, 4294967295, 65535
      %v4048 = vsel %vm4046, %v4047, 0
      %v4050 = vand.u32 %v4012, %v4048
      %4052 = vmatprep.subr.bf16.mxu0 0
      %4053 = vmatpush1.bf16.msra.mxu0 %v4007
      %4054 = vmatprep.subr.bf16.mxu0 0
      %4055 = vmatpush1.bf16.msra.mxu0 %v4008
      %4056 = vmatprep.subr.bf16.mxu0 0
      %4057 = vmatpush1.bf16.msra.mxu0 %v4009
      %4058 = vmatprep.subr.bf16.mxu0 0
      %4059 = vmatpush1.bf16.msra.mxu0 %v4010
      %4060 = vmatprep.subr.bf16.mxu0 0
      %4061 = vmatpush1.bf16.msra.mxu0 %v4011
      %4062 = vmatprep.subr.bf16.mxu0 0
      %4063 = vmatpush1.bf16.msra.mxu0 %v4050
      %4064 = vmatprep.subr.bf16.mxu0 0
      %4065 = vmatpush1.bf16.msra.mxu0 0
      %4066 = vmatprep.subr.bf16.mxu0 0
      %4067 = vmatpush1.bf16.msra.mxu0 0
      %4068 = vmatprep.subr.bf16.mxu0 0
      %4069 = vmatpush1.bf16.msra.mxu0 0
      %4070 = vmatprep.subr.bf16.mxu0 0
      %4071 = vmatpush1.bf16.msra.mxu0 0
      %4072 = vmatprep.subr.bf16.mxu0 0
      %4073 = vmatpush1.bf16.msra.mxu0 0
      %4074 = vmatprep.subr.bf16.mxu0 0
      %4075 = vmatpush1.bf16.msra.mxu0 0
      %4076 = vmatprep.subr.bf16.mxu0 0
      %4077 = vmatpush1.bf16.msra.mxu0 0
      %4078 = vmatprep.subr.bf16.mxu0 0
      %4079 = vmatpush1.bf16.msra.mxu0 0
      %4080 = vmatprep.subr.bf16.mxu0 0
      %4081 = vmatpush1.bf16.msra.mxu0 0
      %4082 = vmatprep.subr.bf16.mxu0 0
      %4083 = vmatpush1.bf16.msra.mxu0 0
      %4084 = vmatprep.mubr.bf16.mxu0 0
      %4085 = vmatmul.mubr.bf16.gmra.mrb[0].mxu0 %v4020
      %v4086 = vpop.f32.mrb[0].mxu0
      %v4087 = vadd.f32 %v3983, %v4086
      %v4088 = vpop.f32.mrb[0].mxu0
      %v4089 = vpop.f32.mrb[0].mxu0
      %v4090 = vadd.f32 %v3983, %v4089
      %v4091 = vpop.f32.mrb[0].mxu0
      %4092 = vmatprep.mubr.bf16.mxu0 0
      %4093 = vmatmul.mubr.bf16.gmra.mrb[0].mxu0 %v4023
      %v4094 = vpop.f32.mrb[0].mxu0
      %v4095 = vadd.f32 %v3983, %v4094
      %v4096 = vpop.f32.mrb[0].mxu0
      %v4097 = vpop.f32.mrb[0].mxu0
      %v4098 = vadd.f32 %v3983, %v4097
      %v4099 = vpop.f32.mrb[0].mxu0
      %4100 = vmatprep.mubr.bf16.mxu0 0
      %4101 = vmatmul.mubr.bf16.gmra.mrb[0].mxu0 %v4026
      %v4102 = vpop.f32.mrb[0].mxu0
      %v4103 = vadd.f32 %v3983, %v4102
      %v4104 = vpop.f32.mrb[0].mxu0
      %v4105 = vpop.f32.mrb[0].mxu0
      %v4106 = vadd.f32 %v3983, %v4105
      %v4107 = vpop.f32.mrb[0].mxu0
      %4108 = vmatprep.mubr.bf16.mxu0 0
      %4109 = vmatmul.mubr.bf16.gmra.mrb[0].mxu0 %v4029
      %v4110 = vpop.f32.mrb[0].mxu0
      %v4111 = vadd.f32 %v3983, %v4110
      %v4112 = vpop.f32.mrb[0].mxu0
      %v4113 = vpop.f32.mrb[0].mxu0
      %v4114 = vadd.f32 %v3983, %v4113
      %v4115 = vpop.f32.mrb[0].mxu0
      %4116 = vmatprep.mubr.bf16.mxu0 0
      %4117 = vmatmul.mubr.bf16.gmra.mrb[0].mxu0 %v4032
      %v4118 = vpop.f32.mrb[0].mxu0
      %v4119 = vadd.f32 %v3983, %v4118
      %v4120 = vpop.f32.mrb[0].mxu0
      %v4121 = vpop.f32.mrb[0].mxu0
      %v4122 = vadd.f32 %v3983, %v4121
      %v4123 = vpop.f32.mrb[0].mxu0
      %4124 = vmatprep.mubr.bf16.mxu0 0
      %4125 = vmatmul.mubr.bf16.gmra.mrb[0].mxu0 %v4035
      %v4126 = vpop.f32.mrb[0].mxu0
      %v4127 = vadd.f32 %v3983, %v4126
      %v4128 = vpop.f32.mrb[0].mxu0
      %v4129 = vpop.f32.mrb[0].mxu0
      %v4130 = vadd.f32 %v3983, %v4129
      %v4131 = vpop.f32.mrb[0].mxu0
      %4132 = vmatprep.mubr.bf16.mxu0 0
      %4133 = vmatmul.mubr.bf16.gmra.mrb[0].mxu0 %v4038
      %v4134 = vpop.f32.mrb[0].mxu0
      %v4135 = vadd.f32 %v3983, %v4134
      %v4136 = vpop.f32.mrb[0].mxu0
      %v4137 = vpop.f32.mrb[0].mxu0
      %v4138 = vadd.f32 %v3983, %v4137
      %v4139 = vpop.f32.mrb[0].mxu0
      %4140 = vmatprep.mubr.bf16.mxu0 0
      %4141 = vmatmul.mubr.bf16.gmra.mrb[0].mxu0 %v4041
      %v4142 = vpop.f32.mrb[0].mxu0
      %v4143 = vadd.f32 %v3983, %v4142
      %v4144 = vpop.f32.mrb[0].mxu0
      %v4145 = vpop.f32.mrb[0].mxu0
      %v4146 = vadd.f32 %v3983, %v4145
      %v4147 = vpop.f32.mrb[0].mxu0
      %4148 = vmatprep.mubr.bf16.mxu0 0
      %4149 = vmatmul.mubr.bf16.gmra.mrb[0].mxu0 %v4044
      %v4150 = vpop.f32.mrb[0].mxu0
      %v4151 = vadd.f32 %v3983, %v4150
      %v4152 = vpop.f32.mrb[0].mxu0
      %v4153 = vpop.f32.mrb[0].mxu0
      %v4154 = vadd.f32 %v3983, %v4153
      %v4155 = vpop.f32.mrb[0].mxu0
      %4156 = vdwg.mxu0
      %vm4157 = vcmask 39936
      %4158 = vst.msk [vmem:[%s170] sm:$0xff] %vm4157, %v4087
      %4159 = vst.msk [vmem:[%s170 + $0x8] sm:$0xff] %vm4157, %v4090
      %4160 = vst.msk [vmem:[%s170 + $0x10] sm:$0xff] %vm4157, %v4095
      %4161 = vst.msk [vmem:[%s170 + $0x18] sm:$0xff] %vm4157, %v4098
      %4162 = vst.msk [vmem:[%s170 + $0x20] sm:$0xff] %vm4157, %v4103
      %4163 = vst.msk [vmem:[%s170 + $0x28] sm:$0xff] %vm4157, %v4106
      %4164 = vst.msk [vmem:[%s170 + $0x30] sm:$0xff] %vm4157, %v4111
      %4165 = vst.msk [vmem:[%s170 + $0x38] sm:$0xff] %vm4157, %v4114
      %4166 = vst.msk [vmem:[%s170 + $0x40] sm:$0xff] %vm4157, %v4119
      %4167 = vst.msk [vmem:[%s170 + $0x48] sm:$0xff] %vm4157, %v4122
      %4168 = vst.msk [vmem:[%s170 + $0x50] sm:$0xff] %vm4157, %v4127
      %4169 = vst.msk [vmem:[%s170 + $0x58] sm:$0xff] %vm4157, %v4130
      %4170 = vst.msk [vmem:[%s170 + $0x60] sm:$0xff] %vm4157, %v4135
      %4171 = vst.msk [vmem:[%s170 + $0x68] sm:$0xff] %vm4157, %v4138
      %4172 = vst.msk [vmem:[%s170 + $0x70] sm:$0xff] %vm4157, %v4143
      %4173 = vst.msk [vmem:[%s170 + $0x78] sm:$0xff] %vm4157, %v4146
      %4174 = vst.msk [vmem:[%s170 + $0x80] sm:$0xff] %vm4157, %v4151
      %4175 = vst.msk [vmem:[%s170 + $0x88] sm:$0xff] %vm4157, %v4154
      %p4176 = scmp.lt.s32.totalorder %s14, 1
      %s4177 = scalar_select %p4176, %s14, 1
      %s4178 = smul.addr %s4177, 18
      %s4179 = smul.addr %s4178, 8
      %s4180 = scalar_lea.vmem %s3, %s4179
      // Predicated region
      $region33: #{tpu_custom_call.1} parent=31 // pred_check
        %p4181 = pneg %p100
      $region34: #{tpu_custom_call.1} parent=31 // pred_check_branch
        %4183 = sbr.rel (%p4181) target = $region36
      $region35: #{tpu_custom_call.1} parent=31 // pred_region
        _
      $region36: #{tpu_custom_call.1} parent=31 // pred_fallthru
        _
    $region32: #{tpu_custom_call.1} parent=5 // pred_fallthru
      _
    %p4184 = scmp.le.s32.totalorder 2, %s9
    // Predicated region
    $region37: #{tpu_custom_call.1} parent=5 // pred_check
      %p4185 = pneg %p4184
    $region38: #{tpu_custom_call.1} parent=5 // pred_check_branch
      %4187 = sbr.rel (%p4185) target = $region40
    $region39: #{tpu_custom_call.1} parent=5 // pred_region
      %s4188 = ssub.s32 %s9, 2
      // Predicated region
      $region41: #{tpu_custom_call.1} parent=39 // pred_check
        %p4189 = pneg %p106
      $region42: #{tpu_custom_call.1} parent=39 // pred_check_branch
        %4191 = sbr.rel (%p4189) target = $region44
      $region43: #{tpu_custom_call.1} parent=39 // pred_region
        %p4192 = scmp.lt.s32.totalorder %s15, 1
        %s4193 = scalar_select %p4192, %s15, 1
        %s4194 = smul.addr %s4193, 18
        %s4195 = smul.addr %s4194, 8
        %s4196 = scalar_lea.vmem %s3, %s4195
      $region44: #{tpu_custom_call.1} parent=39 // pred_fallthru
        _
    $region40: #{tpu_custom_call.1} parent=5 // pred_fallthru
      _
  $region6: #{tpu_custom_call.1} parent=0 // loop_footer
    %s13 = sadd.s32 1, %s9
  $region7: #{tpu_custom_call.1} parent=0 // loop_footer_branch
    %8 = sbr.rel target = $region3
  $region8: #{tpu_custom_call.1} parent=0 // loop_exit
    _

</llo_original>
